<compile_context>
chip_gen: v7x
topology: tpu7x:2x2x1
jax: 0.10.0
libtpu: 0.0.40
codegen_flags: <defaults>
</compile_context>

<pallas_src>
import functools

import jax
import jax.numpy as jnp
from jax.experimental import pallas as pl
from jax.experimental.pallas import tpu as pltpu

LATENT_PAD = 128   # lane-aligned padding for the latent head
MAX_TILE_B = 256   # batch rows per grid step (multiple of 8; amortizes step cost)


def _round_up(n, m):
    return ((n + m - 1) // m) * m


def _linear(x, w_ref, b_ref, relu):
    # bf16 x bf16 -> f32 MXU accumulation; bias/ReLU stay f32.
    y = jnp.dot(x.astype(w_ref.dtype), w_ref[...],
                preferred_element_type=jnp.float32) + b_ref[...]
    if relu:
        y = jnp.maximum(y, 0.0)
    return y


def cellvae_kernel(
    x_ref,
    # encoder
    e1w, e1b, e2w, e2b, e3w, e3b,
    # z_mean head (lane-padded to LATENT_PAD)
    zmw, zmb,
    # decoder (first layer lane-padded on the input side)
    d1w, d1b, d2w, d2b, d3w, d3b, d4w, d4b,
    # outputs
    recon_ref, mu_ref,
):
    x = x_ref[...]                          # already f32; no redundant cast

    # ----- encoder -----
    h = _linear(x, e1w, e1b, relu=True)     # [TB, 512]
    h = _linear(h, e2w, e2b, relu=True)     # [TB, 256]
    h = _linear(h, e3w, e3b, relu=True)     # [TB, 64]

    # ----- latent mean (logvar is None; reparameterize returns mu) -----
    mu = _linear(h, zmw, zmb, relu=False)   # [TB, LATENT_PAD], cols >= latent_dim are 0
    mu_ref[...] = mu.astype(mu_ref.dtype)

    # ----- decoder (padded mu rows of d1w are zero -> exact numerics) -----
    h = _linear(mu, d1w, d1b, relu=True)    # [TB, 64]
    h = _linear(h, d2w, d2b, relu=True)     # [TB, 256]
    h = _linear(h, d3w, d3b, relu=True)     # [TB, 512]
    out = _linear(h, d4w, d4b, relu=False)  # [TB, input_dim]
    recon_ref[...] = out.astype(recon_ref.dtype)


def _xavier_uniform(key, fan_in, fan_out):
    # Same distribution as nn.init.xavier_uniform_ on the [out, in] weight; we
    # emit the transposed [in, out] layout directly.
    bound = (6.0 / (fan_in + fan_out)) ** 0.5
    return jax.random.uniform(key, (fan_in, fan_out), jnp.float32,
                              minval=-bound, maxval=bound)


def init_cellvae_params(key, input_dim=512, latent_dim=10,
                        latent_pad=LATENT_PAD, w_dtype=jnp.bfloat16):
    """Xavier-uniform weights (bf16, stored [in, out]) and 0.01 biases (f32).
    The latent head is zero-padded to `latent_pad` lanes."""
    # (logical_in, logical_out, padded_in, padded_out)
    layers = [
        (input_dim, 512, input_dim, 512),          # encoder 1
        (512, 256, 512, 256),                      # encoder 2
        (256, 64, 256, 64),                        # encoder 3
        (64, latent_dim, 64, latent_pad),          # z_mean head
        (latent_dim, 64, latent_pad, 64),          # decoder 1
        (64, 256, 64, 256),                        # decoder 2
        (256, 512, 256, 512),                      # decoder 3
        (512, input_dim, 512, input_dim),          # decoder 4
    ]
    keys = jax.random.split(key, len(layers))
    params = []
    for k, (fi, fo, pi, po) in zip(keys, layers):
        w = _xavier_uniform(k, fi, fo)
        w = jnp.pad(w, ((0, pi - fi), (0, po - fo)))            # exact zero padding
        b = jnp.pad(jnp.full((1, fo), 0.01, jnp.float32), ((0, 0), (0, po - fo)))
        params.append(w.astype(w_dtype))
        params.append(b)                                        # biases stay f32
    return params


@functools.partial(jax.jit, static_argnames=("input_dim", "latent_dim"))
def cellvae_forward(x, params, *, input_dim, latent_dim):
    B = x.shape[0]
    if x.dtype != jnp.float32:
        x = x.astype(jnp.float32)

    tile_b = min(MAX_TILE_B, _round_up(B, 8))
    b_pad = _round_up(B, tile_b)
    if b_pad != B:
        x = jnp.pad(x, ((0, b_pad - B), (0, 0)))
    grid = (b_pad // tile_b,)

    # x / recon / mu stream over the batch grid; weights & biases use a constant
    # index_map so they are loaded once and stay resident in VMEM.
    x_spec = pl.BlockSpec((tile_b, input_dim), lambda i: (i, 0))
    param_specs = [pl.BlockSpec(p.shape, lambda i: (0, 0)) for p in params]
    recon_spec = pl.BlockSpec((tile_b, input_dim), lambda i: (i, 0))
    mu_spec = pl.BlockSpec((tile_b, LATENT_PAD), lambda i: (i, 0))

    weights = params[0::2]
    flops = 2 * b_pad * sum(int(w.shape[0]) * int(w.shape[1]) for w in weights)
    bytes_accessed = (x.size * 4
                      + sum(int(p.size) * p.dtype.itemsize for p in params)
                      + b_pad * input_dim * 4
                      + b_pad * LATENT_PAD * 4)

    recon, mu_pad = pl.pallas_call(
        cellvae_kernel,
        out_shape=(
            jax.ShapeDtypeStruct((b_pad, input_dim), jnp.float32),
            jax.ShapeDtypeStruct((b_pad, LATENT_PAD), jnp.float32),
        ),
        grid=grid,
        in_specs=[x_spec] + param_specs,
        out_specs=(recon_spec, mu_spec),
        compiler_params=pltpu.CompilerParams(
            dimension_semantics=("parallel",),
            vmem_limit_bytes=32 << 20,
        ),
        cost_estimate=pl.CostEstimate(
            flops=flops, transcendentals=0, bytes_accessed=bytes_accessed),
    )(x, *params)

    # logvar is None (use_variance=False), matching the PyTorch module default.
    # TODO(synk): z_logvar head + reparameterization noise only exist when
    # use_variance=True; not implemented here (default config has no RNG path).
    return recon[:B], mu_pad[:B, :latent_dim], None


if __name__ == "__main__":
    INPUT_DIM = 512
    LATENT_DIM = 10
    BATCH = 8

    root = jax.random.PRNGKey(0)
    k_x, k_p = jax.random.split(root)

    x = jax.random.normal(k_x, (BATCH, INPUT_DIM), jnp.float32)
    params = init_cellvae_params(k_p, input_dim=INPUT_DIM, latent_dim=LATENT_DIM)

    recon, mu, logvar = cellvae_forward(
        x, params, input_dim=INPUT_DIM, latent_dim=LATENT_DIM
    )
    jax.block_until_ready((recon, mu))

    assert recon.shape == (BATCH, INPUT_DIM)
    assert mu.shape == (BATCH, LATENT_DIM)
    assert logvar is None

    # Pure-JAX reference of the same (bf16-weight, f32-accumulate) MLP chain.
    def ref_forward(x, params, latent_dim):
        (e1w, e1b, e2w, e2b, e3w, e3b, zmw, zmb,
         d1w, d1b, d2w, d2b, d3w, d3b, d4w, d4b) = params

        def lin(h, w, b, relu):
            y = jnp.dot(h.astype(w.dtype), w,
                        preferred_element_type=jnp.float32) + b
            return jnp.maximum(y, 0.0) if relu else y

        h = lin(x, e1w, e1b, True)
        h = lin(h, e2w, e2b, True)
        h = lin(h, e3w, e3b, True)
        mu_full = lin(h, zmw, zmb, False)
        h = lin(mu_full, d1w, d1b, True)
        h = lin(h, d2w, d2b, True)
        h = lin(h, d3w, d3b, True)
        out = lin(h, d4w, d4b, False)
        return out, mu_full[:, :latent_dim]

    ref_recon, ref_mu = ref_forward(x, params, LATENT_DIM)
    assert jnp.allclose(recon, ref_recon, atol=1e-2, rtol=1e-2)
    assert jnp.allclose(mu, ref_mu, atol=1e-2, rtol=1e-2)

    print("KERNEL_OK")
</pallas_src>

<mosaic_0001>
module attributes {stable_mosaic.version = 11 : i64} {
  func.func @cellvae_kernel(%arg0: i32, %arg1: memref<8x512xf32, #tpu.memory_space<vmem>>, %arg2: memref<512x512xbf16, #tpu.memory_space<vmem>>, %arg3: memref<1x512xf32, #tpu.memory_space<vmem>>, %arg4: memref<512x256xbf16, #tpu.memory_space<vmem>>, %arg5: memref<1x256xf32, #tpu.memory_space<vmem>>, %arg6: memref<256x64xbf16, #tpu.memory_space<vmem>>, %arg7: memref<1x64xf32, #tpu.memory_space<vmem>>, %arg8: memref<64x128xbf16, #tpu.memory_space<vmem>>, %arg9: memref<1x128xf32, #tpu.memory_space<vmem>>, %arg10: memref<128x64xbf16, #tpu.memory_space<vmem>>, %arg11: memref<1x64xf32, #tpu.memory_space<vmem>>, %arg12: memref<64x256xbf16, #tpu.memory_space<vmem>>, %arg13: memref<1x256xf32, #tpu.memory_space<vmem>>, %arg14: memref<256x512xbf16, #tpu.memory_space<vmem>>, %arg15: memref<1x512xf32, #tpu.memory_space<vmem>>, %arg16: memref<512x512xbf16, #tpu.memory_space<vmem>>, %arg17: memref<1x512xf32, #tpu.memory_space<vmem>>, %arg18: memref<8x512xf32, #tpu.memory_space<vmem>>, %arg19: memref<8x128xf32, #tpu.memory_space<vmem>>) attributes {dimension_semantics = [#tpu.dimension_semantics<parallel>], iteration_bounds = array<i64: 1>, scalar_prefetch = 0 : i64, scratch_operands = 0 : i64, tpu.core_type = #tpu.core_type<tc>, window_params = [{transform_indices = @transform_0, window_bounds = array<i64: 8, 512>}, {pipeline_mode = #tpu.pipeline_mode<synchronous>, transform_indices = @transform_1, window_bounds = array<i64: 512, 512>}, {pipeline_mode = #tpu.pipeline_mode<synchronous>, transform_indices = @transform_2, window_bounds = array<i64: 1, 512>}, {pipeline_mode = #tpu.pipeline_mode<synchronous>, transform_indices = @transform_3, window_bounds = array<i64: 512, 256>}, {pipeline_mode = #tpu.pipeline_mode<synchronous>, transform_indices = @transform_4, window_bounds = array<i64: 1, 256>}, {pipeline_mode = #tpu.pipeline_mode<synchronous>, transform_indices = @transform_5, window_bounds = array<i64: 256, 64>}, {pipeline_mode = #tpu.pipeline_mode<synchronous>, transform_indices = @transform_6, window_bounds = array<i64: 1, 64>}, {pipeline_mode = #tpu.pipeline_mode<synchronous>, transform_indices = @transform_7, window_bounds = array<i64: 64, 128>}, {pipeline_mode = #tpu.pipeline_mode<synchronous>, transform_indices = @transform_8, window_bounds = array<i64: 1, 128>}, {pipeline_mode = #tpu.pipeline_mode<synchronous>, transform_indices = @transform_9, window_bounds = array<i64: 128, 64>}, {pipeline_mode = #tpu.pipeline_mode<synchronous>, transform_indices = @transform_10, window_bounds = array<i64: 1, 64>}, {pipeline_mode = #tpu.pipeline_mode<synchronous>, transform_indices = @transform_11, window_bounds = array<i64: 64, 256>}, {pipeline_mode = #tpu.pipeline_mode<synchronous>, transform_indices = @transform_12, window_bounds = array<i64: 1, 256>}, {pipeline_mode = #tpu.pipeline_mode<synchronous>, transform_indices = @transform_13, window_bounds = array<i64: 256, 512>}, {pipeline_mode = #tpu.pipeline_mode<synchronous>, transform_indices = @transform_14, window_bounds = array<i64: 1, 512>}, {pipeline_mode = #tpu.pipeline_mode<synchronous>, transform_indices = @transform_15, window_bounds = array<i64: 512, 512>}, {pipeline_mode = #tpu.pipeline_mode<synchronous>, transform_indices = @transform_16, window_bounds = array<i64: 1, 512>}, {transform_indices = @transform_17, window_bounds = array<i64: 8, 512>}, {transform_indices = @transform_18, window_bounds = array<i64: 8, 128>}]} {
    %c0 = arith.constant 0 : index
    %c0_0 = arith.constant 0 : index
    %0 = vector.load %arg1[%c0, %c0_0] : memref<8x512xf32, #tpu.memory_space<vmem>>, vector<8x512xf32>
    %1 = arith.truncf %0 : vector<8x512xf32> to vector<8x512xbf16>
    %c0_1 = arith.constant 0 : index
    %c0_2 = arith.constant 0 : index
    %2 = vector.load %arg2[%c0_1, %c0_2] : memref<512x512xbf16, #tpu.memory_space<vmem>>, vector<512x512xbf16>
    %cst = arith.constant dense<0.000000e+00> : vector<8x512xf32>
    %3 = tpu.matmul %1, %2, %cst {dimension_numbers = #tpu.dot_dimension_numbers<[1], [0], [0], [1], [0, 0, 1, 1], [], []>} : vector<8x512xbf16>, vector<512x512xbf16>, vector<8x512xf32> -> vector<8x512xf32>
    %c0_3 = arith.constant 0 : index
    %c0_4 = arith.constant 0 : index
    %4 = vector.load %arg3[%c0_3, %c0_4] : memref<1x512xf32, #tpu.memory_space<vmem>>, vector<1x512xf32>
    %5 = vector.broadcast %4 : vector<1x512xf32> to vector<8x512xf32>
    %6 = arith.addf %3, %5 : vector<8x512xf32>
    %cst_5 = arith.constant 0.000000e+00 : f32
    %7 = vector.broadcast %cst_5 : f32 to vector<8x512xf32>
    %8 = arith.maximumf %6, %7 : vector<8x512xf32>
    %9 = arith.truncf %8 : vector<8x512xf32> to vector<8x512xbf16>
    %c0_6 = arith.constant 0 : index
    %c0_7 = arith.constant 0 : index
    %10 = vector.load %arg4[%c0_6, %c0_7] : memref<512x256xbf16, #tpu.memory_space<vmem>>, vector<512x256xbf16>
    %cst_8 = arith.constant dense<0.000000e+00> : vector<8x256xf32>
    %11 = tpu.matmul %9, %10, %cst_8 {dimension_numbers = #tpu.dot_dimension_numbers<[1], [0], [0], [1], [0, 0, 1, 1], [], []>} : vector<8x512xbf16>, vector<512x256xbf16>, vector<8x256xf32> -> vector<8x256xf32>
    %c0_9 = arith.constant 0 : index
    %c0_10 = arith.constant 0 : index
    %12 = vector.load %arg5[%c0_9, %c0_10] : memref<1x256xf32, #tpu.memory_space<vmem>>, vector<1x256xf32>
    %13 = vector.broadcast %12 : vector<1x256xf32> to vector<8x256xf32>
    %14 = arith.addf %11, %13 : vector<8x256xf32>
    %cst_11 = arith.constant 0.000000e+00 : f32
    %15 = vector.broadcast %cst_11 : f32 to vector<8x256xf32>
    %16 = arith.maximumf %14, %15 : vector<8x256xf32>
    %17 = arith.truncf %16 : vector<8x256xf32> to vector<8x256xbf16>
    %c0_12 = arith.constant 0 : index
    %c0_13 = arith.constant 0 : index
    %18 = vector.load %arg6[%c0_12, %c0_13] : memref<256x64xbf16, #tpu.memory_space<vmem>>, vector<256x64xbf16>
    %cst_14 = arith.constant dense<0.000000e+00> : vector<8x64xf32>
    %19 = tpu.matmul %17, %18, %cst_14 {dimension_numbers = #tpu.dot_dimension_numbers<[1], [0], [0], [1], [0, 0, 1, 1], [], []>} : vector<8x256xbf16>, vector<256x64xbf16>, vector<8x64xf32> -> vector<8x64xf32>
    %c0_15 = arith.constant 0 : index
    %c0_16 = arith.constant 0 : index
    %20 = vector.load %arg7[%c0_15, %c0_16] : memref<1x64xf32, #tpu.memory_space<vmem>>, vector<1x64xf32>
    %21 = vector.broadcast %20 : vector<1x64xf32> to vector<8x64xf32>
    %22 = arith.addf %19, %21 : vector<8x64xf32>
    %cst_17 = arith.constant 0.000000e+00 : f32
    %23 = vector.broadcast %cst_17 : f32 to vector<8x64xf32>
    %24 = arith.maximumf %22, %23 : vector<8x64xf32>
    %25 = arith.truncf %24 : vector<8x64xf32> to vector<8x64xbf16>
    %c0_18 = arith.constant 0 : index
    %c0_19 = arith.constant 0 : index
    %26 = vector.load %arg8[%c0_18, %c0_19] : memref<64x128xbf16, #tpu.memory_space<vmem>>, vector<64x128xbf16>
    %cst_20 = arith.constant dense<0.000000e+00> : vector<8x128xf32>
    %27 = tpu.matmul %25, %26, %cst_20 {dimension_numbers = #tpu.dot_dimension_numbers<[1], [0], [0], [1], [0, 0, 1, 1], [], []>} : vector<8x64xbf16>, vector<64x128xbf16>, vector<8x128xf32> -> vector<8x128xf32>
    %c0_21 = arith.constant 0 : index
    %c0_22 = arith.constant 0 : index
    %28 = vector.load %arg9[%c0_21, %c0_22] : memref<1x128xf32, #tpu.memory_space<vmem>>, vector<1x128xf32>
    %29 = vector.broadcast %28 : vector<1x128xf32> to vector<8x128xf32>
    %30 = arith.addf %27, %29 : vector<8x128xf32>
    %c0_23 = arith.constant 0 : index
    %c0_24 = arith.constant 0 : index
    %31 = vector.load %arg19[%c0_23, %c0_24] : memref<8x128xf32, #tpu.memory_space<vmem>>, vector<8x128xf32>
    tpu.vector_store %arg19[%c0_23, %c0_24], %30 {strides = array<i32>} : memref<8x128xf32, #tpu.memory_space<vmem>>, vector<8x128xf32>,
    %32 = arith.truncf %30 : vector<8x128xf32> to vector<8x128xbf16>
    %c0_25 = arith.constant 0 : index
    %c0_26 = arith.constant 0 : index
    %33 = vector.load %arg10[%c0_25, %c0_26] : memref<128x64xbf16, #tpu.memory_space<vmem>>, vector<128x64xbf16>
    %cst_27 = arith.constant dense<0.000000e+00> : vector<8x64xf32>
    %34 = tpu.matmul %32, %33, %cst_27 {dimension_numbers = #tpu.dot_dimension_numbers<[1], [0], [0], [1], [0, 0, 1, 1], [], []>} : vector<8x128xbf16>, vector<128x64xbf16>, vector<8x64xf32> -> vector<8x64xf32>
    %c0_28 = arith.constant 0 : index
    %c0_29 = arith.constant 0 : index
    %35 = vector.load %arg11[%c0_28, %c0_29] : memref<1x64xf32, #tpu.memory_space<vmem>>, vector<1x64xf32>
    %36 = vector.broadcast %35 : vector<1x64xf32> to vector<8x64xf32>
    %37 = arith.addf %34, %36 : vector<8x64xf32>
    %cst_30 = arith.constant 0.000000e+00 : f32
    %38 = vector.broadcast %cst_30 : f32 to vector<8x64xf32>
    %39 = arith.maximumf %37, %38 : vector<8x64xf32>
    %40 = arith.truncf %39 : vector<8x64xf32> to vector<8x64xbf16>
    %c0_31 = arith.constant 0 : index
    %c0_32 = arith.constant 0 : index
    %41 = vector.load %arg12[%c0_31, %c0_32] : memref<64x256xbf16, #tpu.memory_space<vmem>>, vector<64x256xbf16>
    %cst_33 = arith.constant dense<0.000000e+00> : vector<8x256xf32>
    %42 = tpu.matmul %40, %41, %cst_33 {dimension_numbers = #tpu.dot_dimension_numbers<[1], [0], [0], [1], [0, 0, 1, 1], [], []>} : vector<8x64xbf16>, vector<64x256xbf16>, vector<8x256xf32> -> vector<8x256xf32>
    %c0_34 = arith.constant 0 : index
    %c0_35 = arith.constant 0 : index
    %43 = vector.load %arg13[%c0_34, %c0_35] : memref<1x256xf32, #tpu.memory_space<vmem>>, vector<1x256xf32>
    %44 = vector.broadcast %43 : vector<1x256xf32> to vector<8x256xf32>
    %45 = arith.addf %42, %44 : vector<8x256xf32>
    %cst_36 = arith.constant 0.000000e+00 : f32
    %46 = vector.broadcast %cst_36 : f32 to vector<8x256xf32>
    %47 = arith.maximumf %45, %46 : vector<8x256xf32>
    %48 = arith.truncf %47 : vector<8x256xf32> to vector<8x256xbf16>
    %c0_37 = arith.constant 0 : index
    %c0_38 = arith.constant 0 : index
    %49 = vector.load %arg14[%c0_37, %c0_38] : memref<256x512xbf16, #tpu.memory_space<vmem>>, vector<256x512xbf16>
    %cst_39 = arith.constant dense<0.000000e+00> : vector<8x512xf32>
    %50 = tpu.matmul %48, %49, %cst_39 {dimension_numbers = #tpu.dot_dimension_numbers<[1], [0], [0], [1], [0, 0, 1, 1], [], []>} : vector<8x256xbf16>, vector<256x512xbf16>, vector<8x512xf32> -> vector<8x512xf32>
    %c0_40 = arith.constant 0 : index
    %c0_41 = arith.constant 0 : index
    %51 = vector.load %arg15[%c0_40, %c0_41] : memref<1x512xf32, #tpu.memory_space<vmem>>, vector<1x512xf32>
    %52 = vector.broadcast %51 : vector<1x512xf32> to vector<8x512xf32>
    %53 = arith.addf %50, %52 : vector<8x512xf32>
    %cst_42 = arith.constant 0.000000e+00 : f32
    %54 = vector.broadcast %cst_42 : f32 to vector<8x512xf32>
    %55 = arith.maximumf %53, %54 : vector<8x512xf32>
    %56 = arith.truncf %55 : vector<8x512xf32> to vector<8x512xbf16>
    %c0_43 = arith.constant 0 : index
    %c0_44 = arith.constant 0 : index
    %57 = vector.load %arg16[%c0_43, %c0_44] : memref<512x512xbf16, #tpu.memory_space<vmem>>, vector<512x512xbf16>
    %cst_45 = arith.constant dense<0.000000e+00> : vector<8x512xf32>
    %58 = tpu.matmul %56, %57, %cst_45 {dimension_numbers = #tpu.dot_dimension_numbers<[1], [0], [0], [1], [0, 0, 1, 1], [], []>} : vector<8x512xbf16>, vector<512x512xbf16>, vector<8x512xf32> -> vector<8x512xf32>
    %c0_46 = arith.constant 0 : index
    %c0_47 = arith.constant 0 : index
    %59 = vector.load %arg17[%c0_46, %c0_47] : memref<1x512xf32, #tpu.memory_space<vmem>>, vector<1x512xf32>
    %60 = vector.broadcast %59 : vector<1x512xf32> to vector<8x512xf32>
    %61 = arith.addf %58, %60 : vector<8x512xf32>
    %c0_48 = arith.constant 0 : index
    %c0_49 = arith.constant 0 : index
    %62 = vector.load %arg18[%c0_48, %c0_49] : memref<8x512xf32, #tpu.memory_space<vmem>>, vector<8x512xf32>
    tpu.vector_store %arg18[%c0_48, %c0_49], %61 {strides = array<i32>} : memref<8x512xf32, #tpu.memory_space<vmem>>, vector<8x512xf32>,
    return
  }
  func.func @transform_0(%arg0: i32) -> (i32, i32) {
    %c0_i32 = arith.constant 0 : i32
    %c0_i32_0 = arith.constant 0 : i32
    return %arg0, %c0_i32 : i32, i32
  }
  func.func @transform_1(%arg0: i32) -> (i32, i32) {
    %c0_i32 = arith.constant 0 : i32
    %c0_i32_0 = arith.constant 0 : i32
    %c0_i32_1 = arith.constant 0 : i32
    return %c0_i32, %c0_i32_0 : i32, i32
  }
  func.func @transform_2(%arg0: i32) -> (i32, i32) {
    %c0_i32 = arith.constant 0 : i32
    %c0_i32_0 = arith.constant 0 : i32
    %c0_i32_1 = arith.constant 0 : i32
    return %c0_i32, %c0_i32_0 : i32, i32
  }
  func.func @transform_3(%arg0: i32) -> (i32, i32) {
    %c0_i32 = arith.constant 0 : i32
    %c0_i32_0 = arith.constant 0 : i32
    %c0_i32_1 = arith.constant 0 : i32
    return %c0_i32, %c0_i32_0 : i32, i32
  }
  func.func @transform_4(%arg0: i32) -> (i32, i32) {
    %c0_i32 = arith.constant 0 : i32
    %c0_i32_0 = arith.constant 0 : i32
    %c0_i32_1 = arith.constant 0 : i32
    return %c0_i32, %c0_i32_0 : i32, i32
  }
  func.func @transform_5(%arg0: i32) -> (i32, i32) {
    %c0_i32 = arith.constant 0 : i32
    %c0_i32_0 = arith.constant 0 : i32
    %c0_i32_1 = arith.constant 0 : i32
    return %c0_i32, %c0_i32_0 : i32, i32
  }
  func.func @transform_6(%arg0: i32) -> (i32, i32) {
    %c0_i32 = arith.constant 0 : i32
    %c0_i32_0 = arith.constant 0 : i32
    %c0_i32_1 = arith.constant 0 : i32
    return %c0_i32, %c0_i32_0 : i32, i32
  }
  func.func @transform_7(%arg0: i32) -> (i32, i32) {
    %c0_i32 = arith.constant 0 : i32
    %c0_i32_0 = arith.constant 0 : i32
    %c0_i32_1 = arith.constant 0 : i32
    return %c0_i32, %c0_i32_0 : i32, i32
  }
  func.func @transform_8(%arg0: i32) -> (i32, i32) {
    %c0_i32 = arith.constant 0 : i32
    %c0_i32_0 = arith.constant 0 : i32
    %c0_i32_1 = arith.constant 0 : i32
    return %c0_i32, %c0_i32_0 : i32, i32
  }
  func.func @transform_9(%arg0: i32) -> (i32, i32) {
    %c0_i32 = arith.constant 0 : i32
    %c0_i32_0 = arith.constant 0 : i32
    %c0_i32_1 = arith.constant 0 : i32
    return %c0_i32, %c0_i32_0 : i32, i32
  }
  func.func @transform_10(%arg0: i32) -> (i32, i32) {
    %c0_i32 = arith.constant 0 : i32
    %c0_i32_0 = arith.constant 0 : i32
    %c0_i32_1 = arith.constant 0 : i32
    return %c0_i32, %c0_i32_0 : i32, i32
  }
  func.func @transform_11(%arg0: i32) -> (i32, i32) {
    %c0_i32 = arith.constant 0 : i32
    %c0_i32_0 = arith.constant 0 : i32
    %c0_i32_1 = arith.constant 0 : i32
    return %c0_i32, %c0_i32_0 : i32, i32
  }
  func.func @transform_12(%arg0: i32) -> (i32, i32) {
    %c0_i32 = arith.constant 0 : i32
    %c0_i32_0 = arith.constant 0 : i32
    %c0_i32_1 = arith.constant 0 : i32
    return %c0_i32, %c0_i32_0 : i32, i32
  }
  func.func @transform_13(%arg0: i32) -> (i32, i32) {
    %c0_i32 = arith.constant 0 : i32
    %c0_i32_0 = arith.constant 0 : i32
    %c0_i32_1 = arith.constant 0 : i32
    return %c0_i32, %c0_i32_0 : i32, i32
  }
  func.func @transform_14(%arg0: i32) -> (i32, i32) {
    %c0_i32 = arith.constant 0 : i32
    %c0_i32_0 = arith.constant 0 : i32
    %c0_i32_1 = arith.constant 0 : i32
    return %c0_i32, %c0_i32_0 : i32, i32
  }
  func.func @transform_15(%arg0: i32) -> (i32, i32) {
    %c0_i32 = arith.constant 0 : i32
    %c0_i32_0 = arith.constant 0 : i32
    %c0_i32_1 = arith.constant 0 : i32
    return %c0_i32, %c0_i32_0 : i32, i32
  }
  func.func @transform_16(%arg0: i32) -> (i32, i32) {
    %c0_i32 = arith.constant 0 : i32
    %c0_i32_0 = arith.constant 0 : i32
    %c0_i32_1 = arith.constant 0 : i32
    return %c0_i32, %c0_i32_0 : i32, i32
  }
  func.func @transform_17(%arg0: i32) -> (i32, i32) {
    %c0_i32 = arith.constant 0 : i32
    %c0_i32_0 = arith.constant 0 : i32
    return %arg0, %c0_i32 : i32, i32
  }
  func.func @transform_18(%arg0: i32) -> (i32, i32) {
    %c0_i32 = arith.constant 0 : i32
    %c0_i32_0 = arith.constant 0 : i32
    return %arg0, %c0_i32 : i32, i32
  }
}

</mosaic_0001>

<llo_original>
// kernel: cellvae_forward.1
$region0: #{cellvae_forward.1}
  #allocation0 [shape = 'u32[]', space=smem, size = 0x4, offset = 0x4, fixed_abs, tag = 'smem constant byte address 0x4 - core index']
  #allocation1 [shape = 'u32[144,128]{1,0:T(1,128)}', space=vmem, size = 0x12000, scoped, tag = 'internal scratch']
  %s0 = inlined_call_operand.vmem [shape: f32[8,512], index: 0, kind: input, shape index: {}]
  %s1 = inlined_call_operand.hbm [shape: bf16[512,512], index: 1, kind: input, shape index: {}]
  %s2 = inlined_call_operand.vmem [shape: f32[1,512], index: 2, kind: input, shape index: {}]
  %s3 = inlined_call_operand.hbm [shape: bf16[512,256], index: 3, kind: input, shape index: {}]
  %s4 = inlined_call_operand.vmem [shape: f32[1,256], index: 4, kind: input, shape index: {}]
  %s5 = inlined_call_operand.vmem [shape: bf16[256,64], index: 5, kind: input, shape index: {}]
  %s6 = inlined_call_operand.vmem [shape: f32[1,64], index: 6, kind: input, shape index: {}]
  %s7 = inlined_call_operand.vmem [shape: bf16[64,128], index: 7, kind: input, shape index: {}]
  %s8 = inlined_call_operand.vmem [shape: f32[1,128], index: 8, kind: input, shape index: {}]
  %s9 = inlined_call_operand.vmem [shape: bf16[128,64], index: 9, kind: input, shape index: {}]
  %s10 = inlined_call_operand.vmem [shape: f32[1,64], index: 10, kind: input, shape index: {}]
  %s11 = inlined_call_operand.vmem [shape: bf16[64,256], index: 11, kind: input, shape index: {}]
  %s12 = inlined_call_operand.vmem [shape: f32[1,256], index: 12, kind: input, shape index: {}]
  %s13 = inlined_call_operand.hbm [shape: bf16[256,512], index: 13, kind: input, shape index: {}]
  %s14 = inlined_call_operand.vmem [shape: f32[1,512], index: 14, kind: input, shape index: {}]
  %s15 = inlined_call_operand.hbm [shape: bf16[512,512], index: 15, kind: input, shape index: {}]
  %s16 = inlined_call_operand.vmem [shape: f32[1,512], index: 16, kind: input, shape index: {}]
  %s17 = inlined_call_operand.hbm [shape: f32[8,512], index: 17, kind: output, shape index: {0}]
  %s18 = inlined_call_operand.hbm [shape: f32[8,128], index: 18, kind: output, shape index: {1}]
  %19 = xla_tuple %s17, %s18
  %s20 = sld [smem:[#allocation0]]
  $region102: #{cellvae_forward.1} parent=0
    _
  %s22 = ssub.s32 1, %s20
  %s23 = scalar_select 0, %s22, %s20
  $region1: #{cellvae_forward.1} parent=0
    #allocation2 [shape = 'u8[524288]{0}', space=vmem, size = 0x80000, scoped, tag = 'input window, operand 1, single buffered']
    #allocation3 [shape = 's32[1]{0}', space=sflag, size = 0x4, scoped, tag = 'scoped memory for cellvae_forward.1']
    #allocation4 [shape = 's32[1]{0}', space=sflag, size = 0x4, scoped, tag = 'scoped memory for cellvae_forward.1']
    #allocation5 [shape = 'u8[262144]{0}', space=vmem, size = 0x40000, scoped, tag = 'input window, operand 3, single buffered']
    #allocation6 [shape = 's32[1]{0}', space=sflag, size = 0x4, scoped, tag = 'scoped memory for cellvae_forward.1']
    #allocation7 [shape = 'u8[262144]{0}', space=vmem, size = 0x40000, scoped, tag = 'input window, operand 13, single buffered']
    #allocation8 [shape = 'u8[524288]{0}', space=vmem, size = 0x80000, scoped, tag = 'input window, operand 15, single buffered']
    #allocation9 [shape = 's32[1]{0}', space=sflag, size = 0x4, scoped, tag = 'scoped memory for cellvae_forward.1']
    #allocation10 [shape = 'u8[16384]{0}', space=vmem, size = 0x4000, scoped, tag = 'output window, operand 0, single buffered']
    #allocation11 [shape = 'u8[4096]{0}', space=vmem, size = 0x1000, scoped, tag = 'output window, operand 1, single buffered']
    #allocation12 [shape = 's32[1]{0}', space=sflag, size = 0x4, scoped, tag = 'scoped memory for cellvae_forward.1']
    %24 = vsyncpa [#allocation3], 0
    %25 = vsyncpa [#allocation6], 0
    %26 = vsyncpa [#allocation9], 0
    %27 = vsyncpa [#allocation4], 0
    %28 = vsyncpa [#allocation12], 0
    // Predicated region
    $region2: #{cellvae_forward.1} parent=1 // pred_check
      _
    $region3: #{cellvae_forward.1} parent=1 // pred_check_branch
      %30 = sbr.rel (0) target = $region5
    $region4: #{cellvae_forward.1} parent=1 // pred_region
      _
    $region5: #{cellvae_forward.1} parent=1 // pred_fallthru
      _
    // Predicated region
    $region6: #{cellvae_forward.1} parent=1 // pred_check
      _
    $region7: #{cellvae_forward.1} parent=1 // pred_check_branch
      %32 = sbr.rel (0) target = $region9
    $region8: #{cellvae_forward.1} parent=1 // pred_region
      %s34 = ssub.s32 16384, 16384
      %35 = vsyncadd [#allocation3], %s34
      %s36 = sshll.u32 [#allocation2], 4
      %s37 = int_to_ptr.vmem [resolvable:$true] %s36
      %42 = dma.hbm_to_vmem [thread:$0]  %s1, 16384, %s37, [#allocation3], 256, 256, 16
    $region9: #{cellvae_forward.1} parent=1 // pred_fallthru
      _
    // Predicated region
    $region10: #{cellvae_forward.1} parent=1 // pred_check
      _
    $region11: #{cellvae_forward.1} parent=1 // pred_check_branch
      %44 = sbr.rel (0) target = $region13
    $region12: #{cellvae_forward.1} parent=1 // pred_region
      _
    $region13: #{cellvae_forward.1} parent=1 // pred_fallthru
      _
    // Predicated region
    $region14: #{cellvae_forward.1} parent=1 // pred_check
      _
    $region15: #{cellvae_forward.1} parent=1 // pred_check_branch
      %46 = sbr.rel (0) target = $region17
    $region16: #{cellvae_forward.1} parent=1 // pred_region
      %s48 = ssub.s32 8192, 8192
      %49 = vsyncadd [#allocation6], %s48
      %s50 = sshll.u32 [#allocation5], 4
      %s51 = int_to_ptr.vmem [resolvable:$true] %s50
      %56 = dma.hbm_to_vmem [thread:$0]  %s3, 8192, %s51, [#allocation6], 128, 128, 8
    $region17: #{cellvae_forward.1} parent=1 // pred_fallthru
      _
    // Predicated region
    $region18: #{cellvae_forward.1} parent=1 // pred_check
      _
    $region19: #{cellvae_forward.1} parent=1 // pred_check_branch
      %58 = sbr.rel (0) target = $region21
    $region20: #{cellvae_forward.1} parent=1 // pred_region
      _
    $region21: #{cellvae_forward.1} parent=1 // pred_fallthru
      _
    // Predicated region
    $region22: #{cellvae_forward.1} parent=1 // pred_check
      _
    $region23: #{cellvae_forward.1} parent=1 // pred_check_branch
      %60 = sbr.rel (0) target = $region25
    $region24: #{cellvae_forward.1} parent=1 // pred_region
      _
    $region25: #{cellvae_forward.1} parent=1 // pred_fallthru
      _
    // Predicated region
    $region26: #{cellvae_forward.1} parent=1 // pred_check
      _
    $region27: #{cellvae_forward.1} parent=1 // pred_check_branch
      %62 = sbr.rel (0) target = $region29
    $region28: #{cellvae_forward.1} parent=1 // pred_region
      _
    $region29: #{cellvae_forward.1} parent=1 // pred_fallthru
      _
    // Predicated region
    $region30: #{cellvae_forward.1} parent=1 // pred_check
      _
    $region31: #{cellvae_forward.1} parent=1 // pred_check_branch
      %64 = sbr.rel (0) target = $region33
    $region32: #{cellvae_forward.1} parent=1 // pred_region
      _
    $region33: #{cellvae_forward.1} parent=1 // pred_fallthru
      _
    // Predicated region
    $region34: #{cellvae_forward.1} parent=1 // pred_check
      _
    $region35: #{cellvae_forward.1} parent=1 // pred_check_branch
      %66 = sbr.rel (0) target = $region37
    $region36: #{cellvae_forward.1} parent=1 // pred_region
      _
    $region37: #{cellvae_forward.1} parent=1 // pred_fallthru
      _
    // Predicated region
    $region38: #{cellvae_forward.1} parent=1 // pred_check
      _
    $region39: #{cellvae_forward.1} parent=1 // pred_check_branch
      %68 = sbr.rel (0) target = $region41
    $region40: #{cellvae_forward.1} parent=1 // pred_region
      _
    $region41: #{cellvae_forward.1} parent=1 // pred_fallthru
      _
    // Predicated region
    $region42: #{cellvae_forward.1} parent=1 // pred_check
      _
    $region43: #{cellvae_forward.1} parent=1 // pred_check_branch
      %70 = sbr.rel (0) target = $region45
    $region44: #{cellvae_forward.1} parent=1 // pred_region
      _
    $region45: #{cellvae_forward.1} parent=1 // pred_fallthru
      _
    // Predicated region
    $region46: #{cellvae_forward.1} parent=1 // pred_check
      _
    $region47: #{cellvae_forward.1} parent=1 // pred_check_branch
      %72 = sbr.rel (0) target = $region49
    $region48: #{cellvae_forward.1} parent=1 // pred_region
      _
    $region49: #{cellvae_forward.1} parent=1 // pred_fallthru
      _
    // Predicated region
    $region50: #{cellvae_forward.1} parent=1 // pred_check
      _
    $region51: #{cellvae_forward.1} parent=1 // pred_check_branch
      %74 = sbr.rel (0) target = $region53
    $region52: #{cellvae_forward.1} parent=1 // pred_region
      _
    $region53: #{cellvae_forward.1} parent=1 // pred_fallthru
      _
    // Predicated region
    $region54: #{cellvae_forward.1} parent=1 // pred_check
      _
    $region55: #{cellvae_forward.1} parent=1 // pred_check_branch
      %76 = sbr.rel (0) target = $region57
    $region56: #{cellvae_forward.1} parent=1 // pred_region
      %s78 = ssub.s32 8192, 8192
      %79 = vsyncadd [#allocation6], %s78
      %s80 = sshll.u32 [#allocation7], 4
      %s81 = int_to_ptr.vmem [resolvable:$true] %s80
      %86 = dma.hbm_to_vmem [thread:$0]  %s13, 8192, %s81, [#allocation6], 256, 256, 16
    $region57: #{cellvae_forward.1} parent=1 // pred_fallthru
      _
    // Predicated region
    $region58: #{cellvae_forward.1} parent=1 // pred_check
      _
    $region59: #{cellvae_forward.1} parent=1 // pred_check_branch
      %88 = sbr.rel (0) target = $region61
    $region60: #{cellvae_forward.1} parent=1 // pred_region
      _
    $region61: #{cellvae_forward.1} parent=1 // pred_fallthru
      _
    // Predicated region
    $region62: #{cellvae_forward.1} parent=1 // pred_check
      _
    $region63: #{cellvae_forward.1} parent=1 // pred_check_branch
      %90 = sbr.rel (0) target = $region65
    $region64: #{cellvae_forward.1} parent=1 // pred_region
      %s92 = ssub.s32 16384, 16384
      %93 = vsyncadd [#allocation9], %s92
      %s94 = sshll.u32 [#allocation8], 4
      %s95 = int_to_ptr.vmem [resolvable:$true] %s94
      %100 = dma.hbm_to_vmem [thread:$0]  %s15, 16384, %s95, [#allocation9], 256, 256, 16
    $region65: #{cellvae_forward.1} parent=1 // pred_fallthru
      _
    // Predicated region
    $region66: #{cellvae_forward.1} parent=1 // pred_check
      _
    $region67: #{cellvae_forward.1} parent=1 // pred_check_branch
      %102 = sbr.rel (0) target = $region69
    $region68: #{cellvae_forward.1} parent=1 // pred_region
      _
    $region69: #{cellvae_forward.1} parent=1 // pred_fallthru
      _
    // Predicated region
    $region70: #{cellvae_forward.1} parent=1 // pred_check
      _
    $region71: #{cellvae_forward.1} parent=1 // pred_check_branch
      %104 = sbr.rel (0) target = $region73
    $region72: #{cellvae_forward.1} parent=1 // pred_region
      %105 = dma.done [#allocation3], 16384
    $region73: #{cellvae_forward.1} parent=1 // pred_fallthru
      _
    // Predicated region
    $region74: #{cellvae_forward.1} parent=1 // pred_check
      _
    $region75: #{cellvae_forward.1} parent=1 // pred_check_branch
      %107 = sbr.rel (0) target = $region77
    $region76: #{cellvae_forward.1} parent=1 // pred_region
      %108 = dma.done [#allocation6], 8192
    $region77: #{cellvae_forward.1} parent=1 // pred_fallthru
      _
    // Predicated region
    $region78: #{cellvae_forward.1} parent=1 // pred_check
      _
    $region79: #{cellvae_forward.1} parent=1 // pred_check_branch
      %110 = sbr.rel (0) target = $region81
    $region80: #{cellvae_forward.1} parent=1 // pred_region
      %111 = dma.done [#allocation6], 8192
    $region81: #{cellvae_forward.1} parent=1 // pred_fallthru
      _
    // Predicated region
    $region82: #{cellvae_forward.1} parent=1 // pred_check
      _
    $region83: #{cellvae_forward.1} parent=1 // pred_check_branch
      %113 = sbr.rel (0) target = $region85
    $region84: #{cellvae_forward.1} parent=1 // pred_region
      %114 = dma.done [#allocation9], 16384
    $region85: #{cellvae_forward.1} parent=1 // pred_fallthru
      _
    %v116 = vld [vmem:[%s0] sm:$0xff]
    %v117 = vld [vmem:[%s0 + $0x8] sm:$0xff]
    %v118 = vld [vmem:[%s0 + $0x10] sm:$0xff]
    %v119 = vld [vmem:[%s0 + $0x18] sm:$0xff]
    %v120 = vpack.c.bf16 %v116, %v116
    %v121 = vpack.c.bf16 %v117, %v117
    %v122 = vpack.c.bf16 %v118, %v118
    %v123 = vpack.c.bf16 %v119, %v119
    %v124 = vld [vmem:[#allocation2] sm:$0xff]
    %v125 = vld [vmem:[#allocation2 + $0x8] sm:$0xff]
    %v126 = vld [vmem:[#allocation2 + $0x10] sm:$0xff]
    %v127 = vld [vmem:[#allocation2 + $0x18] sm:$0xff]
    %v128 = vld [vmem:[#allocation2 + $0x20] sm:$0xff]
    %v129 = vld [vmem:[#allocation2 + $0x28] sm:$0xff]
    %v130 = vld [vmem:[#allocation2 + $0x30] sm:$0xff]
    %v131 = vld [vmem:[#allocation2 + $0x38] sm:$0xff]
    %v132 = vld [vmem:[#allocation2 + $0x40] sm:$0xff]
    %v133 = vld [vmem:[#allocation2 + $0x48] sm:$0xff]
    %v134 = vld [vmem:[#allocation2 + $0x50] sm:$0xff]
    %v135 = vld [vmem:[#allocation2 + $0x58] sm:$0xff]
    %v136 = vld [vmem:[#allocation2 + $0x60] sm:$0xff]
    %v137 = vld [vmem:[#allocation2 + $0x68] sm:$0xff]
    %v138 = vld [vmem:[#allocation2 + $0x70] sm:$0xff]
    %v139 = vld [vmem:[#allocation2 + $0x78] sm:$0xff]
    %v140 = vld [vmem:[#allocation2 + $0x80] sm:$0xff]
    %v141 = vld [vmem:[#allocation2 + $0x88] sm:$0xff]
    %v142 = vld [vmem:[#allocation2 + $0x90] sm:$0xff]
    %v143 = vld [vmem:[#allocation2 + $0x98] sm:$0xff]
    %v144 = vld [vmem:[#allocation2 + $0xa0] sm:$0xff]
    %v145 = vld [vmem:[#allocation2 + $0xa8] sm:$0xff]
    %v146 = vld [vmem:[#allocation2 + $0xb0] sm:$0xff]
    %v147 = vld [vmem:[#allocation2 + $0xb8] sm:$0xff]
    %v148 = vld [vmem:[#allocation2 + $0xc0] sm:$0xff]
    %v149 = vld [vmem:[#allocation2 + $0xc8] sm:$0xff]
    %v150 = vld [vmem:[#allocation2 + $0xd0] sm:$0xff]
    %v151 = vld [vmem:[#allocation2 + $0xd8] sm:$0xff]
    %v152 = vld [vmem:[#allocation2 + $0xe0] sm:$0xff]
    %v153 = vld [vmem:[#allocation2 + $0xe8] sm:$0xff]
    %v154 = vld [vmem:[#allocation2 + $0xf0] sm:$0xff]
    %v155 = vld [vmem:[#allocation2 + $0xf8] sm:$0xff]
    %v156 = vld [vmem:[#allocation2 + $0x100] sm:$0xff]
    %v157 = vld [vmem:[#allocation2 + $0x108] sm:$0xff]
    %v158 = vld [vmem:[#allocation2 + $0x110] sm:$0xff]
    %v159 = vld [vmem:[#allocation2 + $0x118] sm:$0xff]
    %v160 = vld [vmem:[#allocation2 + $0x120] sm:$0xff]
    %v161 = vld [vmem:[#allocation2 + $0x128] sm:$0xff]
    %v162 = vld [vmem:[#allocation2 + $0x130] sm:$0xff]
    %v163 = vld [vmem:[#allocation2 + $0x138] sm:$0xff]
    %v164 = vld [vmem:[#allocation2 + $0x140] sm:$0xff]
    %v165 = vld [vmem:[#allocation2 + $0x148] sm:$0xff]
    %v166 = vld [vmem:[#allocation2 + $0x150] sm:$0xff]
    %v167 = vld [vmem:[#allocation2 + $0x158] sm:$0xff]
    %v168 = vld [vmem:[#allocation2 + $0x160] sm:$0xff]
    %v169 = vld [vmem:[#allocation2 + $0x168] sm:$0xff]
    %v170 = vld [vmem:[#allocation2 + $0x170] sm:$0xff]
    %v171 = vld [vmem:[#allocation2 + $0x178] sm:$0xff]
    %v172 = vld [vmem:[#allocation2 + $0x180] sm:$0xff]
    %v173 = vld [vmem:[#allocation2 + $0x188] sm:$0xff]
    %v174 = vld [vmem:[#allocation2 + $0x190] sm:$0xff]
    %v175 = vld [vmem:[#allocation2 + $0x198] sm:$0xff]
    %v176 = vld [vmem:[#allocation2 + $0x1a0] sm:$0xff]
    %v177 = vld [vmem:[#allocation2 + $0x1a8] sm:$0xff]
    %v178 = vld [vmem:[#allocation2 + $0x1b0] sm:$0xff]
    %v179 = vld [vmem:[#allocation2 + $0x1b8] sm:$0xff]
    %v180 = vld [vmem:[#allocation2 + $0x1c0] sm:$0xff]
    %v181 = vld [vmem:[#allocation2 + $0x1c8] sm:$0xff]
    %v182 = vld [vmem:[#allocation2 + $0x1d0] sm:$0xff]
    %v183 = vld [vmem:[#allocation2 + $0x1d8] sm:$0xff]
    %v184 = vld [vmem:[#allocation2 + $0x1e0] sm:$0xff]
    %v185 = vld [vmem:[#allocation2 + $0x1e8] sm:$0xff]
    %v186 = vld [vmem:[#allocation2 + $0x1f0] sm:$0xff]
    %v187 = vld [vmem:[#allocation2 + $0x1f8] sm:$0xff]
    %v188 = vld [vmem:[#allocation2 + $0x200] sm:$0xff]
    %v189 = vld [vmem:[#allocation2 + $0x208] sm:$0xff]
    %v190 = vld [vmem:[#allocation2 + $0x210] sm:$0xff]
    %v191 = vld [vmem:[#allocation2 + $0x218] sm:$0xff]
    %v192 = vld [vmem:[#allocation2 + $0x220] sm:$0xff]
    %v193 = vld [vmem:[#allocation2 + $0x228] sm:$0xff]
    %v194 = vld [vmem:[#allocation2 + $0x230] sm:$0xff]
    %v195 = vld [vmem:[#allocation2 + $0x238] sm:$0xff]
    %v196 = vld [vmem:[#allocation2 + $0x240] sm:$0xff]
    %v197 = vld [vmem:[#allocation2 + $0x248] sm:$0xff]
    %v198 = vld [vmem:[#allocation2 + $0x250] sm:$0xff]
    %v199 = vld [vmem:[#allocation2 + $0x258] sm:$0xff]
    %v200 = vld [vmem:[#allocation2 + $0x260] sm:$0xff]
    %v201 = vld [vmem:[#allocation2 + $0x268] sm:$0xff]
    %v202 = vld [vmem:[#allocation2 + $0x270] sm:$0xff]
    %v203 = vld [vmem:[#allocation2 + $0x278] sm:$0xff]
    %v204 = vld [vmem:[#allocation2 + $0x280] sm:$0xff]
    %v205 = vld [vmem:[#allocation2 + $0x288] sm:$0xff]
    %v206 = vld [vmem:[#allocation2 + $0x290] sm:$0xff]
    %v207 = vld [vmem:[#allocation2 + $0x298] sm:$0xff]
    %v208 = vld [vmem:[#allocation2 + $0x2a0] sm:$0xff]
    %v209 = vld [vmem:[#allocation2 + $0x2a8] sm:$0xff]
    %v210 = vld [vmem:[#allocation2 + $0x2b0] sm:$0xff]
    %v211 = vld [vmem:[#allocation2 + $0x2b8] sm:$0xff]
    %v212 = vld [vmem:[#allocation2 + $0x2c0] sm:$0xff]
    %v213 = vld [vmem:[#allocation2 + $0x2c8] sm:$0xff]
    %v214 = vld [vmem:[#allocation2 + $0x2d0] sm:$0xff]
    %v215 = vld [vmem:[#allocation2 + $0x2d8] sm:$0xff]
    %v216 = vld [vmem:[#allocation2 + $0x2e0] sm:$0xff]
    %v217 = vld [vmem:[#allocation2 + $0x2e8] sm:$0xff]
    %v218 = vld [vmem:[#allocation2 + $0x2f0] sm:$0xff]
    %v219 = vld [vmem:[#allocation2 + $0x2f8] sm:$0xff]
    %v220 = vld [vmem:[#allocation2 + $0x300] sm:$0xff]
    %v221 = vld [vmem:[#allocation2 + $0x308] sm:$0xff]
    %v222 = vld [vmem:[#allocation2 + $0x310] sm:$0xff]
    %v223 = vld [vmem:[#allocation2 + $0x318] sm:$0xff]
    %v224 = vld [vmem:[#allocation2 + $0x320] sm:$0xff]
    %v225 = vld [vmem:[#allocation2 + $0x328] sm:$0xff]
    %v226 = vld [vmem:[#allocation2 + $0x330] sm:$0xff]
    %v227 = vld [vmem:[#allocation2 + $0x338] sm:$0xff]
    %v228 = vld [vmem:[#allocation2 + $0x340] sm:$0xff]
    %v229 = vld [vmem:[#allocation2 + $0x348] sm:$0xff]
    %v230 = vld [vmem:[#allocation2 + $0x350] sm:$0xff]
    %v231 = vld [vmem:[#allocation2 + $0x358] sm:$0xff]
    %v232 = vld [vmem:[#allocation2 + $0x360] sm:$0xff]
    %v233 = vld [vmem:[#allocation2 + $0x368] sm:$0xff]
    %v234 = vld [vmem:[#allocation2 + $0x370] sm:$0xff]
    %v235 = vld [vmem:[#allocation2 + $0x378] sm:$0xff]
    %v236 = vld [vmem:[#allocation2 + $0x380] sm:$0xff]
    %v237 = vld [vmem:[#allocation2 + $0x388] sm:$0xff]
    %v238 = vld [vmem:[#allocation2 + $0x390] sm:$0xff]
    %v239 = vld [vmem:[#allocation2 + $0x398] sm:$0xff]
    %v240 = vld [vmem:[#allocation2 + $0x3a0] sm:$0xff]
    %v241 = vld [vmem:[#allocation2 + $0x3a8] sm:$0xff]
    %v242 = vld [vmem:[#allocation2 + $0x3b0] sm:$0xff]
    %v243 = vld [vmem:[#allocation2 + $0x3b8] sm:$0xff]
    %v244 = vld [vmem:[#allocation2 + $0x3c0] sm:$0xff]
    %v245 = vld [vmem:[#allocation2 + $0x3c8] sm:$0xff]
    %v246 = vld [vmem:[#allocation2 + $0x3d0] sm:$0xff]
    %v247 = vld [vmem:[#allocation2 + $0x3d8] sm:$0xff]
    %v248 = vld [vmem:[#allocation2 + $0x3e0] sm:$0xff]
    %v249 = vld [vmem:[#allocation2 + $0x3e8] sm:$0xff]
    %v250 = vld [vmem:[#allocation2 + $0x3f0] sm:$0xff]
    %v251 = vld [vmem:[#allocation2 + $0x3f8] sm:$0xff]
    %v252 = vld [vmem:[%s2] sm:$0xf]
    %v254 = vlaneseq
    %v255 = vshrl.u32 %v254, 7
    %v256 = vsub.s32 0, %v255
    %v257 = vrot.slane %v252, %v256
    %v258 = vlaneseq
    %v259 = vshrl.u32 %v258, 7
    %v260 = vsub.s32 1, %v259
    %v261 = vrot.slane %v252, %v260
    %v262 = vlaneseq
    %v263 = vshrl.u32 %v262, 7
    %v264 = vsub.s32 2, %v263
    %v265 = vrot.slane %v252, %v264
    %v266 = vlaneseq
    %v267 = vshrl.u32 %v266, 7
    %v268 = vsub.s32 3, %v267
    %v269 = vrot.slane %v252, %v268
    %v402 = vunpack.c.l.b16 %v124
    %v403 = vunpack.c.h.b16 %v124
    %v404 = vunpack.c.l.b16 %v125
    %v405 = vunpack.c.h.b16 %v125
    %v406 = vunpack.c.l.b16 %v126
    %v407 = vunpack.c.h.b16 %v126
    %v408 = vunpack.c.l.b16 %v127
    %v409 = vunpack.c.h.b16 %v127
    %v410 = vunpack.c.l.b16 %v128
    %v411 = vunpack.c.h.b16 %v128
    %v412 = vunpack.c.l.b16 %v129
    %v413 = vunpack.c.h.b16 %v129
    %v414 = vunpack.c.l.b16 %v130
    %v415 = vunpack.c.h.b16 %v130
    %v416 = vunpack.c.l.b16 %v131
    %v417 = vunpack.c.h.b16 %v131
    %v418 = vunpack.c.l.b16 %v132
    %v419 = vunpack.c.h.b16 %v132
    %v420 = vunpack.c.l.b16 %v133
    %v421 = vunpack.c.h.b16 %v133
    %v422 = vunpack.c.l.b16 %v134
    %v423 = vunpack.c.h.b16 %v134
    %v424 = vunpack.c.l.b16 %v135
    %v425 = vunpack.c.h.b16 %v135
    %v426 = vunpack.c.l.b16 %v136
    %v427 = vunpack.c.h.b16 %v136
    %v428 = vunpack.c.l.b16 %v137
    %v429 = vunpack.c.h.b16 %v137
    %v430 = vunpack.c.l.b16 %v138
    %v431 = vunpack.c.h.b16 %v138
    %v432 = vunpack.c.l.b16 %v139
    %v433 = vunpack.c.h.b16 %v139
    %v434 = vunpack.c.l.b16 %v140
    %v435 = vunpack.c.h.b16 %v140
    %v436 = vunpack.c.l.b16 %v141
    %v437 = vunpack.c.h.b16 %v141
    %v438 = vunpack.c.l.b16 %v142
    %v439 = vunpack.c.h.b16 %v142
    %v440 = vunpack.c.l.b16 %v143
    %v441 = vunpack.c.h.b16 %v143
    %v442 = vunpack.c.l.b16 %v144
    %v443 = vunpack.c.h.b16 %v144
    %v444 = vunpack.c.l.b16 %v145
    %v445 = vunpack.c.h.b16 %v145
    %v446 = vunpack.c.l.b16 %v146
    %v447 = vunpack.c.h.b16 %v146
    %v448 = vunpack.c.l.b16 %v147
    %v449 = vunpack.c.h.b16 %v147
    %v450 = vunpack.c.l.b16 %v148
    %v451 = vunpack.c.h.b16 %v148
    %v452 = vunpack.c.l.b16 %v149
    %v453 = vunpack.c.h.b16 %v149
    %v454 = vunpack.c.l.b16 %v150
    %v455 = vunpack.c.h.b16 %v150
    %v456 = vunpack.c.l.b16 %v151
    %v457 = vunpack.c.h.b16 %v151
    %v458 = vunpack.c.l.b16 %v152
    %v459 = vunpack.c.h.b16 %v152
    %v460 = vunpack.c.l.b16 %v153
    %v461 = vunpack.c.h.b16 %v153
    %v462 = vunpack.c.l.b16 %v154
    %v463 = vunpack.c.h.b16 %v154
    %v464 = vunpack.c.l.b16 %v155
    %v465 = vunpack.c.h.b16 %v155
    %v466 = vunpack.c.l.b16 %v156
    %v467 = vunpack.c.h.b16 %v156
    %v468 = vunpack.c.l.b16 %v157
    %v469 = vunpack.c.h.b16 %v157
    %v470 = vunpack.c.l.b16 %v158
    %v471 = vunpack.c.h.b16 %v158
    %v472 = vunpack.c.l.b16 %v159
    %v473 = vunpack.c.h.b16 %v159
    %v474 = vunpack.c.l.b16 %v160
    %v475 = vunpack.c.h.b16 %v160
    %v476 = vunpack.c.l.b16 %v161
    %v477 = vunpack.c.h.b16 %v161
    %v478 = vunpack.c.l.b16 %v162
    %v479 = vunpack.c.h.b16 %v162
    %v480 = vunpack.c.l.b16 %v163
    %v481 = vunpack.c.h.b16 %v163
    %v482 = vunpack.c.l.b16 %v164
    %v483 = vunpack.c.h.b16 %v164
    %v484 = vunpack.c.l.b16 %v165
    %v485 = vunpack.c.h.b16 %v165
    %v486 = vunpack.c.l.b16 %v166
    %v487 = vunpack.c.h.b16 %v166
    %v488 = vunpack.c.l.b16 %v167
    %v489 = vunpack.c.h.b16 %v167
    %v490 = vunpack.c.l.b16 %v168
    %v491 = vunpack.c.h.b16 %v168
    %v492 = vunpack.c.l.b16 %v169
    %v493 = vunpack.c.h.b16 %v169
    %v494 = vunpack.c.l.b16 %v170
    %v495 = vunpack.c.h.b16 %v170
    %v496 = vunpack.c.l.b16 %v171
    %v497 = vunpack.c.h.b16 %v171
    %v498 = vunpack.c.l.b16 %v172
    %v499 = vunpack.c.h.b16 %v172
    %v500 = vunpack.c.l.b16 %v173
    %v501 = vunpack.c.h.b16 %v173
    %v502 = vunpack.c.l.b16 %v174
    %v503 = vunpack.c.h.b16 %v174
    %v504 = vunpack.c.l.b16 %v175
    %v505 = vunpack.c.h.b16 %v175
    %v506 = vunpack.c.l.b16 %v176
    %v507 = vunpack.c.h.b16 %v176
    %v508 = vunpack.c.l.b16 %v177
    %v509 = vunpack.c.h.b16 %v177
    %v510 = vunpack.c.l.b16 %v178
    %v511 = vunpack.c.h.b16 %v178
    %v512 = vunpack.c.l.b16 %v179
    %v513 = vunpack.c.h.b16 %v179
    %v514 = vunpack.c.l.b16 %v180
    %v515 = vunpack.c.h.b16 %v180
    %v516 = vunpack.c.l.b16 %v181
    %v517 = vunpack.c.h.b16 %v181
    %v518 = vunpack.c.l.b16 %v182
    %v519 = vunpack.c.h.b16 %v182
    %v520 = vunpack.c.l.b16 %v183
    %v521 = vunpack.c.h.b16 %v183
    %v522 = vunpack.c.l.b16 %v184
    %v523 = vunpack.c.h.b16 %v184
    %v524 = vunpack.c.l.b16 %v185
    %v525 = vunpack.c.h.b16 %v185
    %v526 = vunpack.c.l.b16 %v186
    %v527 = vunpack.c.h.b16 %v186
    %v528 = vunpack.c.l.b16 %v187
    %v529 = vunpack.c.h.b16 %v187
    %v530 = vunpack.c.l.b16 %v188
    %v531 = vunpack.c.h.b16 %v188
    %v532 = vunpack.c.l.b16 %v189
    %v533 = vunpack.c.h.b16 %v189
    %v534 = vunpack.c.l.b16 %v190
    %v535 = vunpack.c.h.b16 %v190
    %v536 = vunpack.c.l.b16 %v191
    %v537 = vunpack.c.h.b16 %v191
    %v538 = vunpack.c.l.b16 %v192
    %v539 = vunpack.c.h.b16 %v192
    %v540 = vunpack.c.l.b16 %v193
    %v541 = vunpack.c.h.b16 %v193
    %v542 = vunpack.c.l.b16 %v194
    %v543 = vunpack.c.h.b16 %v194
    %v544 = vunpack.c.l.b16 %v195
    %v545 = vunpack.c.h.b16 %v195
    %v546 = vunpack.c.l.b16 %v196
    %v547 = vunpack.c.h.b16 %v196
    %v548 = vunpack.c.l.b16 %v197
    %v549 = vunpack.c.h.b16 %v197
    %v550 = vunpack.c.l.b16 %v198
    %v551 = vunpack.c.h.b16 %v198
    %v552 = vunpack.c.l.b16 %v199
    %v553 = vunpack.c.h.b16 %v199
    %v554 = vunpack.c.l.b16 %v200
    %v555 = vunpack.c.h.b16 %v200
    %v556 = vunpack.c.l.b16 %v201
    %v557 = vunpack.c.h.b16 %v201
    %v558 = vunpack.c.l.b16 %v202
    %v559 = vunpack.c.h.b16 %v202
    %v560 = vunpack.c.l.b16 %v203
    %v561 = vunpack.c.h.b16 %v203
    %v562 = vunpack.c.l.b16 %v204
    %v563 = vunpack.c.h.b16 %v204
    %v564 = vunpack.c.l.b16 %v205
    %v565 = vunpack.c.h.b16 %v205
    %v566 = vunpack.c.l.b16 %v206
    %v567 = vunpack.c.h.b16 %v206
    %v568 = vunpack.c.l.b16 %v207
    %v569 = vunpack.c.h.b16 %v207
    %v570 = vunpack.c.l.b16 %v208
    %v571 = vunpack.c.h.b16 %v208
    %v572 = vunpack.c.l.b16 %v209
    %v573 = vunpack.c.h.b16 %v209
    %v574 = vunpack.c.l.b16 %v210
    %v575 = vunpack.c.h.b16 %v210
    %v576 = vunpack.c.l.b16 %v211
    %v577 = vunpack.c.h.b16 %v211
    %v578 = vunpack.c.l.b16 %v212
    %v579 = vunpack.c.h.b16 %v212
    %v580 = vunpack.c.l.b16 %v213
    %v581 = vunpack.c.h.b16 %v213
    %v582 = vunpack.c.l.b16 %v214
    %v583 = vunpack.c.h.b16 %v214
    %v584 = vunpack.c.l.b16 %v215
    %v585 = vunpack.c.h.b16 %v215
    %v586 = vunpack.c.l.b16 %v216
    %v587 = vunpack.c.h.b16 %v216
    %v588 = vunpack.c.l.b16 %v217
    %v589 = vunpack.c.h.b16 %v217
    %v590 = vunpack.c.l.b16 %v218
    %v591 = vunpack.c.h.b16 %v218
    %v592 = vunpack.c.l.b16 %v219
    %v593 = vunpack.c.h.b16 %v219
    %v594 = vunpack.c.l.b16 %v220
    %v595 = vunpack.c.h.b16 %v220
    %v596 = vunpack.c.l.b16 %v221
    %v597 = vunpack.c.h.b16 %v221
    %v598 = vunpack.c.l.b16 %v222
    %v599 = vunpack.c.h.b16 %v222
    %v600 = vunpack.c.l.b16 %v223
    %v601 = vunpack.c.h.b16 %v223
    %v602 = vunpack.c.l.b16 %v224
    %v603 = vunpack.c.h.b16 %v224
    %v604 = vunpack.c.l.b16 %v225
    %v605 = vunpack.c.h.b16 %v225
    %v606 = vunpack.c.l.b16 %v226
    %v607 = vunpack.c.h.b16 %v226
    %v608 = vunpack.c.l.b16 %v227
    %v609 = vunpack.c.h.b16 %v227
    %v610 = vunpack.c.l.b16 %v228
    %v611 = vunpack.c.h.b16 %v228
    %v612 = vunpack.c.l.b16 %v229
    %v613 = vunpack.c.h.b16 %v229
    %v614 = vunpack.c.l.b16 %v230
    %v615 = vunpack.c.h.b16 %v230
    %v616 = vunpack.c.l.b16 %v231
    %v617 = vunpack.c.h.b16 %v231
    %v618 = vunpack.c.l.b16 %v232
    %v619 = vunpack.c.h.b16 %v232
    %v620 = vunpack.c.l.b16 %v233
    %v621 = vunpack.c.h.b16 %v233
    %v622 = vunpack.c.l.b16 %v234
    %v623 = vunpack.c.h.b16 %v234
    %v624 = vunpack.c.l.b16 %v235
    %v625 = vunpack.c.h.b16 %v235
    %v626 = vunpack.c.l.b16 %v236
    %v627 = vunpack.c.h.b16 %v236
    %v628 = vunpack.c.l.b16 %v237
    %v629 = vunpack.c.h.b16 %v237
    %v630 = vunpack.c.l.b16 %v238
    %v631 = vunpack.c.h.b16 %v238
    %v632 = vunpack.c.l.b16 %v239
    %v633 = vunpack.c.h.b16 %v239
    %v634 = vunpack.c.l.b16 %v240
    %v635 = vunpack.c.h.b16 %v240
    %v636 = vunpack.c.l.b16 %v241
    %v637 = vunpack.c.h.b16 %v241
    %v638 = vunpack.c.l.b16 %v242
    %v639 = vunpack.c.h.b16 %v242
    %v640 = vunpack.c.l.b16 %v243
    %v641 = vunpack.c.h.b16 %v243
    %v642 = vunpack.c.l.b16 %v244
    %v643 = vunpack.c.h.b16 %v244
    %v644 = vunpack.c.l.b16 %v245
    %v645 = vunpack.c.h.b16 %v245
    %v646 = vunpack.c.l.b16 %v246
    %v647 = vunpack.c.h.b16 %v246
    %v648 = vunpack.c.l.b16 %v247
    %v649 = vunpack.c.h.b16 %v247
    %v650 = vunpack.c.l.b16 %v248
    %v651 = vunpack.c.h.b16 %v248
    %v652 = vunpack.c.l.b16 %v249
    %v653 = vunpack.c.h.b16 %v249
    %v654 = vunpack.c.l.b16 %v250
    %v655 = vunpack.c.h.b16 %v250
    %v656 = vunpack.c.l.b16 %v251
    %v657 = vunpack.c.h.b16 %v251
    %v658 = vpack.c.b16 %v406, %v402
    %v659 = vpack.c.b16 %v407, %v403
    %v660 = vpack.c.b16 %v408, %v404
    %v661 = vpack.c.b16 %v409, %v405
    %v662 = vpack.c.b16 %v414, %v410
    %v663 = vpack.c.b16 %v415, %v411
    %v664 = vpack.c.b16 %v416, %v412
    %v665 = vpack.c.b16 %v417, %v413
    %v666 = vpack.c.b16 %v422, %v418
    %v667 = vpack.c.b16 %v423, %v419
    %v668 = vpack.c.b16 %v424, %v420
    %v669 = vpack.c.b16 %v425, %v421
    %v670 = vpack.c.b16 %v430, %v426
    %v671 = vpack.c.b16 %v431, %v427
    %v672 = vpack.c.b16 %v432, %v428
    %v673 = vpack.c.b16 %v433, %v429
    %v674 = vpack.c.b16 %v438, %v434
    %v675 = vpack.c.b16 %v439, %v435
    %v676 = vpack.c.b16 %v440, %v436
    %v677 = vpack.c.b16 %v441, %v437
    %v678 = vpack.c.b16 %v446, %v442
    %v679 = vpack.c.b16 %v447, %v443
    %v680 = vpack.c.b16 %v448, %v444
    %v681 = vpack.c.b16 %v449, %v445
    %v682 = vpack.c.b16 %v454, %v450
    %v683 = vpack.c.b16 %v455, %v451
    %v684 = vpack.c.b16 %v456, %v452
    %v685 = vpack.c.b16 %v457, %v453
    %v686 = vpack.c.b16 %v462, %v458
    %v687 = vpack.c.b16 %v463, %v459
    %v688 = vpack.c.b16 %v464, %v460
    %v689 = vpack.c.b16 %v465, %v461
    %v690 = vpack.c.b16 %v470, %v466
    %v691 = vpack.c.b16 %v471, %v467
    %v692 = vpack.c.b16 %v472, %v468
    %v693 = vpack.c.b16 %v473, %v469
    %v694 = vpack.c.b16 %v478, %v474
    %v695 = vpack.c.b16 %v479, %v475
    %v696 = vpack.c.b16 %v480, %v476
    %v697 = vpack.c.b16 %v481, %v477
    %v698 = vpack.c.b16 %v486, %v482
    %v699 = vpack.c.b16 %v487, %v483
    %v700 = vpack.c.b16 %v488, %v484
    %v701 = vpack.c.b16 %v489, %v485
    %v702 = vpack.c.b16 %v494, %v490
    %v703 = vpack.c.b16 %v495, %v491
    %v704 = vpack.c.b16 %v496, %v492
    %v705 = vpack.c.b16 %v497, %v493
    %v706 = vpack.c.b16 %v502, %v498
    %v707 = vpack.c.b16 %v503, %v499
    %v708 = vpack.c.b16 %v504, %v500
    %v709 = vpack.c.b16 %v505, %v501
    %v710 = vpack.c.b16 %v510, %v506
    %v711 = vpack.c.b16 %v511, %v507
    %v712 = vpack.c.b16 %v512, %v508
    %v713 = vpack.c.b16 %v513, %v509
    %v714 = vpack.c.b16 %v518, %v514
    %v715 = vpack.c.b16 %v519, %v515
    %v716 = vpack.c.b16 %v520, %v516
    %v717 = vpack.c.b16 %v521, %v517
    %v718 = vpack.c.b16 %v526, %v522
    %v719 = vpack.c.b16 %v527, %v523
    %v720 = vpack.c.b16 %v528, %v524
    %v721 = vpack.c.b16 %v529, %v525
    %v722 = vpack.c.b16 %v534, %v530
    %v723 = vpack.c.b16 %v535, %v531
    %v724 = vpack.c.b16 %v536, %v532
    %v725 = vpack.c.b16 %v537, %v533
    %v726 = vpack.c.b16 %v542, %v538
    %v727 = vpack.c.b16 %v543, %v539
    %v728 = vpack.c.b16 %v544, %v540
    %v729 = vpack.c.b16 %v545, %v541
    %v730 = vpack.c.b16 %v550, %v546
    %v731 = vpack.c.b16 %v551, %v547
    %v732 = vpack.c.b16 %v552, %v548
    %v733 = vpack.c.b16 %v553, %v549
    %v734 = vpack.c.b16 %v558, %v554
    %v735 = vpack.c.b16 %v559, %v555
    %v736 = vpack.c.b16 %v560, %v556
    %v737 = vpack.c.b16 %v561, %v557
    %v738 = vpack.c.b16 %v566, %v562
    %v739 = vpack.c.b16 %v567, %v563
    %v740 = vpack.c.b16 %v568, %v564
    %v741 = vpack.c.b16 %v569, %v565
    %v742 = vpack.c.b16 %v574, %v570
    %v743 = vpack.c.b16 %v575, %v571
    %v744 = vpack.c.b16 %v576, %v572
    %v745 = vpack.c.b16 %v577, %v573
    %v746 = vpack.c.b16 %v582, %v578
    %v747 = vpack.c.b16 %v583, %v579
    %v748 = vpack.c.b16 %v584, %v580
    %v749 = vpack.c.b16 %v585, %v581
    %v750 = vpack.c.b16 %v590, %v586
    %v751 = vpack.c.b16 %v591, %v587
    %v752 = vpack.c.b16 %v592, %v588
    %v753 = vpack.c.b16 %v593, %v589
    %v754 = vpack.c.b16 %v598, %v594
    %v755 = vpack.c.b16 %v599, %v595
    %v756 = vpack.c.b16 %v600, %v596
    %v757 = vpack.c.b16 %v601, %v597
    %v758 = vpack.c.b16 %v606, %v602
    %v759 = vpack.c.b16 %v607, %v603
    %v760 = vpack.c.b16 %v608, %v604
    %v761 = vpack.c.b16 %v609, %v605
    %v762 = vpack.c.b16 %v614, %v610
    %v763 = vpack.c.b16 %v615, %v611
    %v764 = vpack.c.b16 %v616, %v612
    %v765 = vpack.c.b16 %v617, %v613
    %v766 = vpack.c.b16 %v622, %v618
    %v767 = vpack.c.b16 %v623, %v619
    %v768 = vpack.c.b16 %v624, %v620
    %v769 = vpack.c.b16 %v625, %v621
    %v770 = vpack.c.b16 %v630, %v626
    %v771 = vpack.c.b16 %v631, %v627
    %v772 = vpack.c.b16 %v632, %v628
    %v773 = vpack.c.b16 %v633, %v629
    %v774 = vpack.c.b16 %v638, %v634
    %v775 = vpack.c.b16 %v639, %v635
    %v776 = vpack.c.b16 %v640, %v636
    %v777 = vpack.c.b16 %v641, %v637
    %v778 = vpack.c.b16 %v646, %v642
    %v779 = vpack.c.b16 %v647, %v643
    %v780 = vpack.c.b16 %v648, %v644
    %v781 = vpack.c.b16 %v649, %v645
    %v782 = vpack.c.b16 %v654, %v650
    %v783 = vpack.c.b16 %v655, %v651
    %v784 = vpack.c.b16 %v656, %v652
    %v785 = vpack.c.b16 %v657, %v653
    %914 = vmatprep.subr.bf16.mxu0 %v659
    %915 = vmatpush1.bf16.msra.mxu0 %v658
    %916 = vmatprep.subr.bf16.mxu0 %v663
    %917 = vmatpush1.bf16.msra.mxu0 %v662
    %918 = vmatprep.subr.bf16.mxu0 %v667
    %919 = vmatpush1.bf16.msra.mxu0 %v666
    %920 = vmatprep.subr.bf16.mxu0 %v671
    %921 = vmatpush1.bf16.msra.mxu0 %v670
    %922 = vmatprep.subr.bf16.mxu0 %v675
    %923 = vmatpush1.bf16.msra.mxu0 %v674
    %924 = vmatprep.subr.bf16.mxu0 %v679
    %925 = vmatpush1.bf16.msra.mxu0 %v678
    %926 = vmatprep.subr.bf16.mxu0 %v683
    %927 = vmatpush1.bf16.msra.mxu0 %v682
    %928 = vmatprep.subr.bf16.mxu0 %v687
    %929 = vmatpush1.bf16.msra.mxu0 %v686
    %930 = vmatprep.subr.bf16.mxu0 %v691
    %931 = vmatpush1.bf16.msra.mxu0 %v690
    %932 = vmatprep.subr.bf16.mxu0 %v695
    %933 = vmatpush1.bf16.msra.mxu0 %v694
    %934 = vmatprep.subr.bf16.mxu0 %v699
    %935 = vmatpush1.bf16.msra.mxu0 %v698
    %936 = vmatprep.subr.bf16.mxu0 %v703
    %937 = vmatpush1.bf16.msra.mxu0 %v702
    %938 = vmatprep.subr.bf16.mxu0 %v707
    %939 = vmatpush1.bf16.msra.mxu0 %v706
    %940 = vmatprep.subr.bf16.mxu0 %v711
    %941 = vmatpush1.bf16.msra.mxu0 %v710
    %942 = vmatprep.subr.bf16.mxu0 %v715
    %943 = vmatpush1.bf16.msra.mxu0 %v714
    %944 = vmatprep.subr.bf16.mxu0 %v719
    %945 = vmatpush1.bf16.msra.mxu0 %v718
    %946 = vmatprep.mubr.bf16.mxu0 %v121
    %947 = vmatmul.mubr.bf16.gmra.mrb[0].mxu0 %v120
    %v948 = vpop.f32.mrb[0].mxu0
    %v949 = vadd.f32 %v257, %v948
    %v950 = vpop.f32.mrb[0].mxu0
    %v951 = vadd.f32 %v261, %v950
    %v952 = vpop.f32.mrb[0].mxu0
    %v953 = vpop.f32.mrb[0].mxu0
    %954 = vdwg.mxu0
    %955 = vmatprep.subr.bf16.mxu0 %v723
    %956 = vmatpush1.bf16.msra.mxu0 %v722
    %957 = vmatprep.subr.bf16.mxu0 %v727
    %958 = vmatpush1.bf16.msra.mxu0 %v726
    %959 = vmatprep.subr.bf16.mxu0 %v731
    %960 = vmatpush1.bf16.msra.mxu0 %v730
    %961 = vmatprep.subr.bf16.mxu0 %v735
    %962 = vmatpush1.bf16.msra.mxu0 %v734
    %963 = vmatprep.subr.bf16.mxu0 %v739
    %964 = vmatpush1.bf16.msra.mxu0 %v738
    %965 = vmatprep.subr.bf16.mxu0 %v743
    %966 = vmatpush1.bf16.msra.mxu0 %v742
    %967 = vmatprep.subr.bf16.mxu0 %v747
    %968 = vmatpush1.bf16.msra.mxu0 %v746
    %969 = vmatprep.subr.bf16.mxu0 %v751
    %970 = vmatpush1.bf16.msra.mxu0 %v750
    %971 = vmatprep.subr.bf16.mxu0 %v755
    %972 = vmatpush1.bf16.msra.mxu0 %v754
    %973 = vmatprep.subr.bf16.mxu0 %v759
    %974 = vmatpush1.bf16.msra.mxu0 %v758
    %975 = vmatprep.subr.bf16.mxu0 %v763
    %976 = vmatpush1.bf16.msra.mxu0 %v762
    %977 = vmatprep.subr.bf16.mxu0 %v767
    %978 = vmatpush1.bf16.msra.mxu0 %v766
    %979 = vmatprep.subr.bf16.mxu0 %v771
    %980 = vmatpush1.bf16.msra.mxu0 %v770
    %981 = vmatprep.subr.bf16.mxu0 %v775
    %982 = vmatpush1.bf16.msra.mxu0 %v774
    %983 = vmatprep.subr.bf16.mxu0 %v779
    %984 = vmatpush1.bf16.msra.mxu0 %v778
    %985 = vmatprep.subr.bf16.mxu0 %v783
    %986 = vmatpush1.bf16.msra.mxu0 %v782
    %987 = vmatprep.mubr.bf16.mxu0 %v123
    %988 = vmatmul.mubr.bf16.gmra.mrb[0].mxu0 %v122
    %v989 = vpop.f32.mrb[0].mxu0
    %v990 = vadd.f32 %v949, %v989
    %v991 = vpop.f32.mrb[0].mxu0
    %v992 = vadd.f32 %v951, %v991
    %v993 = vpop.f32.mrb[0].mxu0
    %v994 = vpop.f32.mrb[0].mxu0
    %995 = vdwg.mxu0
    %996 = vmatprep.subr.bf16.mxu0 %v661
    %997 = vmatpush1.bf16.msra.mxu0 %v660
    %998 = vmatprep.subr.bf16.mxu0 %v665
    %999 = vmatpush1.bf16.msra.mxu0 %v664
    %1000 = vmatprep.subr.bf16.mxu0 %v669
    %1001 = vmatpush1.bf16.msra.mxu0 %v668
    %1002 = vmatprep.subr.bf16.mxu0 %v673
    %1003 = vmatpush1.bf16.msra.mxu0 %v672
    %1004 = vmatprep.subr.bf16.mxu0 %v677
    %1005 = vmatpush1.bf16.msra.mxu0 %v676
    %1006 = vmatprep.subr.bf16.mxu0 %v681
    %1007 = vmatpush1.bf16.msra.mxu0 %v680
    %1008 = vmatprep.subr.bf16.mxu0 %v685
    %1009 = vmatpush1.bf16.msra.mxu0 %v684
    %1010 = vmatprep.subr.bf16.mxu0 %v689
    %1011 = vmatpush1.bf16.msra.mxu0 %v688
    %1012 = vmatprep.subr.bf16.mxu0 %v693
    %1013 = vmatpush1.bf16.msra.mxu0 %v692
    %1014 = vmatprep.subr.bf16.mxu0 %v697
    %1015 = vmatpush1.bf16.msra.mxu0 %v696
    %1016 = vmatprep.subr.bf16.mxu0 %v701
    %1017 = vmatpush1.bf16.msra.mxu0 %v700
    %1018 = vmatprep.subr.bf16.mxu0 %v705
    %1019 = vmatpush1.bf16.msra.mxu0 %v704
    %1020 = vmatprep.subr.bf16.mxu0 %v709
    %1021 = vmatpush1.bf16.msra.mxu0 %v708
    %1022 = vmatprep.subr.bf16.mxu0 %v713
    %1023 = vmatpush1.bf16.msra.mxu0 %v712
    %1024 = vmatprep.subr.bf16.mxu0 %v717
    %1025 = vmatpush1.bf16.msra.mxu0 %v716
    %1026 = vmatprep.subr.bf16.mxu0 %v721
    %1027 = vmatpush1.bf16.msra.mxu0 %v720
    %1028 = vmatprep.mubr.bf16.mxu0 %v121
    %1029 = vmatmul.mubr.bf16.gmra.mrb[0].mxu0 %v120
    %v1030 = vpop.f32.mrb[0].mxu0
    %v1031 = vadd.f32 %v265, %v1030
    %v1032 = vpop.f32.mrb[0].mxu0
    %v1033 = vadd.f32 %v269, %v1032
    %v1034 = vpop.f32.mrb[0].mxu0
    %v1035 = vpop.f32.mrb[0].mxu0
    %1036 = vdwg.mxu0
    %1037 = vmatprep.subr.bf16.mxu0 %v725
    %1038 = vmatpush1.bf16.msra.mxu0 %v724
    %1039 = vmatprep.subr.bf16.mxu0 %v729
    %1040 = vmatpush1.bf16.msra.mxu0 %v728
    %1041 = vmatprep.subr.bf16.mxu0 %v733
    %1042 = vmatpush1.bf16.msra.mxu0 %v732
    %1043 = vmatprep.subr.bf16.mxu0 %v737
    %1044 = vmatpush1.bf16.msra.mxu0 %v736
    %1045 = vmatprep.subr.bf16.mxu0 %v741
    %1046 = vmatpush1.bf16.msra.mxu0 %v740
    %1047 = vmatprep.subr.bf16.mxu0 %v745
    %1048 = vmatpush1.bf16.msra.mxu0 %v744
    %1049 = vmatprep.subr.bf16.mxu0 %v749
    %1050 = vmatpush1.bf16.msra.mxu0 %v748
    %1051 = vmatprep.subr.bf16.mxu0 %v753
    %1052 = vmatpush1.bf16.msra.mxu0 %v752
    %1053 = vmatprep.subr.bf16.mxu0 %v757
    %1054 = vmatpush1.bf16.msra.mxu0 %v756
    %1055 = vmatprep.subr.bf16.mxu0 %v761
    %1056 = vmatpush1.bf16.msra.mxu0 %v760
    %1057 = vmatprep.subr.bf16.mxu0 %v765
    %1058 = vmatpush1.bf16.msra.mxu0 %v764
    %1059 = vmatprep.subr.bf16.mxu0 %v769
    %1060 = vmatpush1.bf16.msra.mxu0 %v768
    %1061 = vmatprep.subr.bf16.mxu0 %v773
    %1062 = vmatpush1.bf16.msra.mxu0 %v772
    %1063 = vmatprep.subr.bf16.mxu0 %v777
    %1064 = vmatpush1.bf16.msra.mxu0 %v776
    %1065 = vmatprep.subr.bf16.mxu0 %v781
    %1066 = vmatpush1.bf16.msra.mxu0 %v780
    %1067 = vmatprep.subr.bf16.mxu0 %v785
    %1068 = vmatpush1.bf16.msra.mxu0 %v784
    %1069 = vmatprep.mubr.bf16.mxu0 %v123
    %1070 = vmatmul.mubr.bf16.gmra.mrb[0].mxu0 %v122
    %v1071 = vpop.f32.mrb[0].mxu0
    %v1072 = vadd.f32 %v1031, %v1071
    %v1073 = vpop.f32.mrb[0].mxu0
    %v1074 = vadd.f32 %v1033, %v1073
    %v1075 = vpop.f32.mrb[0].mxu0
    %v1076 = vpop.f32.mrb[0].mxu0
    %1077 = vdwg.mxu0
    %v1078 = vmax.f32 %v990, 0.0
    %v1079 = vmax.f32 %v992, 0.0
    %v1080 = vmax.f32 %v1072, 0.0
    %v1081 = vmax.f32 %v1074, 0.0
    %v1082 = vpack.c.bf16 %v1078, %v1078
    %v1083 = vpack.c.bf16 %v1079, %v1079
    %v1084 = vpack.c.bf16 %v1080, %v1080
    %v1085 = vpack.c.bf16 %v1081, %v1081
    %v1086 = vld [vmem:[#allocation5] sm:$0xff]
    %v1087 = vld [vmem:[#allocation5 + $0x8] sm:$0xff]
    %v1088 = vld [vmem:[#allocation5 + $0x10] sm:$0xff]
    %v1089 = vld [vmem:[#allocation5 + $0x18] sm:$0xff]
    %v1090 = vld [vmem:[#allocation5 + $0x20] sm:$0xff]
    %v1091 = vld [vmem:[#allocation5 + $0x28] sm:$0xff]
    %v1092 = vld [vmem:[#allocation5 + $0x30] sm:$0xff]
    %v1093 = vld [vmem:[#allocation5 + $0x38] sm:$0xff]
    %v1094 = vld [vmem:[#allocation5 + $0x40] sm:$0xff]
    %v1095 = vld [vmem:[#allocation5 + $0x48] sm:$0xff]
    %v1096 = vld [vmem:[#allocation5 + $0x50] sm:$0xff]
    %v1097 = vld [vmem:[#allocation5 + $0x58] sm:$0xff]
    %v1098 = vld [vmem:[#allocation5 + $0x60] sm:$0xff]
    %v1099 = vld [vmem:[#allocation5 + $0x68] sm:$0xff]
    %v1100 = vld [vmem:[#allocation5 + $0x70] sm:$0xff]
    %v1101 = vld [vmem:[#allocation5 + $0x78] sm:$0xff]
    %v1102 = vld [vmem:[#allocation5 + $0x80] sm:$0xff]
    %v1103 = vld [vmem:[#allocation5 + $0x88] sm:$0xff]
    %v1104 = vld [vmem:[#allocation5 + $0x90] sm:$0xff]
    %v1105 = vld [vmem:[#allocation5 + $0x98] sm:$0xff]
    %v1106 = vld [vmem:[#allocation5 + $0xa0] sm:$0xff]
    %v1107 = vld [vmem:[#allocation5 + $0xa8] sm:$0xff]
    %v1108 = vld [vmem:[#allocation5 + $0xb0] sm:$0xff]
    %v1109 = vld [vmem:[#allocation5 + $0xb8] sm:$0xff]
    %v1110 = vld [vmem:[#allocation5 + $0xc0] sm:$0xff]
    %v1111 = vld [vmem:[#allocation5 + $0xc8] sm:$0xff]
    %v1112 = vld [vmem:[#allocation5 + $0xd0] sm:$0xff]
    %v1113 = vld [vmem:[#allocation5 + $0xd8] sm:$0xff]
    %v1114 = vld [vmem:[#allocation5 + $0xe0] sm:$0xff]
    %v1115 = vld [vmem:[#allocation5 + $0xe8] sm:$0xff]
    %v1116 = vld [vmem:[#allocation5 + $0xf0] sm:$0xff]
    %v1117 = vld [vmem:[#allocation5 + $0xf8] sm:$0xff]
    %v1118 = vld [vmem:[#allocation5 + $0x100] sm:$0xff]
    %v1119 = vld [vmem:[#allocation5 + $0x108] sm:$0xff]
    %v1120 = vld [vmem:[#allocation5 + $0x110] sm:$0xff]
    %v1121 = vld [vmem:[#allocation5 + $0x118] sm:$0xff]
    %v1122 = vld [vmem:[#allocation5 + $0x120] sm:$0xff]
    %v1123 = vld [vmem:[#allocation5 + $0x128] sm:$0xff]
    %v1124 = vld [vmem:[#allocation5 + $0x130] sm:$0xff]
    %v1125 = vld [vmem:[#allocation5 + $0x138] sm:$0xff]
    %v1126 = vld [vmem:[#allocation5 + $0x140] sm:$0xff]
    %v1127 = vld [vmem:[#allocation5 + $0x148] sm:$0xff]
    %v1128 = vld [vmem:[#allocation5 + $0x150] sm:$0xff]
    %v1129 = vld [vmem:[#allocation5 + $0x158] sm:$0xff]
    %v1130 = vld [vmem:[#allocation5 + $0x160] sm:$0xff]
    %v1131 = vld [vmem:[#allocation5 + $0x168] sm:$0xff]
    %v1132 = vld [vmem:[#allocation5 + $0x170] sm:$0xff]
    %v1133 = vld [vmem:[#allocation5 + $0x178] sm:$0xff]
    %v1134 = vld [vmem:[#allocation5 + $0x180] sm:$0xff]
    %v1135 = vld [vmem:[#allocation5 + $0x188] sm:$0xff]
    %v1136 = vld [vmem:[#allocation5 + $0x190] sm:$0xff]
    %v1137 = vld [vmem:[#allocation5 + $0x198] sm:$0xff]
    %v1138 = vld [vmem:[#allocation5 + $0x1a0] sm:$0xff]
    %v1139 = vld [vmem:[#allocation5 + $0x1a8] sm:$0xff]
    %v1140 = vld [vmem:[#allocation5 + $0x1b0] sm:$0xff]
    %v1141 = vld [vmem:[#allocation5 + $0x1b8] sm:$0xff]
    %v1142 = vld [vmem:[#allocation5 + $0x1c0] sm:$0xff]
    %v1143 = vld [vmem:[#allocation5 + $0x1c8] sm:$0xff]
    %v1144 = vld [vmem:[#allocation5 + $0x1d0] sm:$0xff]
    %v1145 = vld [vmem:[#allocation5 + $0x1d8] sm:$0xff]
    %v1146 = vld [vmem:[#allocation5 + $0x1e0] sm:$0xff]
    %v1147 = vld [vmem:[#allocation5 + $0x1e8] sm:$0xff]
    %v1148 = vld [vmem:[#allocation5 + $0x1f0] sm:$0xff]
    %v1149 = vld [vmem:[#allocation5 + $0x1f8] sm:$0xff]
    %v1150 = vld [vmem:[%s4] sm:$0x3]
    %v1152 = vlaneseq
    %v1153 = vshrl.u32 %v1152, 7
    %v1154 = vsub.s32 0, %v1153
    %v1155 = vrot.slane %v1150, %v1154
    %v1156 = vlaneseq
    %v1157 = vshrl.u32 %v1156, 7
    %v1158 = vsub.s32 1, %v1157
    %v1159 = vrot.slane %v1150, %v1158
    %v1226 = vunpack.c.l.b16 %v1086
    %v1227 = vunpack.c.h.b16 %v1086
    %v1228 = vunpack.c.l.b16 %v1087
    %v1229 = vunpack.c.h.b16 %v1087
    %v1230 = vunpack.c.l.b16 %v1088
    %v1231 = vunpack.c.h.b16 %v1088
    %v1232 = vunpack.c.l.b16 %v1089
    %v1233 = vunpack.c.h.b16 %v1089
    %v1234 = vunpack.c.l.b16 %v1090
    %v1235 = vunpack.c.h.b16 %v1090
    %v1236 = vunpack.c.l.b16 %v1091
    %v1237 = vunpack.c.h.b16 %v1091
    %v1238 = vunpack.c.l.b16 %v1092
    %v1239 = vunpack.c.h.b16 %v1092
    %v1240 = vunpack.c.l.b16 %v1093
    %v1241 = vunpack.c.h.b16 %v1093
    %v1242 = vunpack.c.l.b16 %v1094
    %v1243 = vunpack.c.h.b16 %v1094
    %v1244 = vunpack.c.l.b16 %v1095
    %v1245 = vunpack.c.h.b16 %v1095
    %v1246 = vunpack.c.l.b16 %v1096
    %v1247 = vunpack.c.h.b16 %v1096
    %v1248 = vunpack.c.l.b16 %v1097
    %v1249 = vunpack.c.h.b16 %v1097
    %v1250 = vunpack.c.l.b16 %v1098
    %v1251 = vunpack.c.h.b16 %v1098
    %v1252 = vunpack.c.l.b16 %v1099
    %v1253 = vunpack.c.h.b16 %v1099
    %v1254 = vunpack.c.l.b16 %v1100
    %v1255 = vunpack.c.h.b16 %v1100
    %v1256 = vunpack.c.l.b16 %v1101
    %v1257 = vunpack.c.h.b16 %v1101
    %v1258 = vunpack.c.l.b16 %v1102
    %v1259 = vunpack.c.h.b16 %v1102
    %v1260 = vunpack.c.l.b16 %v1103
    %v1261 = vunpack.c.h.b16 %v1103
    %v1262 = vunpack.c.l.b16 %v1104
    %v1263 = vunpack.c.h.b16 %v1104
    %v1264 = vunpack.c.l.b16 %v1105
    %v1265 = vunpack.c.h.b16 %v1105
    %v1266 = vunpack.c.l.b16 %v1106
    %v1267 = vunpack.c.h.b16 %v1106
    %v1268 = vunpack.c.l.b16 %v1107
    %v1269 = vunpack.c.h.b16 %v1107
    %v1270 = vunpack.c.l.b16 %v1108
    %v1271 = vunpack.c.h.b16 %v1108
    %v1272 = vunpack.c.l.b16 %v1109
    %v1273 = vunpack.c.h.b16 %v1109
    %v1274 = vunpack.c.l.b16 %v1110
    %v1275 = vunpack.c.h.b16 %v1110
    %v1276 = vunpack.c.l.b16 %v1111
    %v1277 = vunpack.c.h.b16 %v1111
    %v1278 = vunpack.c.l.b16 %v1112
    %v1279 = vunpack.c.h.b16 %v1112
    %v1280 = vunpack.c.l.b16 %v1113
    %v1281 = vunpack.c.h.b16 %v1113
    %v1282 = vunpack.c.l.b16 %v1114
    %v1283 = vunpack.c.h.b16 %v1114
    %v1284 = vunpack.c.l.b16 %v1115
    %v1285 = vunpack.c.h.b16 %v1115
    %v1286 = vunpack.c.l.b16 %v1116
    %v1287 = vunpack.c.h.b16 %v1116
    %v1288 = vunpack.c.l.b16 %v1117
    %v1289 = vunpack.c.h.b16 %v1117
    %v1290 = vunpack.c.l.b16 %v1118
    %v1291 = vunpack.c.h.b16 %v1118
    %v1292 = vunpack.c.l.b16 %v1119
    %v1293 = vunpack.c.h.b16 %v1119
    %v1294 = vunpack.c.l.b16 %v1120
    %v1295 = vunpack.c.h.b16 %v1120
    %v1296 = vunpack.c.l.b16 %v1121
    %v1297 = vunpack.c.h.b16 %v1121
    %v1298 = vunpack.c.l.b16 %v1122
    %v1299 = vunpack.c.h.b16 %v1122
    %v1300 = vunpack.c.l.b16 %v1123
    %v1301 = vunpack.c.h.b16 %v1123
    %v1302 = vunpack.c.l.b16 %v1124
    %v1303 = vunpack.c.h.b16 %v1124
    %v1304 = vunpack.c.l.b16 %v1125
    %v1305 = vunpack.c.h.b16 %v1125
    %v1306 = vunpack.c.l.b16 %v1126
    %v1307 = vunpack.c.h.b16 %v1126
    %v1308 = vunpack.c.l.b16 %v1127
    %v1309 = vunpack.c.h.b16 %v1127
    %v1310 = vunpack.c.l.b16 %v1128
    %v1311 = vunpack.c.h.b16 %v1128
    %v1312 = vunpack.c.l.b16 %v1129
    %v1313 = vunpack.c.h.b16 %v1129
    %v1314 = vunpack.c.l.b16 %v1130
    %v1315 = vunpack.c.h.b16 %v1130
    %v1316 = vunpack.c.l.b16 %v1131
    %v1317 = vunpack.c.h.b16 %v1131
    %v1318 = vunpack.c.l.b16 %v1132
    %v1319 = vunpack.c.h.b16 %v1132
    %v1320 = vunpack.c.l.b16 %v1133
    %v1321 = vunpack.c.h.b16 %v1133
    %v1322 = vunpack.c.l.b16 %v1134
    %v1323 = vunpack.c.h.b16 %v1134
    %v1324 = vunpack.c.l.b16 %v1135
    %v1325 = vunpack.c.h.b16 %v1135
    %v1326 = vunpack.c.l.b16 %v1136
    %v1327 = vunpack.c.h.b16 %v1136
    %v1328 = vunpack.c.l.b16 %v1137
    %v1329 = vunpack.c.h.b16 %v1137
    %v1330 = vunpack.c.l.b16 %v1138
    %v1331 = vunpack.c.h.b16 %v1138
    %v1332 = vunpack.c.l.b16 %v1139
    %v1333 = vunpack.c.h.b16 %v1139
    %v1334 = vunpack.c.l.b16 %v1140
    %v1335 = vunpack.c.h.b16 %v1140
    %v1336 = vunpack.c.l.b16 %v1141
    %v1337 = vunpack.c.h.b16 %v1141
    %v1338 = vunpack.c.l.b16 %v1142
    %v1339 = vunpack.c.h.b16 %v1142
    %v1340 = vunpack.c.l.b16 %v1143
    %v1341 = vunpack.c.h.b16 %v1143
    %v1342 = vunpack.c.l.b16 %v1144
    %v1343 = vunpack.c.h.b16 %v1144
    %v1344 = vunpack.c.l.b16 %v1145
    %v1345 = vunpack.c.h.b16 %v1145
    %v1346 = vunpack.c.l.b16 %v1146
    %v1347 = vunpack.c.h.b16 %v1146
    %v1348 = vunpack.c.l.b16 %v1147
    %v1349 = vunpack.c.h.b16 %v1147
    %v1350 = vunpack.c.l.b16 %v1148
    %v1351 = vunpack.c.h.b16 %v1148
    %v1352 = vunpack.c.l.b16 %v1149
    %v1353 = vunpack.c.h.b16 %v1149
    %v1354 = vpack.c.b16 %v1228, %v1226
    %v1355 = vpack.c.b16 %v1229, %v1227
    %v1356 = vpack.c.b16 %v1232, %v1230
    %v1357 = vpack.c.b16 %v1233, %v1231
    %v1358 = vpack.c.b16 %v1236, %v1234
    %v1359 = vpack.c.b16 %v1237, %v1235
    %v1360 = vpack.c.b16 %v1240, %v1238
    %v1361 = vpack.c.b16 %v1241, %v1239
    %v1362 = vpack.c.b16 %v1244, %v1242
    %v1363 = vpack.c.b16 %v1245, %v1243
    %v1364 = vpack.c.b16 %v1248, %v1246
    %v1365 = vpack.c.b16 %v1249, %v1247
    %v1366 = vpack.c.b16 %v1252, %v1250
    %v1367 = vpack.c.b16 %v1253, %v1251
    %v1368 = vpack.c.b16 %v1256, %v1254
    %v1369 = vpack.c.b16 %v1257, %v1255
    %v1370 = vpack.c.b16 %v1260, %v1258
    %v1371 = vpack.c.b16 %v1261, %v1259
    %v1372 = vpack.c.b16 %v1264, %v1262
    %v1373 = vpack.c.b16 %v1265, %v1263
    %v1374 = vpack.c.b16 %v1268, %v1266
    %v1375 = vpack.c.b16 %v1269, %v1267
    %v1376 = vpack.c.b16 %v1272, %v1270
    %v1377 = vpack.c.b16 %v1273, %v1271
    %v1378 = vpack.c.b16 %v1276, %v1274
    %v1379 = vpack.c.b16 %v1277, %v1275
    %v1380 = vpack.c.b16 %v1280, %v1278
    %v1381 = vpack.c.b16 %v1281, %v1279
    %v1382 = vpack.c.b16 %v1284, %v1282
    %v1383 = vpack.c.b16 %v1285, %v1283
    %v1384 = vpack.c.b16 %v1288, %v1286
    %v1385 = vpack.c.b16 %v1289, %v1287
    %v1386 = vpack.c.b16 %v1292, %v1290
    %v1387 = vpack.c.b16 %v1293, %v1291
    %v1388 = vpack.c.b16 %v1296, %v1294
    %v1389 = vpack.c.b16 %v1297, %v1295
    %v1390 = vpack.c.b16 %v1300, %v1298
    %v1391 = vpack.c.b16 %v1301, %v1299
    %v1392 = vpack.c.b16 %v1304, %v1302
    %v1393 = vpack.c.b16 %v1305, %v1303
    %v1394 = vpack.c.b16 %v1308, %v1306
    %v1395 = vpack.c.b16 %v1309, %v1307
    %v1396 = vpack.c.b16 %v1312, %v1310
    %v1397 = vpack.c.b16 %v1313, %v1311
    %v1398 = vpack.c.b16 %v1316, %v1314
    %v1399 = vpack.c.b16 %v1317, %v1315
    %v1400 = vpack.c.b16 %v1320, %v1318
    %v1401 = vpack.c.b16 %v1321, %v1319
    %v1402 = vpack.c.b16 %v1324, %v1322
    %v1403 = vpack.c.b16 %v1325, %v1323
    %v1404 = vpack.c.b16 %v1328, %v1326
    %v1405 = vpack.c.b16 %v1329, %v1327
    %v1406 = vpack.c.b16 %v1332, %v1330
    %v1407 = vpack.c.b16 %v1333, %v1331
    %v1408 = vpack.c.b16 %v1336, %v1334
    %v1409 = vpack.c.b16 %v1337, %v1335
    %v1410 = vpack.c.b16 %v1340, %v1338
    %v1411 = vpack.c.b16 %v1341, %v1339
    %v1412 = vpack.c.b16 %v1344, %v1342
    %v1413 = vpack.c.b16 %v1345, %v1343
    %v1414 = vpack.c.b16 %v1348, %v1346
    %v1415 = vpack.c.b16 %v1349, %v1347
    %v1416 = vpack.c.b16 %v1352, %v1350
    %v1417 = vpack.c.b16 %v1353, %v1351
    %1482 = vmatprep.subr.bf16.mxu0 %v1355
    %1483 = vmatpush1.bf16.msra.mxu0 %v1354
    %1484 = vmatprep.subr.bf16.mxu0 %v1357
    %1485 = vmatpush1.bf16.msra.mxu0 %v1356
    %1486 = vmatprep.subr.bf16.mxu0 %v1359
    %1487 = vmatpush1.bf16.msra.mxu0 %v1358
    %1488 = vmatprep.subr.bf16.mxu0 %v1361
    %1489 = vmatpush1.bf16.msra.mxu0 %v1360
    %1490 = vmatprep.subr.bf16.mxu0 %v1363
    %1491 = vmatpush1.bf16.msra.mxu0 %v1362
    %1492 = vmatprep.subr.bf16.mxu0 %v1365
    %1493 = vmatpush1.bf16.msra.mxu0 %v1364
    %1494 = vmatprep.subr.bf16.mxu0 %v1367
    %1495 = vmatpush1.bf16.msra.mxu0 %v1366
    %1496 = vmatprep.subr.bf16.mxu0 %v1369
    %1497 = vmatpush1.bf16.msra.mxu0 %v1368
    %1498 = vmatprep.subr.bf16.mxu0 %v1371
    %1499 = vmatpush1.bf16.msra.mxu0 %v1370
    %1500 = vmatprep.subr.bf16.mxu0 %v1373
    %1501 = vmatpush1.bf16.msra.mxu0 %v1372
    %1502 = vmatprep.subr.bf16.mxu0 %v1375
    %1503 = vmatpush1.bf16.msra.mxu0 %v1374
    %1504 = vmatprep.subr.bf16.mxu0 %v1377
    %1505 = vmatpush1.bf16.msra.mxu0 %v1376
    %1506 = vmatprep.subr.bf16.mxu0 %v1379
    %1507 = vmatpush1.bf16.msra.mxu0 %v1378
    %1508 = vmatprep.subr.bf16.mxu0 %v1381
    %1509 = vmatpush1.bf16.msra.mxu0 %v1380
    %1510 = vmatprep.subr.bf16.mxu0 %v1383
    %1511 = vmatpush1.bf16.msra.mxu0 %v1382
    %1512 = vmatprep.subr.bf16.mxu0 %v1385
    %1513 = vmatpush1.bf16.msra.mxu0 %v1384
    %1514 = vmatprep.mubr.bf16.mxu0 %v1083
    %1515 = vmatmul.mubr.bf16.gmra.mrb[0].mxu0 %v1082
    %v1516 = vpop.f32.mrb[0].mxu0
    %v1517 = vadd.f32 %v1155, %v1516
    %v1518 = vpop.f32.mrb[0].mxu0
    %v1519 = vadd.f32 %v1159, %v1518
    %v1520 = vpop.f32.mrb[0].mxu0
    %v1521 = vpop.f32.mrb[0].mxu0
    %1522 = vdwg.mxu0
    %1523 = vmatprep.subr.bf16.mxu0 %v1387
    %1524 = vmatpush1.bf16.msra.mxu0 %v1386
    %1525 = vmatprep.subr.bf16.mxu0 %v1389
    %1526 = vmatpush1.bf16.msra.mxu0 %v1388
    %1527 = vmatprep.subr.bf16.mxu0 %v1391
    %1528 = vmatpush1.bf16.msra.mxu0 %v1390
    %1529 = vmatprep.subr.bf16.mxu0 %v1393
    %1530 = vmatpush1.bf16.msra.mxu0 %v1392
    %1531 = vmatprep.subr.bf16.mxu0 %v1395
    %1532 = vmatpush1.bf16.msra.mxu0 %v1394
    %1533 = vmatprep.subr.bf16.mxu0 %v1397
    %1534 = vmatpush1.bf16.msra.mxu0 %v1396
    %1535 = vmatprep.subr.bf16.mxu0 %v1399
    %1536 = vmatpush1.bf16.msra.mxu0 %v1398
    %1537 = vmatprep.subr.bf16.mxu0 %v1401
    %1538 = vmatpush1.bf16.msra.mxu0 %v1400
    %1539 = vmatprep.subr.bf16.mxu0 %v1403
    %1540 = vmatpush1.bf16.msra.mxu0 %v1402
    %1541 = vmatprep.subr.bf16.mxu0 %v1405
    %1542 = vmatpush1.bf16.msra.mxu0 %v1404
    %1543 = vmatprep.subr.bf16.mxu0 %v1407
    %1544 = vmatpush1.bf16.msra.mxu0 %v1406
    %1545 = vmatprep.subr.bf16.mxu0 %v1409
    %1546 = vmatpush1.bf16.msra.mxu0 %v1408
    %1547 = vmatprep.subr.bf16.mxu0 %v1411
    %1548 = vmatpush1.bf16.msra.mxu0 %v1410
    %1549 = vmatprep.subr.bf16.mxu0 %v1413
    %1550 = vmatpush1.bf16.msra.mxu0 %v1412
    %1551 = vmatprep.subr.bf16.mxu0 %v1415
    %1552 = vmatpush1.bf16.msra.mxu0 %v1414
    %1553 = vmatprep.subr.bf16.mxu0 %v1417
    %1554 = vmatpush1.bf16.msra.mxu0 %v1416
    %1555 = vmatprep.mubr.bf16.mxu0 %v1085
    %1556 = vmatmul.mubr.bf16.gmra.mrb[0].mxu0 %v1084
    %v1557 = vpop.f32.mrb[0].mxu0
    %v1558 = vadd.f32 %v1517, %v1557
    %v1559 = vpop.f32.mrb[0].mxu0
    %v1560 = vadd.f32 %v1519, %v1559
    %v1561 = vpop.f32.mrb[0].mxu0
    %v1562 = vpop.f32.mrb[0].mxu0
    %1563 = vdwg.mxu0
    %v1564 = vmax.f32 %v1558, 0.0
    %v1565 = vmax.f32 %v1560, 0.0
    %v1566 = vpack.c.bf16 %v1564, %v1564
    %v1567 = vpack.c.bf16 %v1565, %v1565
    %v1568 = vld [vmem:[%s5] sm:$0xf]
    %v1569 = vld [vmem:[%s5 + $0x4] sm:$0xf]
    %v1570 = vld [vmem:[%s5 + $0x8] sm:$0xf]
    %v1571 = vld [vmem:[%s5 + $0xc] sm:$0xf]
    %v1572 = vld [vmem:[%s5 + $0x10] sm:$0xf]
    %v1573 = vld [vmem:[%s5 + $0x14] sm:$0xf]
    %v1574 = vld [vmem:[%s5 + $0x18] sm:$0xf]
    %v1575 = vld [vmem:[%s5 + $0x1c] sm:$0xf]
    %v1576 = vld [vmem:[%s5 + $0x20] sm:$0xf]
    %v1577 = vld [vmem:[%s5 + $0x24] sm:$0xf]
    %v1578 = vld [vmem:[%s5 + $0x28] sm:$0xf]
    %v1579 = vld [vmem:[%s5 + $0x2c] sm:$0xf]
    %v1580 = vld [vmem:[%s5 + $0x30] sm:$0xf]
    %v1581 = vld [vmem:[%s5 + $0x34] sm:$0xf]
    %v1582 = vld [vmem:[%s5 + $0x38] sm:$0xf]
    %v1583 = vld [vmem:[%s5 + $0x3c] sm:$0xf]
    %v1584 = vld [vmem:[%s5 + $0x40] sm:$0xf]
    %v1585 = vld [vmem:[%s5 + $0x44] sm:$0xf]
    %v1586 = vld [vmem:[%s5 + $0x48] sm:$0xf]
    %v1587 = vld [vmem:[%s5 + $0x4c] sm:$0xf]
    %v1588 = vld [vmem:[%s5 + $0x50] sm:$0xf]
    %v1589 = vld [vmem:[%s5 + $0x54] sm:$0xf]
    %v1590 = vld [vmem:[%s5 + $0x58] sm:$0xf]
    %v1591 = vld [vmem:[%s5 + $0x5c] sm:$0xf]
    %v1592 = vld [vmem:[%s5 + $0x60] sm:$0xf]
    %v1593 = vld [vmem:[%s5 + $0x64] sm:$0xf]
    %v1594 = vld [vmem:[%s5 + $0x68] sm:$0xf]
    %v1595 = vld [vmem:[%s5 + $0x6c] sm:$0xf]
    %v1596 = vld [vmem:[%s5 + $0x70] sm:$0xf]
    %v1597 = vld [vmem:[%s5 + $0x74] sm:$0xf]
    %v1598 = vld [vmem:[%s5 + $0x78] sm:$0xf]
    %v1599 = vld [vmem:[%s5 + $0x7c] sm:$0xf]
    %v1600 = vld [vmem:[%s6] sm:$0x1]
    %v1602 = vlaneseq
    %v1603 = vshrl.u32 %v1602, 7
    %v1604 = vsub.s32 0, %v1603
    %v1605 = vrot.slane %v1600, %v1604
    %v1639 = vunpack.c.l.b16 %v1568
    %v1640 = vunpack.c.l.b16 %v1569
    %v1641 = vunpack.c.l.b16 %v1570
    %v1642 = vunpack.c.l.b16 %v1571
    %v1643 = vunpack.c.l.b16 %v1572
    %v1644 = vunpack.c.l.b16 %v1573
    %v1645 = vunpack.c.l.b16 %v1574
    %v1646 = vunpack.c.l.b16 %v1575
    %v1647 = vunpack.c.l.b16 %v1576
    %v1648 = vunpack.c.l.b16 %v1577
    %v1649 = vunpack.c.l.b16 %v1578
    %v1650 = vunpack.c.l.b16 %v1579
    %v1651 = vunpack.c.l.b16 %v1580
    %v1652 = vunpack.c.l.b16 %v1581
    %v1653 = vunpack.c.l.b16 %v1582
    %v1654 = vunpack.c.l.b16 %v1583
    %v1655 = vunpack.c.l.b16 %v1584
    %v1656 = vunpack.c.l.b16 %v1585
    %v1657 = vunpack.c.l.b16 %v1586
    %v1658 = vunpack.c.l.b16 %v1587
    %v1659 = vunpack.c.l.b16 %v1588
    %v1660 = vunpack.c.l.b16 %v1589
    %v1661 = vunpack.c.l.b16 %v1590
    %v1662 = vunpack.c.l.b16 %v1591
    %v1663 = vunpack.c.l.b16 %v1592
    %v1664 = vunpack.c.l.b16 %v1593
    %v1665 = vunpack.c.l.b16 %v1594
    %v1666 = vunpack.c.l.b16 %v1595
    %v1667 = vunpack.c.l.b16 %v1596
    %v1668 = vunpack.c.l.b16 %v1597
    %v1669 = vunpack.c.l.b16 %v1598
    %v1670 = vunpack.c.l.b16 %v1599
    %v1671 = vpack.c.b16 %v1640, %v1639
    %v1672 = vpack.c.b16 %v1642, %v1641
    %v1673 = vpack.c.b16 %v1644, %v1643
    %v1674 = vpack.c.b16 %v1646, %v1645
    %v1675 = vpack.c.b16 %v1648, %v1647
    %v1676 = vpack.c.b16 %v1650, %v1649
    %v1677 = vpack.c.b16 %v1652, %v1651
    %v1678 = vpack.c.b16 %v1654, %v1653
    %v1679 = vpack.c.b16 %v1656, %v1655
    %v1680 = vpack.c.b16 %v1658, %v1657
    %v1681 = vpack.c.b16 %v1660, %v1659
    %v1682 = vpack.c.b16 %v1662, %v1661
    %v1683 = vpack.c.b16 %v1664, %v1663
    %v1684 = vpack.c.b16 %v1666, %v1665
    %v1685 = vpack.c.b16 %v1668, %v1667
    %v1686 = vpack.c.b16 %v1670, %v1669
    %1703 = vmatprep.subr.bf16.mxu0 0
    %1704 = vmatpush1.bf16.msra.mxu0 %v1671
    %1705 = vmatprep.subr.bf16.mxu0 0
    %1706 = vmatpush1.bf16.msra.mxu0 %v1672
    %1707 = vmatprep.subr.bf16.mxu0 0
    %1708 = vmatpush1.bf16.msra.mxu0 %v1673
    %1709 = vmatprep.subr.bf16.mxu0 0
    %1710 = vmatpush1.bf16.msra.mxu0 %v1674
    %1711 = vmatprep.subr.bf16.mxu0 0
    %1712 = vmatpush1.bf16.msra.mxu0 %v1675
    %1713 = vmatprep.subr.bf16.mxu0 0
    %1714 = vmatpush1.bf16.msra.mxu0 %v1676
    %1715 = vmatprep.subr.bf16.mxu0 0
    %1716 = vmatpush1.bf16.msra.mxu0 %v1677
    %1717 = vmatprep.subr.bf16.mxu0 0
    %1718 = vmatpush1.bf16.msra.mxu0 %v1678
    %1719 = vmatprep.subr.bf16.mxu0 0
    %1720 = vmatpush1.bf16.msra.mxu0 %v1679
    %1721 = vmatprep.subr.bf16.mxu0 0
    %1722 = vmatpush1.bf16.msra.mxu0 %v1680
    %1723 = vmatprep.subr.bf16.mxu0 0
    %1724 = vmatpush1.bf16.msra.mxu0 %v1681
    %1725 = vmatprep.subr.bf16.mxu0 0
    %1726 = vmatpush1.bf16.msra.mxu0 %v1682
    %1727 = vmatprep.subr.bf16.mxu0 0
    %1728 = vmatpush1.bf16.msra.mxu0 %v1683
    %1729 = vmatprep.subr.bf16.mxu0 0
    %1730 = vmatpush1.bf16.msra.mxu0 %v1684
    %1731 = vmatprep.subr.bf16.mxu0 0
    %1732 = vmatpush1.bf16.msra.mxu0 %v1685
    %1733 = vmatprep.subr.bf16.mxu0 0
    %1734 = vmatpush1.bf16.msra.mxu0 %v1686
    %1735 = vmatprep.mubr.bf16.mxu0 %v1567
    %1736 = vmatmul.mubr.bf16.gmra.mrb[0].mxu0 %v1566
    %v1737 = vpop.f32.mrb[0].mxu0
    %v1738 = vadd.f32 %v1605, %v1737
    %v1739 = vpop.f32.mrb[0].mxu0
    %v1740 = vpop.f32.mrb[0].mxu0
    %v1741 = vpop.f32.mrb[0].mxu0
    %1742 = vdwg.mxu0
    %v1743 = vmax.f32 %v1738, 0.0
    %v1744 = vpack.c.bf16 %v1743, %v1743
    %v1745 = vld [vmem:[%s7] sm:$0xf]
    %v1746 = vld [vmem:[%s7 + $0x4] sm:$0xf]
    %v1747 = vld [vmem:[%s7 + $0x8] sm:$0xf]
    %v1748 = vld [vmem:[%s7 + $0xc] sm:$0xf]
    %v1749 = vld [vmem:[%s7 + $0x10] sm:$0xf]
    %v1750 = vld [vmem:[%s7 + $0x14] sm:$0xf]
    %v1751 = vld [vmem:[%s7 + $0x18] sm:$0xf]
    %v1752 = vld [vmem:[%s7 + $0x1c] sm:$0xf]
    %v1753 = vld [vmem:[%s8] sm:$0x1]
    %v1755 = vlaneseq
    %v1756 = vshrl.u32 %v1755, 7
    %v1757 = vsub.s32 0, %v1756
    %v1758 = vrot.slane %v1753, %v1757
    %v1768 = vunpack.c.l.b16 %v1745
    %v1769 = vunpack.c.l.b16 %v1746
    %v1770 = vunpack.c.l.b16 %v1747
    %v1771 = vunpack.c.l.b16 %v1748
    %v1772 = vunpack.c.l.b16 %v1749
    %v1773 = vunpack.c.l.b16 %v1750
    %v1774 = vunpack.c.l.b16 %v1751
    %v1775 = vunpack.c.l.b16 %v1752
    %v1776 = vpack.c.b16 %v1769, %v1768
    %v1777 = vpack.c.b16 %v1771, %v1770
    %v1778 = vpack.c.b16 %v1773, %v1772
    %v1779 = vpack.c.b16 %v1775, %v1774
    %vm1784 = vcmask 523264
    %v1786 = vsel %vm1784, %v1744, 0
    %1788 = vmatprep.subr.bf16.mxu0 0
    %1789 = vmatpush1.bf16.msra.mxu0 %v1776
    %1790 = vmatprep.subr.bf16.mxu0 0
    %1791 = vmatpush1.bf16.msra.mxu0 %v1777
    %1792 = vmatprep.subr.bf16.mxu0 0
    %1793 = vmatpush1.bf16.msra.mxu0 %v1778
    %1794 = vmatprep.subr.bf16.mxu0 0
    %1795 = vmatpush1.bf16.msra.mxu0 %v1779
    %1796 = vmatprep.subr.bf16.mxu0 0
    %1797 = vmatpush1.bf16.msra.mxu0 0
    %1798 = vmatprep.subr.bf16.mxu0 0
    %1799 = vmatpush1.bf16.msra.mxu0 0
    %1800 = vmatprep.subr.bf16.mxu0 0
    %1801 = vmatpush1.bf16.msra.mxu0 0
    %1802 = vmatprep.subr.bf16.mxu0 0
    %1803 = vmatpush1.bf16.msra.mxu0 0
    %1804 = vmatprep.subr.bf16.mxu0 0
    %1805 = vmatpush1.bf16.msra.mxu0 0
    %1806 = vmatprep.subr.bf16.mxu0 0
    %1807 = vmatpush1.bf16.msra.mxu0 0
    %1808 = vmatprep.subr.bf16.mxu0 0
    %1809 = vmatpush1.bf16.msra.mxu0 0
    %1810 = vmatprep.subr.bf16.mxu0 0
    %1811 = vmatpush1.bf16.msra.mxu0 0
    %1812 = vmatprep.subr.bf16.mxu0 0
    %1813 = vmatpush1.bf16.msra.mxu0 0
    %1814 = vmatprep.subr.bf16.mxu0 0
    %1815 = vmatpush1.bf16.msra.mxu0 0
    %1816 = vmatprep.subr.bf16.mxu0 0
    %1817 = vmatpush1.bf16.msra.mxu0 0
    %1818 = vmatprep.subr.bf16.mxu0 0
    %1819 = vmatpush1.bf16.msra.mxu0 0
    %1820 = vmatprep.mubr.bf16.mxu0 0
    %1821 = vmatmul.mubr.bf16.gmra.mrb[0].mxu0 %v1786
    %v1822 = vpop.f32.mrb[0].mxu0
    %v1823 = vadd.f32 %v1758, %v1822
    %v1824 = vpop.f32.mrb[0].mxu0
    %v1825 = vpop.f32.mrb[0].mxu0
    %v1826 = vpop.f32.mrb[0].mxu0
    %1827 = vdwg.mxu0
    %1828 = vst [vmem:[#allocation11] sm:$0xff] %v1823
    %v1829 = vpack.c.bf16 %v1823, %v1823
    %v1830 = vld [vmem:[%s9] sm:$0xf]
    %v1831 = vld [vmem:[%s9 + $0x4] sm:$0xf]
    %v1832 = vld [vmem:[%s9 + $0x8] sm:$0xf]
    %v1833 = vld [vmem:[%s9 + $0xc] sm:$0xf]
    %v1834 = vld [vmem:[%s9 + $0x10] sm:$0xf]
    %v1835 = vld [vmem:[%s9 + $0x14] sm:$0xf]
    %v1836 = vld [vmem:[%s9 + $0x18] sm:$0xf]
    %v1837 = vld [vmem:[%s9 + $0x1c] sm:$0xf]
    %v1838 = vld [vmem:[%s9 + $0x20] sm:$0xf]
    %v1839 = vld [vmem:[%s9 + $0x24] sm:$0xf]
    %v1840 = vld [vmem:[%s9 + $0x28] sm:$0xf]
    %v1841 = vld [vmem:[%s9 + $0x2c] sm:$0xf]
    %v1842 = vld [vmem:[%s9 + $0x30] sm:$0xf]
    %v1843 = vld [vmem:[%s9 + $0x34] sm:$0xf]
    %v1844 = vld [vmem:[%s9 + $0x38] sm:$0xf]
    %v1845 = vld [vmem:[%s9 + $0x3c] sm:$0xf]
    %v1846 = vld [vmem:[%s10] sm:$0x1]
    %v1848 = vlaneseq
    %v1849 = vshrl.u32 %v1848, 7
    %v1850 = vsub.s32 0, %v1849
    %v1851 = vrot.slane %v1846, %v1850
    %v1869 = vunpack.c.l.b16 %v1830
    %v1870 = vunpack.c.l.b16 %v1831
    %v1871 = vunpack.c.l.b16 %v1832
    %v1872 = vunpack.c.l.b16 %v1833
    %v1873 = vunpack.c.l.b16 %v1834
    %v1874 = vunpack.c.l.b16 %v1835
    %v1875 = vunpack.c.l.b16 %v1836
    %v1876 = vunpack.c.l.b16 %v1837
    %v1877 = vunpack.c.l.b16 %v1838
    %v1878 = vunpack.c.l.b16 %v1839
    %v1879 = vunpack.c.l.b16 %v1840
    %v1880 = vunpack.c.l.b16 %v1841
    %v1881 = vunpack.c.l.b16 %v1842
    %v1882 = vunpack.c.l.b16 %v1843
    %v1883 = vunpack.c.l.b16 %v1844
    %v1884 = vunpack.c.l.b16 %v1845
    %v1885 = vpack.c.b16 %v1870, %v1869
    %v1886 = vpack.c.b16 %v1872, %v1871
    %v1887 = vpack.c.b16 %v1874, %v1873
    %v1888 = vpack.c.b16 %v1876, %v1875
    %v1889 = vpack.c.b16 %v1878, %v1877
    %v1890 = vpack.c.b16 %v1880, %v1879
    %v1891 = vpack.c.b16 %v1882, %v1881
    %v1892 = vpack.c.b16 %v1884, %v1883
    %1901 = vmatprep.subr.bf16.mxu0 0
    %1902 = vmatpush1.bf16.msra.mxu0 %v1885
    %1903 = vmatprep.subr.bf16.mxu0 0
    %1904 = vmatpush1.bf16.msra.mxu0 %v1886
    %1905 = vmatprep.subr.bf16.mxu0 0
    %1906 = vmatpush1.bf16.msra.mxu0 %v1887
    %1907 = vmatprep.subr.bf16.mxu0 0
    %1908 = vmatpush1.bf16.msra.mxu0 %v1888
    %1909 = vmatprep.subr.bf16.mxu0 0
    %1910 = vmatpush1.bf16.msra.mxu0 %v1889
    %1911 = vmatprep.subr.bf16.mxu0 0
    %1912 = vmatpush1.bf16.msra.mxu0 %v1890
    %1913 = vmatprep.subr.bf16.mxu0 0
    %1914 = vmatpush1.bf16.msra.mxu0 %v1891
    %1915 = vmatprep.subr.bf16.mxu0 0
    %1916 = vmatpush1.bf16.msra.mxu0 %v1892
    %1917 = vmatprep.subr.bf16.mxu0 0
    %1918 = vmatpush1.bf16.msra.mxu0 0
    %1919 = vmatprep.subr.bf16.mxu0 0
    %1920 = vmatpush1.bf16.msra.mxu0 0
    %1921 = vmatprep.subr.bf16.mxu0 0
    %1922 = vmatpush1.bf16.msra.mxu0 0
    %1923 = vmatprep.subr.bf16.mxu0 0
    %1924 = vmatpush1.bf16.msra.mxu0 0
    %1925 = vmatprep.subr.bf16.mxu0 0
    %1926 = vmatpush1.bf16.msra.mxu0 0
    %1927 = vmatprep.subr.bf16.mxu0 0
    %1928 = vmatpush1.bf16.msra.mxu0 0
    %1929 = vmatprep.subr.bf16.mxu0 0
    %1930 = vmatpush1.bf16.msra.mxu0 0
    %1931 = vmatprep.subr.bf16.mxu0 0
    %1932 = vmatpush1.bf16.msra.mxu0 0
    %1933 = vmatprep.mubr.bf16.mxu0 0
    %1934 = vmatmul.mubr.bf16.gmra.mrb[0].mxu0 %v1829
    %v1935 = vpop.f32.mrb[0].mxu0
    %v1936 = vadd.f32 %v1851, %v1935
    %v1937 = vpop.f32.mrb[0].mxu0
    %v1938 = vpop.f32.mrb[0].mxu0
    %v1939 = vpop.f32.mrb[0].mxu0
    %1940 = vdwg.mxu0
    %v1941 = vmax.f32 %v1936, 0.0
    %v1942 = vpack.c.bf16 %v1941, %v1941
    %v1943 = vld [vmem:[%s11] sm:$0xff]
    %v1944 = vld [vmem:[%s11 + $0x8] sm:$0xff]
    %v1945 = vld [vmem:[%s11 + $0x10] sm:$0xff]
    %v1946 = vld [vmem:[%s11 + $0x18] sm:$0xff]
    %v1947 = vld [vmem:[%s11 + $0x20] sm:$0xff]
    %v1948 = vld [vmem:[%s11 + $0x28] sm:$0xff]
    %v1949 = vld [vmem:[%s11 + $0x30] sm:$0xff]
    %v1950 = vld [vmem:[%s11 + $0x38] sm:$0xff]
    %v1951 = vld [vmem:[%s12] sm:$0x3]
    %v1953 = vlaneseq
    %v1954 = vshrl.u32 %v1953, 7
    %v1955 = vsub.s32 0, %v1954
    %v1956 = vrot.slane %v1951, %v1955
    %v1957 = vlaneseq
    %v1958 = vshrl.u32 %v1957, 7
    %v1959 = vsub.s32 1, %v1958
    %v1960 = vrot.slane %v1951, %v1959
    %v1971 = vunpack.c.l.b16 %v1943
    %v1972 = vunpack.c.h.b16 %v1943
    %v1973 = vunpack.c.l.b16 %v1944
    %v1974 = vunpack.c.h.b16 %v1944
    %v1975 = vunpack.c.l.b16 %v1945
    %v1976 = vunpack.c.h.b16 %v1945
    %v1977 = vunpack.c.l.b16 %v1946
    %v1978 = vunpack.c.h.b16 %v1946
    %v1979 = vunpack.c.l.b16 %v1947
    %v1980 = vunpack.c.h.b16 %v1947
    %v1981 = vunpack.c.l.b16 %v1948
    %v1982 = vunpack.c.h.b16 %v1948
    %v1983 = vunpack.c.l.b16 %v1949
    %v1984 = vunpack.c.h.b16 %v1949
    %v1985 = vunpack.c.l.b16 %v1950
    %v1986 = vunpack.c.h.b16 %v1950
    %v1987 = vpack.c.b16 %v1973, %v1971
    %v1988 = vpack.c.b16 %v1974, %v1972
    %v1989 = vpack.c.b16 %v1977, %v1975
    %v1990 = vpack.c.b16 %v1978, %v1976
    %v1991 = vpack.c.b16 %v1981, %v1979
    %v1992 = vpack.c.b16 %v1982, %v1980
    %v1993 = vpack.c.b16 %v1985, %v1983
    %v1994 = vpack.c.b16 %v1986, %v1984
    %v2004 = vsel %vm1784, %v1942, 0
    %2006 = vmatprep.subr.bf16.mxu0 %v1988
    %2007 = vmatpush1.bf16.msra.mxu0 %v1987
    %2008 = vmatprep.subr.bf16.mxu0 %v1990
    %2009 = vmatpush1.bf16.msra.mxu0 %v1989
    %2010 = vmatprep.subr.bf16.mxu0 %v1992
    %2011 = vmatpush1.bf16.msra.mxu0 %v1991
    %2012 = vmatprep.subr.bf16.mxu0 %v1994
    %2013 = vmatpush1.bf16.msra.mxu0 %v1993
    %2014 = vmatprep.subr.bf16.mxu0 0
    %2015 = vmatpush1.bf16.msra.mxu0 0
    %2016 = vmatprep.subr.bf16.mxu0 0
    %2017 = vmatpush1.bf16.msra.mxu0 0
    %2018 = vmatprep.subr.bf16.mxu0 0
    %2019 = vmatpush1.bf16.msra.mxu0 0
    %2020 = vmatprep.subr.bf16.mxu0 0
    %2021 = vmatpush1.bf16.msra.mxu0 0
    %2022 = vmatprep.subr.bf16.mxu0 0
    %2023 = vmatpush1.bf16.msra.mxu0 0
    %2024 = vmatprep.subr.bf16.mxu0 0
    %2025 = vmatpush1.bf16.msra.mxu0 0
    %2026 = vmatprep.subr.bf16.mxu0 0
    %2027 = vmatpush1.bf16.msra.mxu0 0
    %2028 = vmatprep.subr.bf16.mxu0 0
    %2029 = vmatpush1.bf16.msra.mxu0 0
    %2030 = vmatprep.subr.bf16.mxu0 0
    %2031 = vmatpush1.bf16.msra.mxu0 0
    %2032 = vmatprep.subr.bf16.mxu0 0
    %2033 = vmatpush1.bf16.msra.mxu0 0
    %2034 = vmatprep.subr.bf16.mxu0 0
    %2035 = vmatpush1.bf16.msra.mxu0 0
    %2036 = vmatprep.subr.bf16.mxu0 0
    %2037 = vmatpush1.bf16.msra.mxu0 0
    %2038 = vmatprep.mubr.bf16.mxu0 0
    %2039 = vmatmul.mubr.bf16.gmra.mrb[0].mxu0 %v2004
    %v2040 = vpop.f32.mrb[0].mxu0
    %v2041 = vadd.f32 %v1956, %v2040
    %v2042 = vpop.f32.mrb[0].mxu0
    %v2043 = vadd.f32 %v1960, %v2042
    %v2044 = vpop.f32.mrb[0].mxu0
    %v2045 = vpop.f32.mrb[0].mxu0
    %2046 = vdwg.mxu0
    %v2047 = vmax.f32 %v2041, 0.0
    %v2048 = vmax.f32 %v2043, 0.0
    %v2049 = vpack.c.bf16 %v2047, %v2047
    %v2050 = vpack.c.bf16 %v2048, %v2048
    %v2051 = vld [vmem:[#allocation7] sm:$0xff]
    %v2052 = vld [vmem:[#allocation7 + $0x8] sm:$0xff]
    %v2053 = vld [vmem:[#allocation7 + $0x10] sm:$0xff]
    %v2054 = vld [vmem:[#allocation7 + $0x18] sm:$0xff]
    %v2055 = vld [vmem:[#allocation7 + $0x20] sm:$0xff]
    %v2056 = vld [vmem:[#allocation7 + $0x28] sm:$0xff]
    %v2057 = vld [vmem:[#allocation7 + $0x30] sm:$0xff]
    %v2058 = vld [vmem:[#allocation7 + $0x38] sm:$0xff]
    %v2059 = vld [vmem:[#allocation7 + $0x40] sm:$0xff]
    %v2060 = vld [vmem:[#allocation7 + $0x48] sm:$0xff]
    %v2061 = vld [vmem:[#allocation7 + $0x50] sm:$0xff]
    %v2062 = vld [vmem:[#allocation7 + $0x58] sm:$0xff]
    %v2063 = vld [vmem:[#allocation7 + $0x60] sm:$0xff]
    %v2064 = vld [vmem:[#allocation7 + $0x68] sm:$0xff]
    %v2065 = vld [vmem:[#allocation7 + $0x70] sm:$0xff]
    %v2066 = vld [vmem:[#allocation7 + $0x78] sm:$0xff]
    %v2067 = vld [vmem:[#allocation7 + $0x80] sm:$0xff]
    %v2068 = vld [vmem:[#allocation7 + $0x88] sm:$0xff]
    %v2069 = vld [vmem:[#allocation7 + $0x90] sm:$0xff]
    %v2070 = vld [vmem:[#allocation7 + $0x98] sm:$0xff]
    %v2071 = vld [vmem:[#allocation7 + $0xa0] sm:$0xff]
    %v2072 = vld [vmem:[#allocation7 + $0xa8] sm:$0xff]
    %v2073 = vld [vmem:[#allocation7 + $0xb0] sm:$0xff]
    %v2074 = vld [vmem:[#allocation7 + $0xb8] sm:$0xff]
    %v2075 = vld [vmem:[#allocation7 + $0xc0] sm:$0xff]
    %v2076 = vld [vmem:[#allocation7 + $0xc8] sm:$0xff]
    %v2077 = vld [vmem:[#allocation7 + $0xd0] sm:$0xff]
    %v2078 = vld [vmem:[#allocation7 + $0xd8] sm:$0xff]
    %v2079 = vld [vmem:[#allocation7 + $0xe0] sm:$0xff]
    %v2080 = vld [vmem:[#allocation7 + $0xe8] sm:$0xff]
    %v2081 = vld [vmem:[#allocation7 + $0xf0] sm:$0xff]
    %v2082 = vld [vmem:[#allocation7 + $0xf8] sm:$0xff]
    %v2083 = vld [vmem:[#allocation7 + $0x100] sm:$0xff]
    %v2084 = vld [vmem:[#allocation7 + $0x108] sm:$0xff]
    %v2085 = vld [vmem:[#allocation7 + $0x110] sm:$0xff]
    %v2086 = vld [vmem:[#allocation7 + $0x118] sm:$0xff]
    %v2087 = vld [vmem:[#allocation7 + $0x120] sm:$0xff]
    %v2088 = vld [vmem:[#allocation7 + $0x128] sm:$0xff]
    %v2089 = vld [vmem:[#allocation7 + $0x130] sm:$0xff]
    %v2090 = vld [vmem:[#allocation7 + $0x138] sm:$0xff]
    %v2091 = vld [vmem:[#allocation7 + $0x140] sm:$0xff]
    %v2092 = vld [vmem:[#allocation7 + $0x148] sm:$0xff]
    %v2093 = vld [vmem:[#allocation7 + $0x150] sm:$0xff]
    %v2094 = vld [vmem:[#allocation7 + $0x158] sm:$0xff]
    %v2095 = vld [vmem:[#allocation7 + $0x160] sm:$0xff]
    %v2096 = vld [vmem:[#allocation7 + $0x168] sm:$0xff]
    %v2097 = vld [vmem:[#allocation7 + $0x170] sm:$0xff]
    %v2098 = vld [vmem:[#allocation7 + $0x178] sm:$0xff]
    %v2099 = vld [vmem:[#allocation7 + $0x180] sm:$0xff]
    %v2100 = vld [vmem:[#allocation7 + $0x188] sm:$0xff]
    %v2101 = vld [vmem:[#allocation7 + $0x190] sm:$0xff]
    %v2102 = vld [vmem:[#allocation7 + $0x198] sm:$0xff]
    %v2103 = vld [vmem:[#allocation7 + $0x1a0] sm:$0xff]
    %v2104 = vld [vmem:[#allocation7 + $0x1a8] sm:$0xff]
    %v2105 = vld [vmem:[#allocation7 + $0x1b0] sm:$0xff]
    %v2106 = vld [vmem:[#allocation7 + $0x1b8] sm:$0xff]
    %v2107 = vld [vmem:[#allocation7 + $0x1c0] sm:$0xff]
    %v2108 = vld [vmem:[#allocation7 + $0x1c8] sm:$0xff]
    %v2109 = vld [vmem:[#allocation7 + $0x1d0] sm:$0xff]
    %v2110 = vld [vmem:[#allocation7 + $0x1d8] sm:$0xff]
    %v2111 = vld [vmem:[#allocation7 + $0x1e0] sm:$0xff]
    %v2112 = vld [vmem:[#allocation7 + $0x1e8] sm:$0xff]
    %v2113 = vld [vmem:[#allocation7 + $0x1f0] sm:$0xff]
    %v2114 = vld [vmem:[#allocation7 + $0x1f8] sm:$0xff]
    %v2115 = vld [vmem:[%s14] sm:$0xf]
    %v2117 = vlaneseq
    %v2118 = vshrl.u32 %v2117, 7
    %v2119 = vsub.s32 0, %v2118
    %v2120 = vrot.slane %v2115, %v2119
    %v2121 = vlaneseq
    %v2122 = vshrl.u32 %v2121, 7
    %v2123 = vsub.s32 1, %v2122
    %v2124 = vrot.slane %v2115, %v2123
    %v2125 = vlaneseq
    %v2126 = vshrl.u32 %v2125, 7
    %v2127 = vsub.s32 2, %v2126
    %v2128 = vrot.slane %v2115, %v2127
    %v2129 = vlaneseq
    %v2130 = vshrl.u32 %v2129, 7
    %v2131 = vsub.s32 3, %v2130
    %v2132 = vrot.slane %v2115, %v2131
    %v2201 = vunpack.c.l.b16 %v2051
    %v2202 = vunpack.c.h.b16 %v2051
    %v2203 = vunpack.c.l.b16 %v2052
    %v2204 = vunpack.c.h.b16 %v2052
    %v2205 = vunpack.c.l.b16 %v2053
    %v2206 = vunpack.c.h.b16 %v2053
    %v2207 = vunpack.c.l.b16 %v2054
    %v2208 = vunpack.c.h.b16 %v2054
    %v2209 = vunpack.c.l.b16 %v2055
    %v2210 = vunpack.c.h.b16 %v2055
    %v2211 = vunpack.c.l.b16 %v2056
    %v2212 = vunpack.c.h.b16 %v2056
    %v2213 = vunpack.c.l.b16 %v2057
    %v2214 = vunpack.c.h.b16 %v2057
    %v2215 = vunpack.c.l.b16 %v2058
    %v2216 = vunpack.c.h.b16 %v2058
    %v2217 = vunpack.c.l.b16 %v2059
    %v2218 = vunpack.c.h.b16 %v2059
    %v2219 = vunpack.c.l.b16 %v2060
    %v2220 = vunpack.c.h.b16 %v2060
    %v2221 = vunpack.c.l.b16 %v2061
    %v2222 = vunpack.c.h.b16 %v2061
    %v2223 = vunpack.c.l.b16 %v2062
    %v2224 = vunpack.c.h.b16 %v2062
    %v2225 = vunpack.c.l.b16 %v2063
    %v2226 = vunpack.c.h.b16 %v2063
    %v2227 = vunpack.c.l.b16 %v2064
    %v2228 = vunpack.c.h.b16 %v2064
    %v2229 = vunpack.c.l.b16 %v2065
    %v2230 = vunpack.c.h.b16 %v2065
    %v2231 = vunpack.c.l.b16 %v2066
    %v2232 = vunpack.c.h.b16 %v2066
    %v2233 = vunpack.c.l.b16 %v2067
    %v2234 = vunpack.c.h.b16 %v2067
    %v2235 = vunpack.c.l.b16 %v2068
    %v2236 = vunpack.c.h.b16 %v2068
    %v2237 = vunpack.c.l.b16 %v2069
    %v2238 = vunpack.c.h.b16 %v2069
    %v2239 = vunpack.c.l.b16 %v2070
    %v2240 = vunpack.c.h.b16 %v2070
    %v2241 = vunpack.c.l.b16 %v2071
    %v2242 = vunpack.c.h.b16 %v2071
    %v2243 = vunpack.c.l.b16 %v2072
    %v2244 = vunpack.c.h.b16 %v2072
    %v2245 = vunpack.c.l.b16 %v2073
    %v2246 = vunpack.c.h.b16 %v2073
    %v2247 = vunpack.c.l.b16 %v2074
    %v2248 = vunpack.c.h.b16 %v2074
    %v2249 = vunpack.c.l.b16 %v2075
    %v2250 = vunpack.c.h.b16 %v2075
    %v2251 = vunpack.c.l.b16 %v2076
    %v2252 = vunpack.c.h.b16 %v2076
    %v2253 = vunpack.c.l.b16 %v2077
    %v2254 = vunpack.c.h.b16 %v2077
    %v2255 = vunpack.c.l.b16 %v2078
    %v2256 = vunpack.c.h.b16 %v2078
    %v2257 = vunpack.c.l.b16 %v2079
    %v2258 = vunpack.c.h.b16 %v2079
    %v2259 = vunpack.c.l.b16 %v2080
    %v2260 = vunpack.c.h.b16 %v2080
    %v2261 = vunpack.c.l.b16 %v2081
    %v2262 = vunpack.c.h.b16 %v2081
    %v2263 = vunpack.c.l.b16 %v2082
    %v2264 = vunpack.c.h.b16 %v2082
    %v2265 = vunpack.c.l.b16 %v2083
    %v2266 = vunpack.c.h.b16 %v2083
    %v2267 = vunpack.c.l.b16 %v2084
    %v2268 = vunpack.c.h.b16 %v2084
    %v2269 = vunpack.c.l.b16 %v2085
    %v2270 = vunpack.c.h.b16 %v2085
    %v2271 = vunpack.c.l.b16 %v2086
    %v2272 = vunpack.c.h.b16 %v2086
    %v2273 = vunpack.c.l.b16 %v2087
    %v2274 = vunpack.c.h.b16 %v2087
    %v2275 = vunpack.c.l.b16 %v2088
    %v2276 = vunpack.c.h.b16 %v2088
    %v2277 = vunpack.c.l.b16 %v2089
    %v2278 = vunpack.c.h.b16 %v2089
    %v2279 = vunpack.c.l.b16 %v2090
    %v2280 = vunpack.c.h.b16 %v2090
    %v2281 = vunpack.c.l.b16 %v2091
    %v2282 = vunpack.c.h.b16 %v2091
    %v2283 = vunpack.c.l.b16 %v2092
    %v2284 = vunpack.c.h.b16 %v2092
    %v2285 = vunpack.c.l.b16 %v2093
    %v2286 = vunpack.c.h.b16 %v2093
    %v2287 = vunpack.c.l.b16 %v2094
    %v2288 = vunpack.c.h.b16 %v2094
    %v2289 = vunpack.c.l.b16 %v2095
    %v2290 = vunpack.c.h.b16 %v2095
    %v2291 = vunpack.c.l.b16 %v2096
    %v2292 = vunpack.c.h.b16 %v2096
    %v2293 = vunpack.c.l.b16 %v2097
    %v2294 = vunpack.c.h.b16 %v2097
    %v2295 = vunpack.c.l.b16 %v2098
    %v2296 = vunpack.c.h.b16 %v2098
    %v2297 = vunpack.c.l.b16 %v2099
    %v2298 = vunpack.c.h.b16 %v2099
    %v2299 = vunpack.c.l.b16 %v2100
    %v2300 = vunpack.c.h.b16 %v2100
    %v2301 = vunpack.c.l.b16 %v2101
    %v2302 = vunpack.c.h.b16 %v2101
    %v2303 = vunpack.c.l.b16 %v2102
    %v2304 = vunpack.c.h.b16 %v2102
    %v2305 = vunpack.c.l.b16 %v2103
    %v2306 = vunpack.c.h.b16 %v2103
    %v2307 = vunpack.c.l.b16 %v2104
    %v2308 = vunpack.c.h.b16 %v2104
    %v2309 = vunpack.c.l.b16 %v2105
    %v2310 = vunpack.c.h.b16 %v2105
    %v2311 = vunpack.c.l.b16 %v2106
    %v2312 = vunpack.c.h.b16 %v2106
    %v2313 = vunpack.c.l.b16 %v2107
    %v2314 = vunpack.c.h.b16 %v2107
    %v2315 = vunpack.c.l.b16 %v2108
    %v2316 = vunpack.c.h.b16 %v2108
    %v2317 = vunpack.c.l.b16 %v2109
    %v2318 = vunpack.c.h.b16 %v2109
    %v2319 = vunpack.c.l.b16 %v2110
    %v2320 = vunpack.c.h.b16 %v2110
    %v2321 = vunpack.c.l.b16 %v2111
    %v2322 = vunpack.c.h.b16 %v2111
    %v2323 = vunpack.c.l.b16 %v2112
    %v2324 = vunpack.c.h.b16 %v2112
    %v2325 = vunpack.c.l.b16 %v2113
    %v2326 = vunpack.c.h.b16 %v2113
    %v2327 = vunpack.c.l.b16 %v2114
    %v2328 = vunpack.c.h.b16 %v2114
    %v2329 = vpack.c.b16 %v2205, %v2201
    %v2330 = vpack.c.b16 %v2206, %v2202
    %v2331 = vpack.c.b16 %v2207, %v2203
    %v2332 = vpack.c.b16 %v2208, %v2204
    %v2333 = vpack.c.b16 %v2213, %v2209
    %v2334 = vpack.c.b16 %v2214, %v2210
    %v2335 = vpack.c.b16 %v2215, %v2211
    %v2336 = vpack.c.b16 %v2216, %v2212
    %v2337 = vpack.c.b16 %v2221, %v2217
    %v2338 = vpack.c.b16 %v2222, %v2218
    %v2339 = vpack.c.b16 %v2223, %v2219
    %v2340 = vpack.c.b16 %v2224, %v2220
    %v2341 = vpack.c.b16 %v2229, %v2225
    %v2342 = vpack.c.b16 %v2230, %v2226
    %v2343 = vpack.c.b16 %v2231, %v2227
    %v2344 = vpack.c.b16 %v2232, %v2228
    %v2345 = vpack.c.b16 %v2237, %v2233
    %v2346 = vpack.c.b16 %v2238, %v2234
    %v2347 = vpack.c.b16 %v2239, %v2235
    %v2348 = vpack.c.b16 %v2240, %v2236
    %v2349 = vpack.c.b16 %v2245, %v2241
    %v2350 = vpack.c.b16 %v2246, %v2242
    %v2351 = vpack.c.b16 %v2247, %v2243
    %v2352 = vpack.c.b16 %v2248, %v2244
    %v2353 = vpack.c.b16 %v2253, %v2249
    %v2354 = vpack.c.b16 %v2254, %v2250
    %v2355 = vpack.c.b16 %v2255, %v2251
    %v2356 = vpack.c.b16 %v2256, %v2252
    %v2357 = vpack.c.b16 %v2261, %v2257
    %v2358 = vpack.c.b16 %v2262, %v2258
    %v2359 = vpack.c.b16 %v2263, %v2259
    %v2360 = vpack.c.b16 %v2264, %v2260
    %v2361 = vpack.c.b16 %v2269, %v2265
    %v2362 = vpack.c.b16 %v2270, %v2266
    %v2363 = vpack.c.b16 %v2271, %v2267
    %v2364 = vpack.c.b16 %v2272, %v2268
    %v2365 = vpack.c.b16 %v2277, %v2273
    %v2366 = vpack.c.b16 %v2278, %v2274
    %v2367 = vpack.c.b16 %v2279, %v2275
    %v2368 = vpack.c.b16 %v2280, %v2276
    %v2369 = vpack.c.b16 %v2285, %v2281
    %v2370 = vpack.c.b16 %v2286, %v2282
    %v2371 = vpack.c.b16 %v2287, %v2283
    %v2372 = vpack.c.b16 %v2288, %v2284
    %v2373 = vpack.c.b16 %v2293, %v2289
    %v2374 = vpack.c.b16 %v2294, %v2290
    %v2375 = vpack.c.b16 %v2295, %v2291
    %v2376 = vpack.c.b16 %v2296, %v2292
    %v2377 = vpack.c.b16 %v2301, %v2297
    %v2378 = vpack.c.b16 %v2302, %v2298
    %v2379 = vpack.c.b16 %v2303, %v2299
    %v2380 = vpack.c.b16 %v2304, %v2300
    %v2381 = vpack.c.b16 %v2309, %v2305
    %v2382 = vpack.c.b16 %v2310, %v2306
    %v2383 = vpack.c.b16 %v2311, %v2307
    %v2384 = vpack.c.b16 %v2312, %v2308
    %v2385 = vpack.c.b16 %v2317, %v2313
    %v2386 = vpack.c.b16 %v2318, %v2314
    %v2387 = vpack.c.b16 %v2319, %v2315
    %v2388 = vpack.c.b16 %v2320, %v2316
    %v2389 = vpack.c.b16 %v2325, %v2321
    %v2390 = vpack.c.b16 %v2326, %v2322
    %v2391 = vpack.c.b16 %v2327, %v2323
    %v2392 = vpack.c.b16 %v2328, %v2324
    %2457 = vmatprep.subr.bf16.mxu0 %v2330
    %2458 = vmatpush1.bf16.msra.mxu0 %v2329
    %2459 = vmatprep.subr.bf16.mxu0 %v2334
    %2460 = vmatpush1.bf16.msra.mxu0 %v2333
    %2461 = vmatprep.subr.bf16.mxu0 %v2338
    %2462 = vmatpush1.bf16.msra.mxu0 %v2337
    %2463 = vmatprep.subr.bf16.mxu0 %v2342
    %2464 = vmatpush1.bf16.msra.mxu0 %v2341
    %2465 = vmatprep.subr.bf16.mxu0 %v2346
    %2466 = vmatpush1.bf16.msra.mxu0 %v2345
    %2467 = vmatprep.subr.bf16.mxu0 %v2350
    %2468 = vmatpush1.bf16.msra.mxu0 %v2349
    %2469 = vmatprep.subr.bf16.mxu0 %v2354
    %2470 = vmatpush1.bf16.msra.mxu0 %v2353
    %2471 = vmatprep.subr.bf16.mxu0 %v2358
    %2472 = vmatpush1.bf16.msra.mxu0 %v2357
    %2473 = vmatprep.subr.bf16.mxu0 %v2362
    %2474 = vmatpush1.bf16.msra.mxu0 %v2361
    %2475 = vmatprep.subr.bf16.mxu0 %v2366
    %2476 = vmatpush1.bf16.msra.mxu0 %v2365
    %2477 = vmatprep.subr.bf16.mxu0 %v2370
    %2478 = vmatpush1.bf16.msra.mxu0 %v2369
    %2479 = vmatprep.subr.bf16.mxu0 %v2374
    %2480 = vmatpush1.bf16.msra.mxu0 %v2373
    %2481 = vmatprep.subr.bf16.mxu0 %v2378
    %2482 = vmatpush1.bf16.msra.mxu0 %v2377
    %2483 = vmatprep.subr.bf16.mxu0 %v2382
    %2484 = vmatpush1.bf16.msra.mxu0 %v2381
    %2485 = vmatprep.subr.bf16.mxu0 %v2386
    %2486 = vmatpush1.bf16.msra.mxu0 %v2385
    %2487 = vmatprep.subr.bf16.mxu0 %v2390
    %2488 = vmatpush1.bf16.msra.mxu0 %v2389
    %2489 = vmatprep.mubr.bf16.mxu0 %v2050
    %2490 = vmatmul.mubr.bf16.gmra.mrb[0].mxu0 %v2049
    %v2491 = vpop.f32.mrb[0].mxu0
    %v2492 = vadd.f32 %v2120, %v2491
    %v2493 = vpop.f32.mrb[0].mxu0
    %v2494 = vadd.f32 %v2124, %v2493
    %v2495 = vpop.f32.mrb[0].mxu0
    %v2496 = vpop.f32.mrb[0].mxu0
    %2497 = vdwg.mxu0
    %2498 = vmatprep.subr.bf16.mxu0 %v2332
    %2499 = vmatpush1.bf16.msra.mxu0 %v2331
    %2500 = vmatprep.subr.bf16.mxu0 %v2336
    %2501 = vmatpush1.bf16.msra.mxu0 %v2335
    %2502 = vmatprep.subr.bf16.mxu0 %v2340
    %2503 = vmatpush1.bf16.msra.mxu0 %v2339
    %2504 = vmatprep.subr.bf16.mxu0 %v2344
    %2505 = vmatpush1.bf16.msra.mxu0 %v2343
    %2506 = vmatprep.subr.bf16.mxu0 %v2348
    %2507 = vmatpush1.bf16.msra.mxu0 %v2347
    %2508 = vmatprep.subr.bf16.mxu0 %v2352
    %2509 = vmatpush1.bf16.msra.mxu0 %v2351
    %2510 = vmatprep.subr.bf16.mxu0 %v2356
    %2511 = vmatpush1.bf16.msra.mxu0 %v2355
    %2512 = vmatprep.subr.bf16.mxu0 %v2360
    %2513 = vmatpush1.bf16.msra.mxu0 %v2359
    %2514 = vmatprep.subr.bf16.mxu0 %v2364
    %2515 = vmatpush1.bf16.msra.mxu0 %v2363
    %2516 = vmatprep.subr.bf16.mxu0 %v2368
    %2517 = vmatpush1.bf16.msra.mxu0 %v2367
    %2518 = vmatprep.subr.bf16.mxu0 %v2372
    %2519 = vmatpush1.bf16.msra.mxu0 %v2371
    %2520 = vmatprep.subr.bf16.mxu0 %v2376
    %2521 = vmatpush1.bf16.msra.mxu0 %v2375
    %2522 = vmatprep.subr.bf16.mxu0 %v2380
    %2523 = vmatpush1.bf16.msra.mxu0 %v2379
    %2524 = vmatprep.subr.bf16.mxu0 %v2384
    %2525 = vmatpush1.bf16.msra.mxu0 %v2383
    %2526 = vmatprep.subr.bf16.mxu0 %v2388
    %2527 = vmatpush1.bf16.msra.mxu0 %v2387
    %2528 = vmatprep.subr.bf16.mxu0 %v2392
    %2529 = vmatpush1.bf16.msra.mxu0 %v2391
    %2530 = vmatprep.mubr.bf16.mxu0 %v2050
    %2531 = vmatmul.mubr.bf16.gmra.mrb[0].mxu0 %v2049
    %v2532 = vpop.f32.mrb[0].mxu0
    %v2533 = vadd.f32 %v2128, %v2532
    %v2534 = vpop.f32.mrb[0].mxu0
    %v2535 = vadd.f32 %v2132, %v2534
    %v2536 = vpop.f32.mrb[0].mxu0
    %v2537 = vpop.f32.mrb[0].mxu0
    %2538 = vdwg.mxu0
    %v2539 = vmax.f32 %v2492, 0.0
    %v2540 = vmax.f32 %v2494, 0.0
    %v2541 = vmax.f32 %v2533, 0.0
    %v2542 = vmax.f32 %v2535, 0.0
    %v2543 = vpack.c.bf16 %v2539, %v2539
    %v2544 = vpack.c.bf16 %v2540, %v2540
    %v2545 = vpack.c.bf16 %v2541, %v2541
    %v2546 = vpack.c.bf16 %v2542, %v2542
    %v2547 = vld [vmem:[#allocation8] sm:$0xff]
    %v2548 = vld [vmem:[#allocation8 + $0x8] sm:$0xff]
    %v2549 = vld [vmem:[#allocation8 + $0x10] sm:$0xff]
    %v2550 = vld [vmem:[#allocation8 + $0x18] sm:$0xff]
    %v2551 = vld [vmem:[#allocation8 + $0x20] sm:$0xff]
    %v2552 = vld [vmem:[#allocation8 + $0x28] sm:$0xff]
    %v2553 = vld [vmem:[#allocation8 + $0x30] sm:$0xff]
    %v2554 = vld [vmem:[#allocation8 + $0x38] sm:$0xff]
    %v2555 = vld [vmem:[#allocation8 + $0x40] sm:$0xff]
    %v2556 = vld [vmem:[#allocation8 + $0x48] sm:$0xff]
    %v2557 = vld [vmem:[#allocation8 + $0x50] sm:$0xff]
    %v2558 = vld [vmem:[#allocation8 + $0x58] sm:$0xff]
    %v2559 = vld [vmem:[#allocation8 + $0x60] sm:$0xff]
    %v2560 = vld [vmem:[#allocation8 + $0x68] sm:$0xff]
    %v2561 = vld [vmem:[#allocation8 + $0x70] sm:$0xff]
    %v2562 = vld [vmem:[#allocation8 + $0x78] sm:$0xff]
    %v2563 = vld [vmem:[#allocation8 + $0x80] sm:$0xff]
    %v2564 = vld [vmem:[#allocation8 + $0x88] sm:$0xff]
    %v2565 = vld [vmem:[#allocation8 + $0x90] sm:$0xff]
    %v2566 = vld [vmem:[#allocation8 + $0x98] sm:$0xff]
    %v2567 = vld [vmem:[#allocation8 + $0xa0] sm:$0xff]
    %v2568 = vld [vmem:[#allocation8 + $0xa8] sm:$0xff]
    %v2569 = vld [vmem:[#allocation8 + $0xb0] sm:$0xff]
    %v2570 = vld [vmem:[#allocation8 + $0xb8] sm:$0xff]
    %v2571 = vld [vmem:[#allocation8 + $0xc0] sm:$0xff]
    %v2572 = vld [vmem:[#allocation8 + $0xc8] sm:$0xff]
    %v2573 = vld [vmem:[#allocation8 + $0xd0] sm:$0xff]
    %v2574 = vld [vmem:[#allocation8 + $0xd8] sm:$0xff]
    %v2575 = vld [vmem:[#allocation8 + $0xe0] sm:$0xff]
    %v2576 = vld [vmem:[#allocation8 + $0xe8] sm:$0xff]
    %v2577 = vld [vmem:[#allocation8 + $0xf0] sm:$0xff]
    %v2578 = vld [vmem:[#allocation8 + $0xf8] sm:$0xff]
    %v2579 = vld [vmem:[#allocation8 + $0x100] sm:$0xff]
    %v2580 = vld [vmem:[#allocation8 + $0x108] sm:$0xff]
    %v2581 = vld [vmem:[#allocation8 + $0x110] sm:$0xff]
    %v2582 = vld [vmem:[#allocation8 + $0x118] sm:$0xff]
    %v2583 = vld [vmem:[#allocation8 + $0x120] sm:$0xff]
    %v2584 = vld [vmem:[#allocation8 + $0x128] sm:$0xff]
    %v2585 = vld [vmem:[#allocation8 + $0x130] sm:$0xff]
    %v2586 = vld [vmem:[#allocation8 + $0x138] sm:$0xff]
    %v2587 = vld [vmem:[#allocation8 + $0x140] sm:$0xff]
    %v2588 = vld [vmem:[#allocation8 + $0x148] sm:$0xff]
    %v2589 = vld [vmem:[#allocation8 + $0x150] sm:$0xff]
    %v2590 = vld [vmem:[#allocation8 + $0x158] sm:$0xff]
    %v2591 = vld [vmem:[#allocation8 + $0x160] sm:$0xff]
    %v2592 = vld [vmem:[#allocation8 + $0x168] sm:$0xff]
    %v2593 = vld [vmem:[#allocation8 + $0x170] sm:$0xff]
    %v2594 = vld [vmem:[#allocation8 + $0x178] sm:$0xff]
    %v2595 = vld [vmem:[#allocation8 + $0x180] sm:$0xff]
    %v2596 = vld [vmem:[#allocation8 + $0x188] sm:$0xff]
    %v2597 = vld [vmem:[#allocation8 + $0x190] sm:$0xff]
    %v2598 = vld [vmem:[#allocation8 + $0x198] sm:$0xff]
    %v2599 = vld [vmem:[#allocation8 + $0x1a0] sm:$0xff]
    %v2600 = vld [vmem:[#allocation8 + $0x1a8] sm:$0xff]
    %v2601 = vld [vmem:[#allocation8 + $0x1b0] sm:$0xff]
    %v2602 = vld [vmem:[#allocation8 + $0x1b8] sm:$0xff]
    %v2603 = vld [vmem:[#allocation8 + $0x1c0] sm:$0xff]
    %v2604 = vld [vmem:[#allocation8 + $0x1c8] sm:$0xff]
    %v2605 = vld [vmem:[#allocation8 + $0x1d0] sm:$0xff]
    %v2606 = vld [vmem:[#allocation8 + $0x1d8] sm:$0xff]
    %v2607 = vld [vmem:[#allocation8 + $0x1e0] sm:$0xff]
    %v2608 = vld [vmem:[#allocation8 + $0x1e8] sm:$0xff]
    %v2609 = vld [vmem:[#allocation8 + $0x1f0] sm:$0xff]
    %v2610 = vld [vmem:[#allocation8 + $0x1f8] sm:$0xff]
    %v2611 = vld [vmem:[#allocation8 + $0x200] sm:$0xff]
    %v2612 = vld [vmem:[#allocation8 + $0x208] sm:$0xff]
    %v2613 = vld [vmem:[#allocation8 + $0x210] sm:$0xff]
    %v2614 = vld [vmem:[#allocation8 + $0x218] sm:$0xff]
    %v2615 = vld [vmem:[#allocation8 + $0x220] sm:$0xff]
    %v2616 = vld [vmem:[#allocation8 + $0x228] sm:$0xff]
    %v2617 = vld [vmem:[#allocation8 + $0x230] sm:$0xff]
    %v2618 = vld [vmem:[#allocation8 + $0x238] sm:$0xff]
    %v2619 = vld [vmem:[#allocation8 + $0x240] sm:$0xff]
    %v2620 = vld [vmem:[#allocation8 + $0x248] sm:$0xff]
    %v2621 = vld [vmem:[#allocation8 + $0x250] sm:$0xff]
    %v2622 = vld [vmem:[#allocation8 + $0x258] sm:$0xff]
    %v2623 = vld [vmem:[#allocation8 + $0x260] sm:$0xff]
    %v2624 = vld [vmem:[#allocation8 + $0x268] sm:$0xff]
    %v2625 = vld [vmem:[#allocation8 + $0x270] sm:$0xff]
    %v2626 = vld [vmem:[#allocation8 + $0x278] sm:$0xff]
    %v2627 = vld [vmem:[#allocation8 + $0x280] sm:$0xff]
    %v2628 = vld [vmem:[#allocation8 + $0x288] sm:$0xff]
    %v2629 = vld [vmem:[#allocation8 + $0x290] sm:$0xff]
    %v2630 = vld [vmem:[#allocation8 + $0x298] sm:$0xff]
    %v2631 = vld [vmem:[#allocation8 + $0x2a0] sm:$0xff]
    %v2632 = vld [vmem:[#allocation8 + $0x2a8] sm:$0xff]
    %v2633 = vld [vmem:[#allocation8 + $0x2b0] sm:$0xff]
    %v2634 = vld [vmem:[#allocation8 + $0x2b8] sm:$0xff]
    %v2635 = vld [vmem:[#allocation8 + $0x2c0] sm:$0xff]
    %v2636 = vld [vmem:[#allocation8 + $0x2c8] sm:$0xff]
    %v2637 = vld [vmem:[#allocation8 + $0x2d0] sm:$0xff]
    %v2638 = vld [vmem:[#allocation8 + $0x2d8] sm:$0xff]
    %v2639 = vld [vmem:[#allocation8 + $0x2e0] sm:$0xff]
    %v2640 = vld [vmem:[#allocation8 + $0x2e8] sm:$0xff]
    %v2641 = vld [vmem:[#allocation8 + $0x2f0] sm:$0xff]
    %v2642 = vld [vmem:[#allocation8 + $0x2f8] sm:$0xff]
    %v2643 = vld [vmem:[#allocation8 + $0x300] sm:$0xff]
    %v2644 = vld [vmem:[#allocation8 + $0x308] sm:$0xff]
    %v2645 = vld [vmem:[#allocation8 + $0x310] sm:$0xff]
    %v2646 = vld [vmem:[#allocation8 + $0x318] sm:$0xff]
    %v2647 = vld [vmem:[#allocation8 + $0x320] sm:$0xff]
    %v2648 = vld [vmem:[#allocation8 + $0x328] sm:$0xff]
    %v2649 = vld [vmem:[#allocation8 + $0x330] sm:$0xff]
    %v2650 = vld [vmem:[#allocation8 + $0x338] sm:$0xff]
    %v2651 = vld [vmem:[#allocation8 + $0x340] sm:$0xff]
    %v2652 = vld [vmem:[#allocation8 + $0x348] sm:$0xff]
    %v2653 = vld [vmem:[#allocation8 + $0x350] sm:$0xff]
    %v2654 = vld [vmem:[#allocation8 + $0x358] sm:$0xff]
    %v2655 = vld [vmem:[#allocation8 + $0x360] sm:$0xff]
    %v2656 = vld [vmem:[#allocation8 + $0x368] sm:$0xff]
    %v2657 = vld [vmem:[#allocation8 + $0x370] sm:$0xff]
    %v2658 = vld [vmem:[#allocation8 + $0x378] sm:$0xff]
    %v2659 = vld [vmem:[#allocation8 + $0x380] sm:$0xff]
    %v2660 = vld [vmem:[#allocation8 + $0x388] sm:$0xff]
    %v2661 = vld [vmem:[#allocation8 + $0x390] sm:$0xff]
    %v2662 = vld [vmem:[#allocation8 + $0x398] sm:$0xff]
    %v2663 = vld [vmem:[#allocation8 + $0x3a0] sm:$0xff]
    %v2664 = vld [vmem:[#allocation8 + $0x3a8] sm:$0xff]
    %v2665 = vld [vmem:[#allocation8 + $0x3b0] sm:$0xff]
    %v2666 = vld [vmem:[#allocation8 + $0x3b8] sm:$0xff]
    %v2667 = vld [vmem:[#allocation8 + $0x3c0] sm:$0xff]
    %v2668 = vld [vmem:[#allocation8 + $0x3c8] sm:$0xff]
    %v2669 = vld [vmem:[#allocation8 + $0x3d0] sm:$0xff]
    %v2670 = vld [vmem:[#allocation8 + $0x3d8] sm:$0xff]
    %v2671 = vld [vmem:[#allocation8 + $0x3e0] sm:$0xff]
    %v2672 = vld [vmem:[#allocation8 + $0x3e8] sm:$0xff]
    %v2673 = vld [vmem:[#allocation8 + $0x3f0] sm:$0xff]
    %v2674 = vld [vmem:[#allocation8 + $0x3f8] sm:$0xff]
    %v2675 = vld [vmem:[%s16] sm:$0xf]
    %v2677 = vlaneseq
    %v2678 = vshrl.u32 %v2677, 7
    %v2679 = vsub.s32 0, %v2678
    %v2680 = vrot.slane %v2675, %v2679
    %v2681 = vlaneseq
    %v2682 = vshrl.u32 %v2681, 7
    %v2683 = vsub.s32 1, %v2682
    %v2684 = vrot.slane %v2675, %v2683
    %v2685 = vlaneseq
    %v2686 = vshrl.u32 %v2685, 7
    %v2687 = vsub.s32 2, %v2686
    %v2688 = vrot.slane %v2675, %v2687
    %v2689 = vlaneseq
    %v2690 = vshrl.u32 %v2689, 7
    %v2691 = vsub.s32 3, %v2690
    %v2692 = vrot.slane %v2675, %v2691
    %v2825 = vunpack.c.l.b16 %v2547
    %v2826 = vunpack.c.h.b16 %v2547
    %v2827 = vunpack.c.l.b16 %v2548
    %v2828 = vunpack.c.h.b16 %v2548
    %v2829 = vunpack.c.l.b16 %v2549
    %v2830 = vunpack.c.h.b16 %v2549
    %v2831 = vunpack.c.l.b16 %v2550
    %v2832 = vunpack.c.h.b16 %v2550
    %v2833 = vunpack.c.l.b16 %v2551
    %v2834 = vunpack.c.h.b16 %v2551
    %v2835 = vunpack.c.l.b16 %v2552
    %v2836 = vunpack.c.h.b16 %v2552
    %v2837 = vunpack.c.l.b16 %v2553
    %v2838 = vunpack.c.h.b16 %v2553
    %v2839 = vunpack.c.l.b16 %v2554
    %v2840 = vunpack.c.h.b16 %v2554
    %v2841 = vunpack.c.l.b16 %v2555
    %v2842 = vunpack.c.h.b16 %v2555
    %v2843 = vunpack.c.l.b16 %v2556
    %v2844 = vunpack.c.h.b16 %v2556
    %v2845 = vunpack.c.l.b16 %v2557
    %v2846 = vunpack.c.h.b16 %v2557
    %v2847 = vunpack.c.l.b16 %v2558
    %v2848 = vunpack.c.h.b16 %v2558
    %v2849 = vunpack.c.l.b16 %v2559
    %v2850 = vunpack.c.h.b16 %v2559
    %v2851 = vunpack.c.l.b16 %v2560
    %v2852 = vunpack.c.h.b16 %v2560
    %v2853 = vunpack.c.l.b16 %v2561
    %v2854 = vunpack.c.h.b16 %v2561
    %v2855 = vunpack.c.l.b16 %v2562
    %v2856 = vunpack.c.h.b16 %v2562
    %v2857 = vunpack.c.l.b16 %v2563
    %v2858 = vunpack.c.h.b16 %v2563
    %v2859 = vunpack.c.l.b16 %v2564
    %v2860 = vunpack.c.h.b16 %v2564
    %v2861 = vunpack.c.l.b16 %v2565
    %v2862 = vunpack.c.h.b16 %v2565
    %v2863 = vunpack.c.l.b16 %v2566
    %v2864 = vunpack.c.h.b16 %v2566
    %v2865 = vunpack.c.l.b16 %v2567
    %v2866 = vunpack.c.h.b16 %v2567
    %v2867 = vunpack.c.l.b16 %v2568
    %v2868 = vunpack.c.h.b16 %v2568
    %v2869 = vunpack.c.l.b16 %v2569
    %v2870 = vunpack.c.h.b16 %v2569
    %v2871 = vunpack.c.l.b16 %v2570
    %v2872 = vunpack.c.h.b16 %v2570
    %v2873 = vunpack.c.l.b16 %v2571
    %v2874 = vunpack.c.h.b16 %v2571
    %v2875 = vunpack.c.l.b16 %v2572
    %v2876 = vunpack.c.h.b16 %v2572
    %v2877 = vunpack.c.l.b16 %v2573
    %v2878 = vunpack.c.h.b16 %v2573
    %v2879 = vunpack.c.l.b16 %v2574
    %v2880 = vunpack.c.h.b16 %v2574
    %v2881 = vunpack.c.l.b16 %v2575
    %v2882 = vunpack.c.h.b16 %v2575
    %v2883 = vunpack.c.l.b16 %v2576
    %v2884 = vunpack.c.h.b16 %v2576
    %v2885 = vunpack.c.l.b16 %v2577
    %v2886 = vunpack.c.h.b16 %v2577
    %v2887 = vunpack.c.l.b16 %v2578
    %v2888 = vunpack.c.h.b16 %v2578
    %v2889 = vunpack.c.l.b16 %v2579
    %v2890 = vunpack.c.h.b16 %v2579
    %v2891 = vunpack.c.l.b16 %v2580
    %v2892 = vunpack.c.h.b16 %v2580
    %v2893 = vunpack.c.l.b16 %v2581
    %v2894 = vunpack.c.h.b16 %v2581
    %v2895 = vunpack.c.l.b16 %v2582
    %v2896 = vunpack.c.h.b16 %v2582
    %v2897 = vunpack.c.l.b16 %v2583
    %v2898 = vunpack.c.h.b16 %v2583
    %v2899 = vunpack.c.l.b16 %v2584
    %v2900 = vunpack.c.h.b16 %v2584
    %v2901 = vunpack.c.l.b16 %v2585
    %v2902 = vunpack.c.h.b16 %v2585
    %v2903 = vunpack.c.l.b16 %v2586
    %v2904 = vunpack.c.h.b16 %v2586
    %v2905 = vunpack.c.l.b16 %v2587
    %v2906 = vunpack.c.h.b16 %v2587
    %v2907 = vunpack.c.l.b16 %v2588
    %v2908 = vunpack.c.h.b16 %v2588
    %v2909 = vunpack.c.l.b16 %v2589
    %v2910 = vunpack.c.h.b16 %v2589
    %v2911 = vunpack.c.l.b16 %v2590
    %v2912 = vunpack.c.h.b16 %v2590
    %v2913 = vunpack.c.l.b16 %v2591
    %v2914 = vunpack.c.h.b16 %v2591
    %v2915 = vunpack.c.l.b16 %v2592
    %v2916 = vunpack.c.h.b16 %v2592
    %v2917 = vunpack.c.l.b16 %v2593
    %v2918 = vunpack.c.h.b16 %v2593
    %v2919 = vunpack.c.l.b16 %v2594
    %v2920 = vunpack.c.h.b16 %v2594
    %v2921 = vunpack.c.l.b16 %v2595
    %v2922 = vunpack.c.h.b16 %v2595
    %v2923 = vunpack.c.l.b16 %v2596
    %v2924 = vunpack.c.h.b16 %v2596
    %v2925 = vunpack.c.l.b16 %v2597
    %v2926 = vunpack.c.h.b16 %v2597
    %v2927 = vunpack.c.l.b16 %v2598
    %v2928 = vunpack.c.h.b16 %v2598
    %v2929 = vunpack.c.l.b16 %v2599
    %v2930 = vunpack.c.h.b16 %v2599
    %v2931 = vunpack.c.l.b16 %v2600
    %v2932 = vunpack.c.h.b16 %v2600
    %v2933 = vunpack.c.l.b16 %v2601
    %v2934 = vunpack.c.h.b16 %v2601
    %v2935 = vunpack.c.l.b16 %v2602
    %v2936 = vunpack.c.h.b16 %v2602
    %v2937 = vunpack.c.l.b16 %v2603
    %v2938 = vunpack.c.h.b16 %v2603
    %v2939 = vunpack.c.l.b16 %v2604
    %v2940 = vunpack.c.h.b16 %v2604
    %v2941 = vunpack.c.l.b16 %v2605
    %v2942 = vunpack.c.h.b16 %v2605
    %v2943 = vunpack.c.l.b16 %v2606
    %v2944 = vunpack.c.h.b16 %v2606
    %v2945 = vunpack.c.l.b16 %v2607
    %v2946 = vunpack.c.h.b16 %v2607
    %v2947 = vunpack.c.l.b16 %v2608
    %v2948 = vunpack.c.h.b16 %v2608
    %v2949 = vunpack.c.l.b16 %v2609
    %v2950 = vunpack.c.h.b16 %v2609
    %v2951 = vunpack.c.l.b16 %v2610
    %v2952 = vunpack.c.h.b16 %v2610
    %v2953 = vunpack.c.l.b16 %v2611
    %v2954 = vunpack.c.h.b16 %v2611
    %v2955 = vunpack.c.l.b16 %v2612
    %v2956 = vunpack.c.h.b16 %v2612
    %v2957 = vunpack.c.l.b16 %v2613
    %v2958 = vunpack.c.h.b16 %v2613
    %v2959 = vunpack.c.l.b16 %v2614
    %v2960 = vunpack.c.h.b16 %v2614
    %v2961 = vunpack.c.l.b16 %v2615
    %v2962 = vunpack.c.h.b16 %v2615
    %v2963 = vunpack.c.l.b16 %v2616
    %v2964 = vunpack.c.h.b16 %v2616
    %v2965 = vunpack.c.l.b16 %v2617
    %v2966 = vunpack.c.h.b16 %v2617
    %v2967 = vunpack.c.l.b16 %v2618
    %v2968 = vunpack.c.h.b16 %v2618
    %v2969 = vunpack.c.l.b16 %v2619
    %v2970 = vunpack.c.h.b16 %v2619
    %v2971 = vunpack.c.l.b16 %v2620
    %v2972 = vunpack.c.h.b16 %v2620
    %v2973 = vunpack.c.l.b16 %v2621
    %v2974 = vunpack.c.h.b16 %v2621
    %v2975 = vunpack.c.l.b16 %v2622
    %v2976 = vunpack.c.h.b16 %v2622
    %v2977 = vunpack.c.l.b16 %v2623
    %v2978 = vunpack.c.h.b16 %v2623
    %v2979 = vunpack.c.l.b16 %v2624
    %v2980 = vunpack.c.h.b16 %v2624
    %v2981 = vunpack.c.l.b16 %v2625
    %v2982 = vunpack.c.h.b16 %v2625
    %v2983 = vunpack.c.l.b16 %v2626
    %v2984 = vunpack.c.h.b16 %v2626
    %v2985 = vunpack.c.l.b16 %v2627
    %v2986 = vunpack.c.h.b16 %v2627
    %v2987 = vunpack.c.l.b16 %v2628
    %v2988 = vunpack.c.h.b16 %v2628
    %v2989 = vunpack.c.l.b16 %v2629
    %v2990 = vunpack.c.h.b16 %v2629
    %v2991 = vunpack.c.l.b16 %v2630
    %v2992 = vunpack.c.h.b16 %v2630
    %v2993 = vunpack.c.l.b16 %v2631
    %v2994 = vunpack.c.h.b16 %v2631
    %v2995 = vunpack.c.l.b16 %v2632
    %v2996 = vunpack.c.h.b16 %v2632
    %v2997 = vunpack.c.l.b16 %v2633
    %v2998 = vunpack.c.h.b16 %v2633
    %v2999 = vunpack.c.l.b16 %v2634
    %v3000 = vunpack.c.h.b16 %v2634
    %v3001 = vunpack.c.l.b16 %v2635
    %v3002 = vunpack.c.h.b16 %v2635
    %v3003 = vunpack.c.l.b16 %v2636
    %v3004 = vunpack.c.h.b16 %v2636
    %v3005 = vunpack.c.l.b16 %v2637
    %v3006 = vunpack.c.h.b16 %v2637
    %v3007 = vunpack.c.l.b16 %v2638
    %v3008 = vunpack.c.h.b16 %v2638
    %v3009 = vunpack.c.l.b16 %v2639
    %v3010 = vunpack.c.h.b16 %v2639
    %v3011 = vunpack.c.l.b16 %v2640
    %v3012 = vunpack.c.h.b16 %v2640
    %v3013 = vunpack.c.l.b16 %v2641
    %v3014 = vunpack.c.h.b16 %v2641
    %v3015 = vunpack.c.l.b16 %v2642
    %v3016 = vunpack.c.h.b16 %v2642
    %v3017 = vunpack.c.l.b16 %v2643
    %v3018 = vunpack.c.h.b16 %v2643
    %v3019 = vunpack.c.l.b16 %v2644
    %v3020 = vunpack.c.h.b16 %v2644
    %v3021 = vunpack.c.l.b16 %v2645
    %v3022 = vunpack.c.h.b16 %v2645
    %v3023 = vunpack.c.l.b16 %v2646
    %v3024 = vunpack.c.h.b16 %v2646
    %v3025 = vunpack.c.l.b16 %v2647
    %v3026 = vunpack.c.h.b16 %v2647
    %v3027 = vunpack.c.l.b16 %v2648
    %v3028 = vunpack.c.h.b16 %v2648
    %v3029 = vunpack.c.l.b16 %v2649
    %v3030 = vunpack.c.h.b16 %v2649
    %v3031 = vunpack.c.l.b16 %v2650
    %v3032 = vunpack.c.h.b16 %v2650
    %v3033 = vunpack.c.l.b16 %v2651
    %v3034 = vunpack.c.h.b16 %v2651
    %v3035 = vunpack.c.l.b16 %v2652
    %v3036 = vunpack.c.h.b16 %v2652
    %v3037 = vunpack.c.l.b16 %v2653
    %v3038 = vunpack.c.h.b16 %v2653
    %v3039 = vunpack.c.l.b16 %v2654
    %v3040 = vunpack.c.h.b16 %v2654
    %v3041 = vunpack.c.l.b16 %v2655
    %v3042 = vunpack.c.h.b16 %v2655
    %v3043 = vunpack.c.l.b16 %v2656
    %v3044 = vunpack.c.h.b16 %v2656
    %v3045 = vunpack.c.l.b16 %v2657
    %v3046 = vunpack.c.h.b16 %v2657
    %v3047 = vunpack.c.l.b16 %v2658
    %v3048 = vunpack.c.h.b16 %v2658
    %v3049 = vunpack.c.l.b16 %v2659
    %v3050 = vunpack.c.h.b16 %v2659
    %v3051 = vunpack.c.l.b16 %v2660
    %v3052 = vunpack.c.h.b16 %v2660
    %v3053 = vunpack.c.l.b16 %v2661
    %v3054 = vunpack.c.h.b16 %v2661
    %v3055 = vunpack.c.l.b16 %v2662
    %v3056 = vunpack.c.h.b16 %v2662
    %v3057 = vunpack.c.l.b16 %v2663
    %v3058 = vunpack.c.h.b16 %v2663
    %v3059 = vunpack.c.l.b16 %v2664
    %v3060 = vunpack.c.h.b16 %v2664
    %v3061 = vunpack.c.l.b16 %v2665
    %v3062 = vunpack.c.h.b16 %v2665
    %v3063 = vunpack.c.l.b16 %v2666
    %v3064 = vunpack.c.h.b16 %v2666
    %v3065 = vunpack.c.l.b16 %v2667
    %v3066 = vunpack.c.h.b16 %v2667
    %v3067 = vunpack.c.l.b16 %v2668
    %v3068 = vunpack.c.h.b16 %v2668
    %v3069 = vunpack.c.l.b16 %v2669
    %v3070 = vunpack.c.h.b16 %v2669
    %v3071 = vunpack.c.l.b16 %v2670
    %v3072 = vunpack.c.h.b16 %v2670
    %v3073 = vunpack.c.l.b16 %v2671
    %v3074 = vunpack.c.h.b16 %v2671
    %v3075 = vunpack.c.l.b16 %v2672
    %v3076 = vunpack.c.h.b16 %v2672
    %v3077 = vunpack.c.l.b16 %v2673
    %v3078 = vunpack.c.h.b16 %v2673
    %v3079 = vunpack.c.l.b16 %v2674
    %v3080 = vunpack.c.h.b16 %v2674
    %v3081 = vpack.c.b16 %v2829, %v2825
    %v3082 = vpack.c.b16 %v2830, %v2826
    %v3083 = vpack.c.b16 %v2831, %v2827
    %v3084 = vpack.c.b16 %v2832, %v2828
    %v3085 = vpack.c.b16 %v2837, %v2833
    %v3086 = vpack.c.b16 %v2838, %v2834
    %v3087 = vpack.c.b16 %v2839, %v2835
    %v3088 = vpack.c.b16 %v2840, %v2836
    %v3089 = vpack.c.b16 %v2845, %v2841
    %v3090 = vpack.c.b16 %v2846, %v2842
    %v3091 = vpack.c.b16 %v2847, %v2843
    %v3092 = vpack.c.b16 %v2848, %v2844
    %v3093 = vpack.c.b16 %v2853, %v2849
    %v3094 = vpack.c.b16 %v2854, %v2850
    %v3095 = vpack.c.b16 %v2855, %v2851
    %v3096 = vpack.c.b16 %v2856, %v2852
    %v3097 = vpack.c.b16 %v2861, %v2857
    %v3098 = vpack.c.b16 %v2862, %v2858
    %v3099 = vpack.c.b16 %v2863, %v2859
    %v3100 = vpack.c.b16 %v2864, %v2860
    %v3101 = vpack.c.b16 %v2869, %v2865
    %v3102 = vpack.c.b16 %v2870, %v2866
    %v3103 = vpack.c.b16 %v2871, %v2867
    %v3104 = vpack.c.b16 %v2872, %v2868
    %v3105 = vpack.c.b16 %v2877, %v2873
    %v3106 = vpack.c.b16 %v2878, %v2874
    %v3107 = vpack.c.b16 %v2879, %v2875
    %v3108 = vpack.c.b16 %v2880, %v2876
    %v3109 = vpack.c.b16 %v2885, %v2881
    %v3110 = vpack.c.b16 %v2886, %v2882
    %v3111 = vpack.c.b16 %v2887, %v2883
    %v3112 = vpack.c.b16 %v2888, %v2884
    %v3113 = vpack.c.b16 %v2893, %v2889
    %v3114 = vpack.c.b16 %v2894, %v2890
    %v3115 = vpack.c.b16 %v2895, %v2891
    %v3116 = vpack.c.b16 %v2896, %v2892
    %v3117 = vpack.c.b16 %v2901, %v2897
    %v3118 = vpack.c.b16 %v2902, %v2898
    %v3119 = vpack.c.b16 %v2903, %v2899
    %v3120 = vpack.c.b16 %v2904, %v2900
    %v3121 = vpack.c.b16 %v2909, %v2905
    %v3122 = vpack.c.b16 %v2910, %v2906
    %v3123 = vpack.c.b16 %v2911, %v2907
    %v3124 = vpack.c.b16 %v2912, %v2908
    %v3125 = vpack.c.b16 %v2917, %v2913
    %v3126 = vpack.c.b16 %v2918, %v2914
    %v3127 = vpack.c.b16 %v2919, %v2915
    %v3128 = vpack.c.b16 %v2920, %v2916
    %v3129 = vpack.c.b16 %v2925, %v2921
    %v3130 = vpack.c.b16 %v2926, %v2922
    %v3131 = vpack.c.b16 %v2927, %v2923
    %v3132 = vpack.c.b16 %v2928, %v2924
    %v3133 = vpack.c.b16 %v2933, %v2929
    %v3134 = vpack.c.b16 %v2934, %v2930
    %v3135 = vpack.c.b16 %v2935, %v2931
    %v3136 = vpack.c.b16 %v2936, %v2932
    %v3137 = vpack.c.b16 %v2941, %v2937
    %v3138 = vpack.c.b16 %v2942, %v2938
    %v3139 = vpack.c.b16 %v2943, %v2939
    %v3140 = vpack.c.b16 %v2944, %v2940
    %v3141 = vpack.c.b16 %v2949, %v2945
    %v3142 = vpack.c.b16 %v2950, %v2946
    %v3143 = vpack.c.b16 %v2951, %v2947
    %v3144 = vpack.c.b16 %v2952, %v2948
    %v3145 = vpack.c.b16 %v2957, %v2953
    %v3146 = vpack.c.b16 %v2958, %v2954
    %v3147 = vpack.c.b16 %v2959, %v2955
    %v3148 = vpack.c.b16 %v2960, %v2956
    %v3149 = vpack.c.b16 %v2965, %v2961
    %v3150 = vpack.c.b16 %v2966, %v2962
    %v3151 = vpack.c.b16 %v2967, %v2963
    %v3152 = vpack.c.b16 %v2968, %v2964
    %v3153 = vpack.c.b16 %v2973, %v2969
    %v3154 = vpack.c.b16 %v2974, %v2970
    %v3155 = vpack.c.b16 %v2975, %v2971
    %v3156 = vpack.c.b16 %v2976, %v2972
    %v3157 = vpack.c.b16 %v2981, %v2977
    %v3158 = vpack.c.b16 %v2982, %v2978
    %v3159 = vpack.c.b16 %v2983, %v2979
    %v3160 = vpack.c.b16 %v2984, %v2980
    %v3161 = vpack.c.b16 %v2989, %v2985
    %v3162 = vpack.c.b16 %v2990, %v2986
    %v3163 = vpack.c.b16 %v2991, %v2987
    %v3164 = vpack.c.b16 %v2992, %v2988
    %v3165 = vpack.c.b16 %v2997, %v2993
    %v3166 = vpack.c.b16 %v2998, %v2994
    %v3167 = vpack.c.b16 %v2999, %v2995
    %v3168 = vpack.c.b16 %v3000, %v2996
    %v3169 = vpack.c.b16 %v3005, %v3001
    %v3170 = vpack.c.b16 %v3006, %v3002
    %v3171 = vpack.c.b16 %v3007, %v3003
    %v3172 = vpack.c.b16 %v3008, %v3004
    %v3173 = vpack.c.b16 %v3013, %v3009
    %v3174 = vpack.c.b16 %v3014, %v3010
    %v3175 = vpack.c.b16 %v3015, %v3011
    %v3176 = vpack.c.b16 %v3016, %v3012
    %v3177 = vpack.c.b16 %v3021, %v3017
    %v3178 = vpack.c.b16 %v3022, %v3018
    %v3179 = vpack.c.b16 %v3023, %v3019
    %v3180 = vpack.c.b16 %v3024, %v3020
    %v3181 = vpack.c.b16 %v3029, %v3025
    %v3182 = vpack.c.b16 %v3030, %v3026
    %v3183 = vpack.c.b16 %v3031, %v3027
    %v3184 = vpack.c.b16 %v3032, %v3028
    %v3185 = vpack.c.b16 %v3037, %v3033
    %v3186 = vpack.c.b16 %v3038, %v3034
    %v3187 = vpack.c.b16 %v3039, %v3035
    %v3188 = vpack.c.b16 %v3040, %v3036
    %v3189 = vpack.c.b16 %v3045, %v3041
    %v3190 = vpack.c.b16 %v3046, %v3042
    %v3191 = vpack.c.b16 %v3047, %v3043
    %v3192 = vpack.c.b16 %v3048, %v3044
    %v3193 = vpack.c.b16 %v3053, %v3049
    %v3194 = vpack.c.b16 %v3054, %v3050
    %v3195 = vpack.c.b16 %v3055, %v3051
    %v3196 = vpack.c.b16 %v3056, %v3052
    %v3197 = vpack.c.b16 %v3061, %v3057
    %v3198 = vpack.c.b16 %v3062, %v3058
    %v3199 = vpack.c.b16 %v3063, %v3059
    %v3200 = vpack.c.b16 %v3064, %v3060
    %v3201 = vpack.c.b16 %v3069, %v3065
    %v3202 = vpack.c.b16 %v3070, %v3066
    %v3203 = vpack.c.b16 %v3071, %v3067
    %v3204 = vpack.c.b16 %v3072, %v3068
    %v3205 = vpack.c.b16 %v3077, %v3073
    %v3206 = vpack.c.b16 %v3078, %v3074
    %v3207 = vpack.c.b16 %v3079, %v3075
    %v3208 = vpack.c.b16 %v3080, %v3076
    %3337 = vmatprep.subr.bf16.mxu0 %v3082
    %3338 = vmatpush1.bf16.msra.mxu0 %v3081
    %3339 = vmatprep.subr.bf16.mxu0 %v3086
    %3340 = vmatpush1.bf16.msra.mxu0 %v3085
    %3341 = vmatprep.subr.bf16.mxu0 %v3090
    %3342 = vmatpush1.bf16.msra.mxu0 %v3089
    %3343 = vmatprep.subr.bf16.mxu0 %v3094
    %3344 = vmatpush1.bf16.msra.mxu0 %v3093
    %3345 = vmatprep.subr.bf16.mxu0 %v3098
    %3346 = vmatpush1.bf16.msra.mxu0 %v3097
    %3347 = vmatprep.subr.bf16.mxu0 %v3102
    %3348 = vmatpush1.bf16.msra.mxu0 %v3101
    %3349 = vmatprep.subr.bf16.mxu0 %v3106
    %3350 = vmatpush1.bf16.msra.mxu0 %v3105
    %3351 = vmatprep.subr.bf16.mxu0 %v3110
    %3352 = vmatpush1.bf16.msra.mxu0 %v3109
    %3353 = vmatprep.subr.bf16.mxu0 %v3114
    %3354 = vmatpush1.bf16.msra.mxu0 %v3113
    %3355 = vmatprep.subr.bf16.mxu0 %v3118
    %3356 = vmatpush1.bf16.msra.mxu0 %v3117
    %3357 = vmatprep.subr.bf16.mxu0 %v3122
    %3358 = vmatpush1.bf16.msra.mxu0 %v3121
    %3359 = vmatprep.subr.bf16.mxu0 %v3126
    %3360 = vmatpush1.bf16.msra.mxu0 %v3125
    %3361 = vmatprep.subr.bf16.mxu0 %v3130
    %3362 = vmatpush1.bf16.msra.mxu0 %v3129
    %3363 = vmatprep.subr.bf16.mxu0 %v3134
    %3364 = vmatpush1.bf16.msra.mxu0 %v3133
    %3365 = vmatprep.subr.bf16.mxu0 %v3138
    %3366 = vmatpush1.bf16.msra.mxu0 %v3137
    %3367 = vmatprep.subr.bf16.mxu0 %v3142
    %3368 = vmatpush1.bf16.msra.mxu0 %v3141
    %3369 = vmatprep.mubr.bf16.mxu0 %v2544
    %3370 = vmatmul.mubr.bf16.gmra.mrb[0].mxu0 %v2543
    %v3371 = vpop.f32.mrb[0].mxu0
    %v3372 = vadd.f32 %v2680, %v3371
    %v3373 = vpop.f32.mrb[0].mxu0
    %v3374 = vadd.f32 %v2684, %v3373
    %v3375 = vpop.f32.mrb[0].mxu0
    %v3376 = vpop.f32.mrb[0].mxu0
    %3377 = vdwg.mxu0
    %3378 = vmatprep.subr.bf16.mxu0 %v3146
    %3379 = vmatpush1.bf16.msra.mxu0 %v3145
    %3380 = vmatprep.subr.bf16.mxu0 %v3150
    %3381 = vmatpush1.bf16.msra.mxu0 %v3149
    %3382 = vmatprep.subr.bf16.mxu0 %v3154
    %3383 = vmatpush1.bf16.msra.mxu0 %v3153
    %3384 = vmatprep.subr.bf16.mxu0 %v3158
    %3385 = vmatpush1.bf16.msra.mxu0 %v3157
    %3386 = vmatprep.subr.bf16.mxu0 %v3162
    %3387 = vmatpush1.bf16.msra.mxu0 %v3161
    %3388 = vmatprep.subr.bf16.mxu0 %v3166
    %3389 = vmatpush1.bf16.msra.mxu0 %v3165
    %3390 = vmatprep.subr.bf16.mxu0 %v3170
    %3391 = vmatpush1.bf16.msra.mxu0 %v3169
    %3392 = vmatprep.subr.bf16.mxu0 %v3174
    %3393 = vmatpush1.bf16.msra.mxu0 %v3173
    %3394 = vmatprep.subr.bf16.mxu0 %v3178
    %3395 = vmatpush1.bf16.msra.mxu0 %v3177
    %3396 = vmatprep.subr.bf16.mxu0 %v3182
    %3397 = vmatpush1.bf16.msra.mxu0 %v3181
    %3398 = vmatprep.subr.bf16.mxu0 %v3186
    %3399 = vmatpush1.bf16.msra.mxu0 %v3185
    %3400 = vmatprep.subr.bf16.mxu0 %v3190
    %3401 = vmatpush1.bf16.msra.mxu0 %v3189
    %3402 = vmatprep.subr.bf16.mxu0 %v3194
    %3403 = vmatpush1.bf16.msra.mxu0 %v3193
    %3404 = vmatprep.subr.bf16.mxu0 %v3198
    %3405 = vmatpush1.bf16.msra.mxu0 %v3197
    %3406 = vmatprep.subr.bf16.mxu0 %v3202
    %3407 = vmatpush1.bf16.msra.mxu0 %v3201
    %3408 = vmatprep.subr.bf16.mxu0 %v3206
    %3409 = vmatpush1.bf16.msra.mxu0 %v3205
    %3410 = vmatprep.mubr.bf16.mxu0 %v2546
    %3411 = vmatmul.mubr.bf16.gmra.mrb[0].mxu0 %v2545
    %v3412 = vpop.f32.mrb[0].mxu0
    %v3413 = vadd.f32 %v3372, %v3412
    %v3414 = vpop.f32.mrb[0].mxu0
    %v3415 = vadd.f32 %v3374, %v3414
    %v3416 = vpop.f32.mrb[0].mxu0
    %v3417 = vpop.f32.mrb[0].mxu0
    %3418 = vdwg.mxu0
    %3419 = vmatprep.subr.bf16.mxu0 %v3084
    %3420 = vmatpush1.bf16.msra.mxu0 %v3083
    %3421 = vmatprep.subr.bf16.mxu0 %v3088
    %3422 = vmatpush1.bf16.msra.mxu0 %v3087
    %3423 = vmatprep.subr.bf16.mxu0 %v3092
    %3424 = vmatpush1.bf16.msra.mxu0 %v3091
    %3425 = vmatprep.subr.bf16.mxu0 %v3096
    %3426 = vmatpush1.bf16.msra.mxu0 %v3095
    %3427 = vmatprep.subr.bf16.mxu0 %v3100
    %3428 = vmatpush1.bf16.msra.mxu0 %v3099
    %3429 = vmatprep.subr.bf16.mxu0 %v3104
    %3430 = vmatpush1.bf16.msra.mxu0 %v3103
    %3431 = vmatprep.subr.bf16.mxu0 %v3108
    %3432 = vmatpush1.bf16.msra.mxu0 %v3107
    %3433 = vmatprep.subr.bf16.mxu0 %v3112
    %3434 = vmatpush1.bf16.msra.mxu0 %v3111
    %3435 = vmatprep.subr.bf16.mxu0 %v3116
    %3436 = vmatpush1.bf16.msra.mxu0 %v3115
    %3437 = vmatprep.subr.bf16.mxu0 %v3120
    %3438 = vmatpush1.bf16.msra.mxu0 %v3119
    %3439 = vmatprep.subr.bf16.mxu0 %v3124
    %3440 = vmatpush1.bf16.msra.mxu0 %v3123
    %3441 = vmatprep.subr.bf16.mxu0 %v3128
    %3442 = vmatpush1.bf16.msra.mxu0 %v3127
    %3443 = vmatprep.subr.bf16.mxu0 %v3132
    %3444 = vmatpush1.bf16.msra.mxu0 %v3131
    %3445 = vmatprep.subr.bf16.mxu0 %v3136
    %3446 = vmatpush1.bf16.msra.mxu0 %v3135
    %3447 = vmatprep.subr.bf16.mxu0 %v3140
    %3448 = vmatpush1.bf16.msra.mxu0 %v3139
    %3449 = vmatprep.subr.bf16.mxu0 %v3144
    %3450 = vmatpush1.bf16.msra.mxu0 %v3143
    %3451 = vmatprep.mubr.bf16.mxu0 %v2544
    %3452 = vmatmul.mubr.bf16.gmra.mrb[0].mxu0 %v2543
    %v3453 = vpop.f32.mrb[0].mxu0
    %v3454 = vadd.f32 %v2688, %v3453
    %v3455 = vpop.f32.mrb[0].mxu0
    %v3456 = vadd.f32 %v2692, %v3455
    %v3457 = vpop.f32.mrb[0].mxu0
    %v3458 = vpop.f32.mrb[0].mxu0
    %3459 = vdwg.mxu0
    %3460 = vmatprep.subr.bf16.mxu0 %v3148
    %3461 = vmatpush1.bf16.msra.mxu0 %v3147
    %3462 = vmatprep.subr.bf16.mxu0 %v3152
    %3463 = vmatpush1.bf16.msra.mxu0 %v3151
    %3464 = vmatprep.subr.bf16.mxu0 %v3156
    %3465 = vmatpush1.bf16.msra.mxu0 %v3155
    %3466 = vmatprep.subr.bf16.mxu0 %v3160
    %3467 = vmatpush1.bf16.msra.mxu0 %v3159
    %3468 = vmatprep.subr.bf16.mxu0 %v3164
    %3469 = vmatpush1.bf16.msra.mxu0 %v3163
    %3470 = vmatprep.subr.bf16.mxu0 %v3168
    %3471 = vmatpush1.bf16.msra.mxu0 %v3167
    %3472 = vmatprep.subr.bf16.mxu0 %v3172
    %3473 = vmatpush1.bf16.msra.mxu0 %v3171
    %3474 = vmatprep.subr.bf16.mxu0 %v3176
    %3475 = vmatpush1.bf16.msra.mxu0 %v3175
    %3476 = vmatprep.subr.bf16.mxu0 %v3180
    %3477 = vmatpush1.bf16.msra.mxu0 %v3179
    %3478 = vmatprep.subr.bf16.mxu0 %v3184
    %3479 = vmatpush1.bf16.msra.mxu0 %v3183
    %3480 = vmatprep.subr.bf16.mxu0 %v3188
    %3481 = vmatpush1.bf16.msra.mxu0 %v3187
    %3482 = vmatprep.subr.bf16.mxu0 %v3192
    %3483 = vmatpush1.bf16.msra.mxu0 %v3191
    %3484 = vmatprep.subr.bf16.mxu0 %v3196
    %3485 = vmatpush1.bf16.msra.mxu0 %v3195
    %3486 = vmatprep.subr.bf16.mxu0 %v3200
    %3487 = vmatpush1.bf16.msra.mxu0 %v3199
    %3488 = vmatprep.subr.bf16.mxu0 %v3204
    %3489 = vmatpush1.bf16.msra.mxu0 %v3203
    %3490 = vmatprep.subr.bf16.mxu0 %v3208
    %3491 = vmatpush1.bf16.msra.mxu0 %v3207
    %3492 = vmatprep.mubr.bf16.mxu0 %v2546
    %3493 = vmatmul.mubr.bf16.gmra.mrb[0].mxu0 %v2545
    %v3494 = vpop.f32.mrb[0].mxu0
    %v3495 = vadd.f32 %v3454, %v3494
    %v3496 = vpop.f32.mrb[0].mxu0
    %v3497 = vadd.f32 %v3456, %v3496
    %v3498 = vpop.f32.mrb[0].mxu0
    %v3499 = vpop.f32.mrb[0].mxu0
    %3500 = vdwg.mxu0
    %3501 = vst [vmem:[#allocation10] sm:$0xff] %v3413
    %3502 = vst [vmem:[#allocation10 + $0x8] sm:$0xff] %v3415
    %3503 = vst [vmem:[#allocation10 + $0x10] sm:$0xff] %v3495
    %3504 = vst [vmem:[#allocation10 + $0x18] sm:$0xff] %v3497
    // Predicated region
    $region86: #{cellvae_forward.1} parent=1 // pred_check
      _
    $region87: #{cellvae_forward.1} parent=1 // pred_check_branch
      %3506 = sbr.rel (0) target = $region89
    $region88: #{cellvae_forward.1} parent=1 // pred_region
      %s3508 = ssub.s32 512, 512
      %3509 = vsyncadd [#allocation4], %s3508
      %s3511 = sshll.u32 [#allocation10], 4
      %s3512 = int_to_ptr.vmem [resolvable:$true] %s3511
      %3514 = dma.vmem_to_hbm [thread:$0]  %s3512, 512, %s17, [#allocation4]
    $region89: #{cellvae_forward.1} parent=1 // pred_fallthru
      _
    // Predicated region
    $region90: #{cellvae_forward.1} parent=1 // pred_check
      _
    $region91: #{cellvae_forward.1} parent=1 // pred_check_branch
      %3516 = sbr.rel (0) target = $region93
    $region92: #{cellvae_forward.1} parent=1 // pred_region
      %s3518 = ssub.s32 128, 128
      %3519 = vsyncadd [#allocation12], %s3518
      %s3521 = sshll.u32 [#allocation11], 4
      %s3522 = int_to_ptr.vmem [resolvable:$true] %s3521
      %3524 = dma.vmem_to_hbm [thread:$0]  %s3522, 128, %s18, [#allocation12]
    $region93: #{cellvae_forward.1} parent=1 // pred_fallthru
      _
    // Predicated region
    $region94: #{cellvae_forward.1} parent=1 // pred_check
      _
    $region95: #{cellvae_forward.1} parent=1 // pred_check_branch
      %3526 = sbr.rel (0) target = $region97
    $region96: #{cellvae_forward.1} parent=1 // pred_region
      %3527 = dma.done [#allocation4], 512
    $region97: #{cellvae_forward.1} parent=1 // pred_fallthru
      _
    // Predicated region
    $region98: #{cellvae_forward.1} parent=1 // pred_check
      _
    $region99: #{cellvae_forward.1} parent=1 // pred_check_branch
      %3529 = sbr.rel (0) target = $region101
    $region100: #{cellvae_forward.1} parent=1 // pred_region
      %3530 = dma.done [#allocation12], 128
    $region101: #{cellvae_forward.1} parent=1 // pred_fallthru
      _
    %3531 = vsyncpa [#allocation3], 1
    %3532 = vsyncpa [#allocation6], 1
    %3533 = vsyncpa [#allocation9], 1
    %3534 = vsyncpa [#allocation4], 1
    %3535 = vsyncpa [#allocation12], 1

</llo_original>
